<compile_context>
chip_gen: v7x
topology: tpu7x:2x2x1
jax: 0.10.0
libtpu: 0.0.40
codegen_flags: <defaults>
</compile_context>

<pallas_src>
import functools

import jax
import jax.numpy as jnp
from jax.experimental import pallas as pl
from jax.experimental.pallas import tpu as pltpu


def _round_up(x, m):
    return (x + m - 1) // m * m


def _is_pow2(x):
    return x > 0 and (x & (x - 1)) == 0


def _max_over_groups(y, n_groups, group):
    """Per-row max over `n_groups` contiguous lane groups of width `group`.

    y: (rows, n_groups * group), all values >= 0 (post-ReLU), so folding a
    group that contains zero columns never changes the result.
    Returns (rows, group).
    """
    if _is_pow2(n_groups):
        m = y
        g = n_groups
        while g > 1:
            half = (g // 2) * group
            m = jnp.maximum(m[:, :half], m[:, half:2 * half])
            g //= 2
        return m
    acc = y[:, :group]
    for j in range(1, n_groups):
        acc = jnp.maximum(acc, y[:, j * group:(j + 1) * group])
    return acc


def _pfn_kernel(*refs, p, c_out, last_vfe):
    if last_vfe:
        x_ref, w_ref, shift_ref, out_ref = refs
        s_ref = None
        group = c_out
    else:
        x_ref, w_ref, shift_ref, s_ref, out_ref = refs
        group = 2 * c_out

    # x_ref:     (tile_n, p*c_in)  lane-dense pillar slab (original dtype)
    # w_ref:     (p*c_in, p*group) block-diagonal slab weight, BN scale folded
    # shift_ref: (1, p*group)      fused BN shift (0 in the reserved max lanes)
    # s_ref:     (group, p*group)  constant 0/1 max-placement matrix
    # out_ref:   (tile_n, p*group) or (tile_n, c_out) for the last layer
    x = x_ref[...].astype(w_ref.dtype)

    # One lane-dense matmul: point j's features land at lanes
    # [j*group, j*group + c_out); for the non-last layer the zero weight
    # columns leave lanes [j*group + c_out, (j+1)*group) exactly 0 for the max.
    y = jnp.dot(x, w_ref[...], preferred_element_type=jnp.float32)
    y = jnp.maximum(y + shift_ref[...], 0.0)        # fused BN shift + ReLU (f32)

    # Per-pillar max over the P points: lane-group tree fold (no relayout).
    m = _max_over_groups(y, p, group)               # (tile_n, group)

    if last_vfe:
        out_ref[...] = m.astype(out_ref.dtype)
        return

    # Scatter the max into every point's reserved lanes via a tiny constant
    # matmul, then store one dense lane-aligned slab (unmasked vst, multi-KiB
    # contiguous DMA rows) -- this IS the concat([x, x_max]) of the module.
    maxslab = jnp.dot(m.astype(s_ref.dtype), s_ref[...],
                      preferred_element_type=jnp.float32)
    out_ref[...] = (y + maxslab).astype(out_ref.dtype)


def pfn_layer(inputs, weight, bias, bn_gamma, bn_beta, bn_mean, bn_var, *,
              use_norm=True, last_layer=False, eps=1e-3,
              tile_n=256, compute_dtype=jnp.bfloat16, out_dtype=jnp.bfloat16,
              vmem_limit_bytes=32 * 1024 * 1024):
    """Pallas PFNLayer forward.

    inputs: (N, P, C_in) float32
    weight: (C_out, C_in)  (PyTorch nn.Linear layout; C_out = out_channels//2
            when not last layer, per the module's constructor)
    bias:   (C_out,) or None
    bn_*:   (C_out,) BatchNorm1d params / running stats (ignored if not use_norm)

    Note: defaults trade a ~bf16-level relative error (<0.5%) for ~2x less HBM
    traffic; pass compute_dtype=out_dtype=jnp.float32 for exact f32 semantics.
    """
    n, p, c_in = inputs.shape
    c_out = weight.shape[0]

    # ---- Fold BN (inference) into weight scale + shift -----------------------
    w_t = jnp.asarray(weight, jnp.float32).T                      # (c_in, c_out)
    if use_norm:
        scale = jnp.asarray(bn_gamma, jnp.float32) / jnp.sqrt(
            jnp.asarray(bn_var, jnp.float32) + eps)
        shift = jnp.asarray(bn_beta, jnp.float32) - jnp.asarray(
            bn_mean, jnp.float32) * scale
        w_eff = w_t * scale[None, :]
    else:
        w_eff = w_t
        shift = (jnp.asarray(bias, jnp.float32) if bias is not None
                 else jnp.zeros((c_out,), jnp.float32))

    # ---- Per-point block -> block-diagonal slab weight (built once, tiny) ----
    if last_layer:
        group = c_out
        w_pt = w_eff                                              # (c_in, c)
        shift_pt = shift
    else:
        group = 2 * c_out
        w_pt = jnp.concatenate(                                   # (c_in, 2c)
            [w_eff, jnp.zeros((c_in, c_out), jnp.float32)], axis=1)
        shift_pt = jnp.concatenate([shift, jnp.zeros((c_out,), jnp.float32)])
    out_w = p * group
    w_block = jnp.kron(jnp.eye(p, dtype=jnp.float32), w_pt).astype(compute_dtype)
    shift_slab = jnp.tile(shift_pt, p).reshape(1, out_w).astype(jnp.float32)

    # ---- Lane-dense input slab: (N, P*C_in); no pad, no pre-cast --------------
    x_slab = jnp.asarray(inputs).reshape(n, p * c_in)

    tile_n = max(8, min(int(tile_n), _round_up(n, 8)))
    tile_n = _round_up(tile_n, 8)
    grid = (pl.cdiv(n, tile_n),)

    in_specs = [
        pl.BlockSpec((tile_n, p * c_in), lambda i: (i, 0)),
        pl.BlockSpec((p * c_in, out_w), lambda i: (0, 0)),
        pl.BlockSpec((1, out_w), lambda i: (0, 0)),
    ]
    args = [x_slab, w_block, shift_slab]

    if not last_layer:
        s_pt = jnp.zeros((group, group), jnp.float32)
        s_pt = s_pt.at[:c_out, c_out:].set(jnp.eye(c_out, dtype=jnp.float32))
        s_mat = jnp.tile(s_pt, (1, p)).astype(compute_dtype)     # (2c, out_w)
        in_specs.append(pl.BlockSpec((group, out_w), lambda i: (0, 0)))
        args.append(s_mat)
        out_shape = jax.ShapeDtypeStruct((n, out_w), out_dtype)
        out_specs = pl.BlockSpec((tile_n, out_w), lambda i: (i, 0))
    else:
        out_shape = jax.ShapeDtypeStruct((n, c_out), out_dtype)
        out_specs = pl.BlockSpec((tile_n, c_out), lambda i: (i, 0))

    kernel = functools.partial(_pfn_kernel, p=p, c_out=c_out, last_vfe=last_layer)

    result = pl.pallas_call(
        kernel,
        out_shape=out_shape,
        grid_spec=pltpu.PrefetchScalarGridSpec(
            num_scalar_prefetch=0,
            grid=grid,
            in_specs=in_specs,
            out_specs=out_specs,
        ),
        compiler_params=pltpu.CompilerParams(
            dimension_semantics=("parallel",),
            vmem_limit_bytes=vmem_limit_bytes,
        ),
    )(*args)

    if last_layer:
        return result.reshape(n, 1, c_out)
    return result.reshape(n, p, 2 * c_out)      # free metadata reshape


def pfn_layer_ref(inputs, weight, bias, bn_gamma, bn_beta, bn_mean, bn_var,
                  *, use_norm=True, last_layer=False, eps=1e-3):
    """Pure-JAX reference mirroring the PyTorch forward (eval-mode BN)."""
    x = jnp.einsum("npc,oc->npo", inputs, weight)
    if use_norm:
        x = (x - bn_mean) / jnp.sqrt(bn_var + eps) * bn_gamma + bn_beta
    else:
        x = x + bias
    x = jax.nn.relu(x)
    x_max = jnp.max(x, axis=1, keepdims=True)
    if last_layer:
        return x_max
    x_repeat = jnp.broadcast_to(x_max, x.shape)
    return jnp.concatenate([x, x_repeat], axis=2)


if __name__ == "__main__":
    # Small shapes consistent with the module: N pillars (deliberately not a
    # multiple of 8 to exercise the partial edge block), P points, 10 features.
    N, P, C_IN = 21, 32, 10
    OUT_CHANNELS = 64
    C_HALF = OUT_CHANNELS // 2      # non-last layer halves out_channels

    key = jax.random.PRNGKey(0)
    k1, k2, k3, k4, k5, k6, k7, k8, k9, k10, k11 = jax.random.split(key, 11)

    inputs = jax.random.normal(k1, (N, P, C_IN), dtype=jnp.float32)
    weight = jax.random.normal(k2, (C_HALF, C_IN), dtype=jnp.float32) * 0.1
    bn_gamma = 1.0 + 0.1 * jax.random.normal(k3, (C_HALF,), dtype=jnp.float32)
    bn_beta = 0.1 * jax.random.normal(k4, (C_HALF,), dtype=jnp.float32)
    bn_mean = 0.05 * jax.random.normal(k5, (C_HALF,), dtype=jnp.float32)
    bn_var = jnp.abs(jax.random.normal(k6, (C_HALF,), dtype=jnp.float32)) + 0.5
    bias = None  # use_norm=True -> no linear bias

    ref = pfn_layer_ref(inputs, weight, bias, bn_gamma, bn_beta, bn_mean, bn_var,
                        use_norm=True, last_layer=False)

    # Exact f32 path, multi-step grid with a partial edge block (tile_n=8).
    out_f32 = pfn_layer(inputs, weight, bias, bn_gamma, bn_beta, bn_mean, bn_var,
                        use_norm=True, last_layer=False, tile_n=8,
                        compute_dtype=jnp.float32, out_dtype=jnp.float32)
    out_f32 = jax.block_until_ready(out_f32)
    assert out_f32.shape == (N, P, OUT_CHANNELS), out_f32.shape
    assert jnp.allclose(out_f32, ref, atol=1e-4, rtol=1e-4)

    # Default perf path: bf16 matmul operands + bf16 lane-dense output slab.
    out_bf16 = pfn_layer(inputs, weight, bias, bn_gamma, bn_beta, bn_mean, bn_var,
                         use_norm=True, last_layer=False)
    out_bf16 = jax.block_until_ready(out_bf16)
    assert out_bf16.shape == (N, P, OUT_CHANNELS), out_bf16.shape
    assert jnp.allclose(out_bf16.astype(jnp.float32), ref, atol=5e-2, rtol=5e-2)

    # Last-layer path: out_channels is NOT halved; output is (N, 1, OUT_CHANNELS).
    weight_l = jax.random.normal(k7, (OUT_CHANNELS, C_IN), dtype=jnp.float32) * 0.1
    bn_gamma_l = 1.0 + 0.1 * jax.random.normal(k8, (OUT_CHANNELS,), dtype=jnp.float32)
    bn_beta_l = 0.1 * jax.random.normal(k9, (OUT_CHANNELS,), dtype=jnp.float32)
    bn_mean_l = 0.05 * jax.random.normal(k10, (OUT_CHANNELS,), dtype=jnp.float32)
    bn_var_l = jnp.abs(jax.random.normal(k11, (OUT_CHANNELS,), dtype=jnp.float32)) + 0.5

    ref_last = pfn_layer_ref(inputs, weight_l, bias, bn_gamma_l, bn_beta_l,
                             bn_mean_l, bn_var_l, use_norm=True, last_layer=True)
    out_last = pfn_layer(inputs, weight_l, bias, bn_gamma_l, bn_beta_l,
                         bn_mean_l, bn_var_l, use_norm=True, last_layer=True,
                         compute_dtype=jnp.float32, out_dtype=jnp.float32)
    out_last = jax.block_until_ready(out_last)
    assert out_last.shape == (N, 1, OUT_CHANNELS), out_last.shape
    assert jnp.allclose(out_last, ref_last, atol=1e-4, rtol=1e-4)

    print("KERNEL_OK")
</pallas_src>

<mosaic_0001>
module attributes {stable_mosaic.version = 11 : i64} {
  func.func @_pfn_kernel(%arg0: i32, %arg1: memref<8x320xf32, #tpu.memory_space<vmem>>, %arg2: memref<320x2048xf32, #tpu.memory_space<vmem>>, %arg3: memref<1x2048xf32, #tpu.memory_space<vmem>>, %arg4: memref<64x2048xf32, #tpu.memory_space<vmem>>, %arg5: memref<8x2048xf32, #tpu.memory_space<vmem>>) attributes {dimension_semantics = [#tpu.dimension_semantics<parallel>], iteration_bounds = array<i64: 3>, scalar_prefetch = 0 : i64, scratch_operands = 0 : i64, tpu.core_type = #tpu.core_type<tc>, window_params = [{transform_indices = @transform_0, window_bounds = array<i64: 8, 320>}, {pipeline_mode = #tpu.pipeline_mode<synchronous>, transform_indices = @transform_1, window_bounds = array<i64: 320, 2048>}, {pipeline_mode = #tpu.pipeline_mode<synchronous>, transform_indices = @transform_2, window_bounds = array<i64: 1, 2048>}, {pipeline_mode = #tpu.pipeline_mode<synchronous>, transform_indices = @transform_3, window_bounds = array<i64: 64, 2048>}, {transform_indices = @transform_4, window_bounds = array<i64: 8, 2048>}]} {
    %c0 = arith.constant 0 : index
    %c0_0 = arith.constant 0 : index
    %0 = vector.load %arg1[%c0, %c0_0] : memref<8x320xf32, #tpu.memory_space<vmem>>, vector<8x320xf32>
    %c0_1 = arith.constant 0 : index
    %c0_2 = arith.constant 0 : index
    %1 = vector.load %arg2[%c0_1, %c0_2] : memref<320x2048xf32, #tpu.memory_space<vmem>>, vector<320x2048xf32>
    %cst = arith.constant dense<0.000000e+00> : vector<8x2048xf32>
    %2 = tpu.matmul %0, %1, %cst {dimension_numbers = #tpu.dot_dimension_numbers<[1], [0], [0], [1], [0, 0, 1, 1], [], []>} : vector<8x320xf32>, vector<320x2048xf32>, vector<8x2048xf32> -> vector<8x2048xf32>
    %c0_3 = arith.constant 0 : index
    %c0_4 = arith.constant 0 : index
    %3 = vector.load %arg3[%c0_3, %c0_4] : memref<1x2048xf32, #tpu.memory_space<vmem>>, vector<1x2048xf32>
    %4 = vector.broadcast %3 : vector<1x2048xf32> to vector<8x2048xf32>
    %5 = arith.addf %2, %4 : vector<8x2048xf32>
    %cst_5 = arith.constant 0.000000e+00 : f32
    %6 = vector.broadcast %cst_5 : f32 to vector<8x2048xf32>
    %7 = arith.maximumf %5, %6 : vector<8x2048xf32>
    %8 = vector.extract_strided_slice %7 {offsets = [0, 0], sizes = [8, 1024], strides = [1, 1]} : vector<8x2048xf32> to vector<8x1024xf32>
    %9 = vector.extract_strided_slice %7 {offsets = [0, 1024], sizes = [8, 1024], strides = [1, 1]} : vector<8x2048xf32> to vector<8x1024xf32>
    %10 = arith.maximumf %8, %9 : vector<8x1024xf32>
    %11 = vector.extract_strided_slice %10 {offsets = [0, 0], sizes = [8, 512], strides = [1, 1]} : vector<8x1024xf32> to vector<8x512xf32>
    %12 = vector.extract_strided_slice %10 {offsets = [0, 512], sizes = [8, 512], strides = [1, 1]} : vector<8x1024xf32> to vector<8x512xf32>
    %13 = arith.maximumf %11, %12 : vector<8x512xf32>
    %14 = vector.extract_strided_slice %13 {offsets = [0, 0], sizes = [8, 256], strides = [1, 1]} : vector<8x512xf32> to vector<8x256xf32>
    %15 = vector.extract_strided_slice %13 {offsets = [0, 256], sizes = [8, 256], strides = [1, 1]} : vector<8x512xf32> to vector<8x256xf32>
    %16 = arith.maximumf %14, %15 : vector<8x256xf32>
    %17 = vector.extract_strided_slice %16 {offsets = [0, 0], sizes = [8, 128], strides = [1, 1]} : vector<8x256xf32> to vector<8x128xf32>
    %18 = vector.extract_strided_slice %16 {offsets = [0, 128], sizes = [8, 128], strides = [1, 1]} : vector<8x256xf32> to vector<8x128xf32>
    %19 = arith.maximumf %17, %18 : vector<8x128xf32>
    %20 = vector.extract_strided_slice %19 {offsets = [0, 0], sizes = [8, 64], strides = [1, 1]} : vector<8x128xf32> to vector<8x64xf32>
    %21 = vector.extract_strided_slice %19 {offsets = [0, 64], sizes = [8, 64], strides = [1, 1]} : vector<8x128xf32> to vector<8x64xf32>
    %22 = arith.maximumf %20, %21 : vector<8x64xf32>
    %c0_6 = arith.constant 0 : index
    %c0_7 = arith.constant 0 : index
    %23 = vector.load %arg4[%c0_6, %c0_7] : memref<64x2048xf32, #tpu.memory_space<vmem>>, vector<64x2048xf32>
    %cst_8 = arith.constant dense<0.000000e+00> : vector<8x2048xf32>
    %24 = tpu.matmul %22, %23, %cst_8 {dimension_numbers = #tpu.dot_dimension_numbers<[1], [0], [0], [1], [0, 0, 1, 1], [], []>} : vector<8x64xf32>, vector<64x2048xf32>, vector<8x2048xf32> -> vector<8x2048xf32>
    %25 = arith.addf %7, %24 : vector<8x2048xf32>
    %c0_9 = arith.constant 0 : index
    %c0_10 = arith.constant 0 : index
    %26 = vector.load %arg5[%c0_9, %c0_10] : memref<8x2048xf32, #tpu.memory_space<vmem>>, vector<8x2048xf32>
    tpu.vector_store %arg5[%c0_9, %c0_10], %25 {strides = array<i32>} : memref<8x2048xf32, #tpu.memory_space<vmem>>, vector<8x2048xf32>,
    return
  }
  func.func @transform_0(%arg0: i32) -> (i32, i32) {
    %c0_i32 = arith.constant 0 : i32
    %c0_i32_0 = arith.constant 0 : i32
    return %arg0, %c0_i32 : i32, i32
  }
  func.func @transform_1(%arg0: i32) -> (i32, i32) {
    %c0_i32 = arith.constant 0 : i32
    %c0_i32_0 = arith.constant 0 : i32
    %c0_i32_1 = arith.constant 0 : i32
    return %c0_i32, %c0_i32_0 : i32, i32
  }
  func.func @transform_2(%arg0: i32) -> (i32, i32) {
    %c0_i32 = arith.constant 0 : i32
    %c0_i32_0 = arith.constant 0 : i32
    %c0_i32_1 = arith.constant 0 : i32
    return %c0_i32, %c0_i32_0 : i32, i32
  }
  func.func @transform_3(%arg0: i32) -> (i32, i32) {
    %c0_i32 = arith.constant 0 : i32
    %c0_i32_0 = arith.constant 0 : i32
    %c0_i32_1 = arith.constant 0 : i32
    return %c0_i32, %c0_i32_0 : i32, i32
  }
  func.func @transform_4(%arg0: i32) -> (i32, i32) {
    %c0_i32 = arith.constant 0 : i32
    %c0_i32_0 = arith.constant 0 : i32
    return %arg0, %c0_i32 : i32, i32
  }
}

</mosaic_0001>

<llo_original>
// kernel: tpu_custom_call.1
$region0: #{tpu_custom_call.1}
  #allocation0 [shape = 'u32[]', space=smem, size = 0x4, offset = 0x4, fixed_abs, tag = 'smem constant byte address 0x4 - core index']
  #allocation1 [shape = 'u32[144,128]{1,0:T(1,128)}', space=vmem, size = 0x12000, scoped, tag = 'internal scratch']
  %s0 = inlined_call_operand.hbm [shape: f32[21,320], index: 0, kind: input, shape index: {}]
  %s1 = inlined_call_operand.hbm [shape: f32[320,2048], index: 1, kind: input, shape index: {}]
  %s2 = inlined_call_operand.hbm [shape: f32[1,2048], index: 2, kind: input, shape index: {}]
  %s3 = inlined_call_operand.hbm [shape: f32[64,2048], index: 3, kind: input, shape index: {}]
  %s4 = inlined_call_operand.hbm [shape: f32[21,2048], index: 4, kind: output, shape index: {}]
  %s5 = sld [smem:[#allocation0]]
  $region65: #{tpu_custom_call.1} parent=0
    _
  %s7 = ssub.s32 1, %s5
  %s8 = scalar_select 0, %s7, %s5
  $region1: #{tpu_custom_call.1} parent=0
    #allocation2 [shape = 'u8[24576]{0}', space=vmem, size = 0x6000, scoped, tag = 'input window, operand 0']
    #allocation3 [shape = 's32[2]{0}', space=sflag, size = 0x8, scoped, tag = 'scoped memory for tpu_custom_call.1']
    #allocation4 [shape = 's32[2]{0}', space=sflag, size = 0x8, scoped, tag = 'scoped memory for tpu_custom_call.1']
    #allocation5 [shape = 'u8[2621440]{0}', space=vmem, size = 0x280000, scoped, tag = 'input window, operand 1, single buffered']
    #allocation6 [shape = 's32[1]{0}', space=sflag, size = 0x4, scoped, tag = 'scoped memory for tpu_custom_call.1']
    #allocation7 [shape = 'u8[8192]{0}', space=vmem, size = 0x2000, scoped, tag = 'input window, operand 2, single buffered']
    #allocation8 [shape = 'u8[524288]{0}', space=vmem, size = 0x80000, scoped, tag = 'input window, operand 3, single buffered']
    #allocation9 [shape = 's32[1]{0}', space=sflag, size = 0x4, scoped, tag = 'scoped memory for tpu_custom_call.1']
    #allocation10 [shape = 'u8[131072]{0}', space=vmem, size = 0x20000, scoped, tag = 'output window, operand 0']
    %9 = vsyncpa [#allocation3], 0
    %s10 = scalar_lea.sflag [#allocation3], 1
    %11 = vsyncpa %s10, 0
    %12 = vsyncpa [#allocation6], 0
    %13 = vsyncpa [#allocation9], 0
    %14 = vsyncpa [#allocation4], 0
    %s15 = scalar_lea.sflag [#allocation4], 1
    %16 = vsyncpa %s15, 0
    loop: start=0, step=1, limit=5
    $region2: #{tpu_custom_call.1} parent=1 // loop_pre_header
      _
    $region3: #{tpu_custom_call.1} parent=1 // loop_header
      %s18 = sphi 0, %s22
      %p19 = scmp.ge.s32.totalorder %s18, 5
      %s28 = sphi 0, %s30
      %s31 = sphi 0, %s28
      %s32 = sphi 0, %s31
      %s48 = sphi 0, %s32
      %s52 = sphi 0, %s52
      %s54 = sphi 0, %s52
      %s55 = sphi 0, %s54
      %s69 = sphi 0, %s55
      %s73 = sphi 0, %s73
      %s75 = sphi 0, %s73
      %s76 = sphi 0, %s75
      %s90 = sphi 0, %s76
      %s94 = sphi 0, %s94
      %s96 = sphi 0, %s94
      %s97 = sphi 0, %s96
      %s111 = sphi 0, %s97
      %s117 = sphi 0, %s119
      %s120 = sphi 0, %s117
      %s121 = sphi 0, %s120
      %s137 = sphi 0, %s121
    $region4: #{tpu_custom_call.1} parent=1 // loop_header_branch
      %21 = sbr.rel (%p19) target = $region8
    $region5: #{tpu_custom_call.1} parent=1 // loop_body
      %s23 = ssub.s32 %s18, 1
      %s24 = ssub.s32 %s18, 2
      %s25 = sadd.s32 %s18, 1
      %s26 = ssub.s32 %s18, %s25
      %p27 = scmp.eq.s32.totalorder %s26, 0
      %s29 = sadd.s32 %s28, 1
      %s30 = scalar_select %p27, %s28, %s29
      %p33 = pneg %p27
      %p34 = scmp.eq.s32.totalorder %s18, 2
      %p35 = por %p33, %p34
      %p36 = scmp.ne.s32.totalorder %s28, %s31
      %p37 = scmp.eq.s32.totalorder %s18, 0
      %p38 = por %p36, %p37
      %p39 = scmp.ne.s32.totalorder %s28, %s31
      %p40 = scmp.eq.s32.totalorder %s23, 2
      %p41 = por %p39, %p40
      %p42 = scmp.ne.s32.totalorder %s31, %s32
      %p43 = scmp.eq.s32.totalorder %s23, 0
      %p44 = por %p42, %p43
      %p45 = scmp.ne.s32.totalorder %s31, %s32
      %p46 = scmp.eq.s32.totalorder %s24, 2
      %p47 = por %p45, %p46
      %p49 = scmp.ne.s32.totalorder %s32, %s48
      %p50 = scmp.eq.s32.totalorder %s24, 0
      %p51 = por %p49, %p50
      %s53 = sadd.s32 %s52, 1
      %p56 = scmp.eq.s32.totalorder %s18, 2
      %p57 = scmp.ne.s32.totalorder %s52, %s54
      %p58 = scmp.eq.s32.totalorder %s18, 0
      %p59 = por %p57, %p58
      %p60 = scmp.ne.s32.totalorder %s52, %s54
      %p61 = scmp.eq.s32.totalorder %s23, 2
      %p62 = por %p60, %p61
      %p63 = scmp.ne.s32.totalorder %s54, %s55
      %p64 = scmp.eq.s32.totalorder %s23, 0
      %p65 = por %p63, %p64
      %p66 = scmp.ne.s32.totalorder %s54, %s55
      %p67 = scmp.eq.s32.totalorder %s24, 2
      %p68 = por %p66, %p67
      %p70 = scmp.ne.s32.totalorder %s55, %s69
      %p71 = scmp.eq.s32.totalorder %s24, 0
      %p72 = por %p70, %p71
      %s74 = sadd.s32 %s73, 1
      %p77 = scmp.eq.s32.totalorder %s18, 2
      %p78 = scmp.ne.s32.totalorder %s73, %s75
      %p79 = scmp.eq.s32.totalorder %s18, 0
      %p80 = por %p78, %p79
      %p81 = scmp.ne.s32.totalorder %s73, %s75
      %p82 = scmp.eq.s32.totalorder %s23, 2
      %p83 = por %p81, %p82
      %p84 = scmp.ne.s32.totalorder %s75, %s76
      %p85 = scmp.eq.s32.totalorder %s23, 0
      %p86 = por %p84, %p85
      %p87 = scmp.ne.s32.totalorder %s75, %s76
      %p88 = scmp.eq.s32.totalorder %s24, 2
      %p89 = por %p87, %p88
      %p91 = scmp.ne.s32.totalorder %s76, %s90
      %p92 = scmp.eq.s32.totalorder %s24, 0
      %p93 = por %p91, %p92
      %s95 = sadd.s32 %s94, 1
      %p98 = scmp.eq.s32.totalorder %s18, 2
      %p99 = scmp.ne.s32.totalorder %s94, %s96
      %p100 = scmp.eq.s32.totalorder %s18, 0
      %p101 = por %p99, %p100
      %p102 = scmp.ne.s32.totalorder %s94, %s96
      %p103 = scmp.eq.s32.totalorder %s23, 2
      %p104 = por %p102, %p103
      %p105 = scmp.ne.s32.totalorder %s96, %s97
      %p106 = scmp.eq.s32.totalorder %s23, 0
      %p107 = por %p105, %p106
      %p108 = scmp.ne.s32.totalorder %s96, %s97
      %p109 = scmp.eq.s32.totalorder %s24, 2
      %p110 = por %p108, %p109
      %p112 = scmp.ne.s32.totalorder %s97, %s111
      %p113 = scmp.eq.s32.totalorder %s24, 0
      %p114 = por %p112, %p113
      %s115 = ssub.s32 %s18, %s25
      %p116 = scmp.eq.s32.totalorder %s115, 0
      %s118 = sadd.s32 %s117, 1
      %s119 = scalar_select %p116, %s117, %s118
      %p122 = pneg %p116
      %p123 = scmp.eq.s32.totalorder %s18, 2
      %p124 = por %p122, %p123
      %p125 = scmp.ne.s32.totalorder %s117, %s120
      %p126 = scmp.eq.s32.totalorder %s18, 0
      %p127 = por %p125, %p126
      %p128 = scmp.ne.s32.totalorder %s117, %s120
      %p129 = scmp.eq.s32.totalorder %s23, 2
      %p130 = por %p128, %p129
      %p131 = scmp.ne.s32.totalorder %s120, %s121
      %p132 = scmp.eq.s32.totalorder %s23, 0
      %p133 = por %p131, %p132
      %p134 = scmp.ne.s32.totalorder %s120, %s121
      %p135 = scmp.eq.s32.totalorder %s24, 2
      %p136 = por %p134, %p135
      %p138 = scmp.ne.s32.totalorder %s121, %s137
      %p139 = scmp.eq.s32.totalorder %s24, 0
      %p140 = por %p138, %p139
      %p141 = scmp.le.s32.totalorder 1, %s18
      %p142 = scmp.lt.s32.totalorder %s18, 4
      %p143 = pnand %p141, %p142
      %p144 = pneg %p143
      // Predicated region
      $region9: #{tpu_custom_call.1} parent=5 // pred_check
        _
      $region10: #{tpu_custom_call.1} parent=5 // pred_check_branch
        %146 = sbr.rel (%p143) target = $region12
      $region11: #{tpu_custom_call.1} parent=5 // pred_region
        %s147 = ssub.s32 %s18, 1
        // Predicated region
        $region13: #{tpu_custom_call.1} parent=11 // pred_check
          %p148 = pneg %p65
        $region14: #{tpu_custom_call.1} parent=11 // pred_check_branch
          %150 = sbr.rel (%p148) target = $region16
        $region15: #{tpu_custom_call.1} parent=11 // pred_region
          %s152 = ssub.s32 81920, 81920
          %153 = vsyncadd [#allocation6], %s152
          %s154 = sshll.u32 [#allocation5], 4
          %s155 = int_to_ptr.vmem [resolvable:$true] %s154
          %160 = dma.hbm_to_vmem [thread:$0]  %s1, 81920, %s155, [#allocation6], 2048, 2048, 128
        $region16: #{tpu_custom_call.1} parent=11 // pred_fallthru
          _
        // Predicated region
        $region17: #{tpu_custom_call.1} parent=11 // pred_check
          %p161 = pneg %p86
        $region18: #{tpu_custom_call.1} parent=11 // pred_check_branch
          %163 = sbr.rel (%p161) target = $region20
        $region19: #{tpu_custom_call.1} parent=11 // pred_region
          %s165 = ssub.s32 256, 256
          %166 = vsyncadd [#allocation6], %s165
          %s168 = sshll.u32 [#allocation7], 4
          %s169 = int_to_ptr.vmem [resolvable:$true] %s168
          %171 = dma.hbm_to_vmem [thread:$0]  %s2, 256, %s169, [#allocation6]
        $region20: #{tpu_custom_call.1} parent=11 // pred_fallthru
          _
        // Predicated region
        $region21: #{tpu_custom_call.1} parent=11 // pred_check
          %p172 = pneg %p107
        $region22: #{tpu_custom_call.1} parent=11 // pred_check_branch
          %174 = sbr.rel (%p172) target = $region24
        $region23: #{tpu_custom_call.1} parent=11 // pred_region
          %s176 = ssub.s32 16384, 16384
          %177 = vsyncadd [#allocation9], %s176
          %s178 = sshll.u32 [#allocation8], 4
          %s179 = int_to_ptr.vmem [resolvable:$true] %s178
          %184 = dma.hbm_to_vmem [thread:$0]  %s3, 16384, %s179, [#allocation9], 2048, 2048, 128
        $region24: #{tpu_custom_call.1} parent=11 // pred_fallthru
          _
      $region12: #{tpu_custom_call.1} parent=5 // pred_fallthru
        _
      %p185 = scmp.lt.s32.totalorder %s18, 3
      // Predicated region
      $region25: #{tpu_custom_call.1} parent=5 // pred_check
        %p186 = pneg %p185
      $region26: #{tpu_custom_call.1} parent=5 // pred_check_branch
        %188 = sbr.rel (%p186) target = $region28
      $region27: #{tpu_custom_call.1} parent=5 // pred_region
        // Predicated region
        $region29: #{tpu_custom_call.1} parent=27 // pred_check
          %p189 = pneg %p38
        $region30: #{tpu_custom_call.1} parent=27 // pred_check_branch
          %191 = sbr.rel (%p189) target = $region32
        $region31: #{tpu_custom_call.1} parent=27 // pred_region
          %s192 = sand.u32 %s28, 1
          %s193 = scalar_lea.sflag [#allocation3], %s192
          %s194 = sand.u32 %s28, 1
          %s195 = smul.addr %s194, 24
          %s196 = scalar_lea.vmem [#allocation2], %s195
          %s198 = ssub.s32 384, 384
          %199 = vsyncadd %s193, %s198
          %s200 = smul.addr %s18, 3
          %s201 = smul.addr %s200, 128
          %s202 = scalar_lea.hbm %s0, %s201
          %s204 = sshll.u32 %s196, 4
          %s205 = int_to_ptr.vmem [resolvable:$true] %s204
          %207 = dma.hbm_to_vmem [thread:$0]  %s202, 384, %s205, %s193
        $region32: #{tpu_custom_call.1} parent=27 // pred_fallthru
          _
      $region28: #{tpu_custom_call.1} parent=5 // pred_fallthru
        _
      %p208 = scmp.le.s32.totalorder 1, %s18
      %p209 = scmp.lt.s32.totalorder %s18, 4
      %p210 = pnand %p208, %p209
      %p211 = pneg %p210
      // Predicated region
      $region33: #{tpu_custom_call.1} parent=5 // pred_check
        _
      $region34: #{tpu_custom_call.1} parent=5 // pred_check_branch
        %213 = sbr.rel (%p210) target = $region36
      $region35: #{tpu_custom_call.1} parent=5 // pred_region
        %s214 = ssub.s32 %s18, 1
        %s215 = sand.u32 %s31, 1
        %s216 = scalar_lea.sflag [#allocation3], %s215
        %s217 = sand.u32 %s31, 1
        %s218 = smul.addr %s217, 24
        %s219 = scalar_lea.vmem [#allocation2], %s218
        // Predicated region
        $region37: #{tpu_custom_call.1} parent=35 // pred_check
          %p220 = pneg %p44
        $region38: #{tpu_custom_call.1} parent=35 // pred_check_branch
          %222 = sbr.rel (%p220) target = $region40
        $region39: #{tpu_custom_call.1} parent=35 // pred_region
          %223 = dma.done %s216, 384
        $region40: #{tpu_custom_call.1} parent=35 // pred_fallthru
          _
        // Predicated region
        $region41: #{tpu_custom_call.1} parent=35 // pred_check
          %p224 = pneg %p65
        $region42: #{tpu_custom_call.1} parent=35 // pred_check_branch
          %226 = sbr.rel (%p224) target = $region44
        $region43: #{tpu_custom_call.1} parent=35 // pred_region
          %227 = dma.done [#allocation6], 81920
        $region44: #{tpu_custom_call.1} parent=35 // pred_fallthru
          _
        // Predicated region
        $region45: #{tpu_custom_call.1} parent=35 // pred_check
          %p228 = pneg %p86
        $region46: #{tpu_custom_call.1} parent=35 // pred_check_branch
          %230 = sbr.rel (%p228) target = $region48
        $region47: #{tpu_custom_call.1} parent=35 // pred_region
          %231 = dma.done [#allocation6], 256
        $region48: #{tpu_custom_call.1} parent=35 // pred_fallthru
          _
        // Predicated region
        $region49: #{tpu_custom_call.1} parent=35 // pred_check
          %p232 = pneg %p107
        $region50: #{tpu_custom_call.1} parent=35 // pred_check_branch
          %234 = sbr.rel (%p232) target = $region52
        $region51: #{tpu_custom_call.1} parent=35 // pred_region
          %235 = dma.done [#allocation9], 16384
        $region52: #{tpu_custom_call.1} parent=35 // pred_fallthru
          _
        %s236 = sand.u32 %s31, 1
        %s237 = scalar_lea.sflag [#allocation3], %s236
        %s238 = sand.u32 %s31, 1
        %s239 = smul.addr %s238, 24
        %s240 = scalar_lea.vmem [#allocation2], %s239
        %p241 = pneg %p44
        %p242 = pneg %p41
        %p243 = pneg %p65
        %p244 = pneg %p62
        %p245 = pneg %p86
        %p246 = pneg %p83
        %p247 = pneg %p107
        %p248 = pneg %p104
        %p249 = pneg %p133
        %p250 = pneg %p130
        %s251 = sand.u32 %s120, 1
        %s252 = scalar_lea.sflag [#allocation4], %s251
        %s253 = sand.u32 %s120, 1
        %s254 = smul.addr %s253, 128
        %s255 = scalar_lea.vmem [#allocation10], %s254
        %v256 = vld [vmem:[%s219] sm:$0xff]
        %v257 = vld [vmem:[%s219 + $0x8] sm:$0xff]
        %v258 = vld [vmem:[%s219 + $0x10] sm:$0xff]
        %v259 = vld [vmem:[#allocation5] sm:$0xff]
        %v260 = vld [vmem:[#allocation5 + $0x8] sm:$0xff]
        %v261 = vld [vmem:[#allocation5 + $0x10] sm:$0xff]
        %v262 = vld [vmem:[#allocation5 + $0x18] sm:$0xff]
        %v263 = vld [vmem:[#allocation5 + $0x20] sm:$0xff]
        %v264 = vld [vmem:[#allocation5 + $0x28] sm:$0xff]
        %v265 = vld [vmem:[#allocation5 + $0x30] sm:$0xff]
        %v266 = vld [vmem:[#allocation5 + $0x38] sm:$0xff]
        %v267 = vld [vmem:[#allocation5 + $0x40] sm:$0xff]
        %v268 = vld [vmem:[#allocation5 + $0x48] sm:$0xff]
        %v269 = vld [vmem:[#allocation5 + $0x50] sm:$0xff]
        %v270 = vld [vmem:[#allocation5 + $0x58] sm:$0xff]
        %v271 = vld [vmem:[#allocation5 + $0x60] sm:$0xff]
        %v272 = vld [vmem:[#allocation5 + $0x68] sm:$0xff]
        %v273 = vld [vmem:[#allocation5 + $0x70] sm:$0xff]
        %v274 = vld [vmem:[#allocation5 + $0x78] sm:$0xff]
        %v275 = vld [vmem:[#allocation5 + $0x80] sm:$0xff]
        %v276 = vld [vmem:[#allocation5 + $0x88] sm:$0xff]
        %v277 = vld [vmem:[#allocation5 + $0x90] sm:$0xff]
        %v278 = vld [vmem:[#allocation5 + $0x98] sm:$0xff]
        %v279 = vld [vmem:[#allocation5 + $0xa0] sm:$0xff]
        %v280 = vld [vmem:[#allocation5 + $0xa8] sm:$0xff]
        %v281 = vld [vmem:[#allocation5 + $0xb0] sm:$0xff]
        %v282 = vld [vmem:[#allocation5 + $0xb8] sm:$0xff]
        %v283 = vld [vmem:[#allocation5 + $0xc0] sm:$0xff]
        %v284 = vld [vmem:[#allocation5 + $0xc8] sm:$0xff]
        %v285 = vld [vmem:[#allocation5 + $0xd0] sm:$0xff]
        %v286 = vld [vmem:[#allocation5 + $0xd8] sm:$0xff]
        %v287 = vld [vmem:[#allocation5 + $0xe0] sm:$0xff]
        %v288 = vld [vmem:[#allocation5 + $0xe8] sm:$0xff]
        %v289 = vld [vmem:[#allocation5 + $0xf0] sm:$0xff]
        %v290 = vld [vmem:[#allocation5 + $0xf8] sm:$0xff]
        %v291 = vld [vmem:[#allocation5 + $0x100] sm:$0xff]
        %v292 = vld [vmem:[#allocation5 + $0x108] sm:$0xff]
        %v293 = vld [vmem:[#allocation5 + $0x110] sm:$0xff]
        %v294 = vld [vmem:[#allocation5 + $0x118] sm:$0xff]
        %v295 = vld [vmem:[#allocation5 + $0x120] sm:$0xff]
        %v296 = vld [vmem:[#allocation5 + $0x128] sm:$0xff]
        %v297 = vld [vmem:[#allocation5 + $0x130] sm:$0xff]
        %v298 = vld [vmem:[#allocation5 + $0x138] sm:$0xff]
        %v299 = vld [vmem:[#allocation5 + $0x140] sm:$0xff]
        %v300 = vld [vmem:[#allocation5 + $0x148] sm:$0xff]
        %v301 = vld [vmem:[#allocation5 + $0x150] sm:$0xff]
        %v302 = vld [vmem:[#allocation5 + $0x158] sm:$0xff]
        %v303 = vld [vmem:[#allocation5 + $0x160] sm:$0xff]
        %v304 = vld [vmem:[#allocation5 + $0x168] sm:$0xff]
        %v305 = vld [vmem:[#allocation5 + $0x170] sm:$0xff]
        %v306 = vld [vmem:[#allocation5 + $0x178] sm:$0xff]
        %v307 = vld [vmem:[#allocation5 + $0x180] sm:$0xff]
        %v308 = vld [vmem:[#allocation5 + $0x188] sm:$0xff]
        %v309 = vld [vmem:[#allocation5 + $0x190] sm:$0xff]
        %v310 = vld [vmem:[#allocation5 + $0x198] sm:$0xff]
        %v311 = vld [vmem:[#allocation5 + $0x1a0] sm:$0xff]
        %v312 = vld [vmem:[#allocation5 + $0x1a8] sm:$0xff]
        %v313 = vld [vmem:[#allocation5 + $0x1b0] sm:$0xff]
        %v314 = vld [vmem:[#allocation5 + $0x1b8] sm:$0xff]
        %v315 = vld [vmem:[#allocation5 + $0x1c0] sm:$0xff]
        %v316 = vld [vmem:[#allocation5 + $0x1c8] sm:$0xff]
        %v317 = vld [vmem:[#allocation5 + $0x1d0] sm:$0xff]
        %v318 = vld [vmem:[#allocation5 + $0x1d8] sm:$0xff]
        %v319 = vld [vmem:[#allocation5 + $0x1e0] sm:$0xff]
        %v320 = vld [vmem:[#allocation5 + $0x1e8] sm:$0xff]
        %v321 = vld [vmem:[#allocation5 + $0x1f0] sm:$0xff]
        %v322 = vld [vmem:[#allocation5 + $0x1f8] sm:$0xff]
        %v323 = vld [vmem:[#allocation5 + $0x200] sm:$0xff]
        %v324 = vld [vmem:[#allocation5 + $0x208] sm:$0xff]
        %v325 = vld [vmem:[#allocation5 + $0x210] sm:$0xff]
        %v326 = vld [vmem:[#allocation5 + $0x218] sm:$0xff]
        %v327 = vld [vmem:[#allocation5 + $0x220] sm:$0xff]
        %v328 = vld [vmem:[#allocation5 + $0x228] sm:$0xff]
        %v329 = vld [vmem:[#allocation5 + $0x230] sm:$0xff]
        %v330 = vld [vmem:[#allocation5 + $0x238] sm:$0xff]
        %v331 = vld [vmem:[#allocation5 + $0x240] sm:$0xff]
        %v332 = vld [vmem:[#allocation5 + $0x248] sm:$0xff]
        %v333 = vld [vmem:[#allocation5 + $0x250] sm:$0xff]
        %v334 = vld [vmem:[#allocation5 + $0x258] sm:$0xff]
        %v335 = vld [vmem:[#allocation5 + $0x260] sm:$0xff]
        %v336 = vld [vmem:[#allocation5 + $0x268] sm:$0xff]
        %v337 = vld [vmem:[#allocation5 + $0x270] sm:$0xff]
        %v338 = vld [vmem:[#allocation5 + $0x278] sm:$0xff]
        %v339 = vld [vmem:[#allocation5 + $0x280] sm:$0xff]
        %v340 = vld [vmem:[#allocation5 + $0x288] sm:$0xff]
        %v341 = vld [vmem:[#allocation5 + $0x290] sm:$0xff]
        %v342 = vld [vmem:[#allocation5 + $0x298] sm:$0xff]
        %v343 = vld [vmem:[#allocation5 + $0x2a0] sm:$0xff]
        %v344 = vld [vmem:[#allocation5 + $0x2a8] sm:$0xff]
        %v345 = vld [vmem:[#allocation5 + $0x2b0] sm:$0xff]
        %v346 = vld [vmem:[#allocation5 + $0x2b8] sm:$0xff]
        %v347 = vld [vmem:[#allocation5 + $0x2c0] sm:$0xff]
        %v348 = vld [vmem:[#allocation5 + $0x2c8] sm:$0xff]
        %v349 = vld [vmem:[#allocation5 + $0x2d0] sm:$0xff]
        %v350 = vld [vmem:[#allocation5 + $0x2d8] sm:$0xff]
        %v351 = vld [vmem:[#allocation5 + $0x2e0] sm:$0xff]
        %v352 = vld [vmem:[#allocation5 + $0x2e8] sm:$0xff]
        %v353 = vld [vmem:[#allocation5 + $0x2f0] sm:$0xff]
        %v354 = vld [vmem:[#allocation5 + $0x2f8] sm:$0xff]
        %v355 = vld [vmem:[#allocation5 + $0x300] sm:$0xff]
        %v356 = vld [vmem:[#allocation5 + $0x308] sm:$0xff]
        %v357 = vld [vmem:[#allocation5 + $0x310] sm:$0xff]
        %v358 = vld [vmem:[#allocation5 + $0x318] sm:$0xff]
        %v359 = vld [vmem:[#allocation5 + $0x320] sm:$0xff]
        %v360 = vld [vmem:[#allocation5 + $0x328] sm:$0xff]
        %v361 = vld [vmem:[#allocation5 + $0x330] sm:$0xff]
        %v362 = vld [vmem:[#allocation5 + $0x338] sm:$0xff]
        %v363 = vld [vmem:[#allocation5 + $0x340] sm:$0xff]
        %v364 = vld [vmem:[#allocation5 + $0x348] sm:$0xff]
        %v365 = vld [vmem:[#allocation5 + $0x350] sm:$0xff]
        %v366 = vld [vmem:[#allocation5 + $0x358] sm:$0xff]
        %v367 = vld [vmem:[#allocation5 + $0x360] sm:$0xff]
        %v368 = vld [vmem:[#allocation5 + $0x368] sm:$0xff]
        %v369 = vld [vmem:[#allocation5 + $0x370] sm:$0xff]
        %v370 = vld [vmem:[#allocation5 + $0x378] sm:$0xff]
        %v371 = vld [vmem:[#allocation5 + $0x380] sm:$0xff]
        %v372 = vld [vmem:[#allocation5 + $0x388] sm:$0xff]
        %v373 = vld [vmem:[#allocation5 + $0x390] sm:$0xff]
        %v374 = vld [vmem:[#allocation5 + $0x398] sm:$0xff]
        %v375 = vld [vmem:[#allocation5 + $0x3a0] sm:$0xff]
        %v376 = vld [vmem:[#allocation5 + $0x3a8] sm:$0xff]
        %v377 = vld [vmem:[#allocation5 + $0x3b0] sm:$0xff]
        %v378 = vld [vmem:[#allocation5 + $0x3b8] sm:$0xff]
        %v379 = vld [vmem:[#allocation5 + $0x3c0] sm:$0xff]
        %v380 = vld [vmem:[#allocation5 + $0x3c8] sm:$0xff]
        %v381 = vld [vmem:[#allocation5 + $0x3d0] sm:$0xff]
        %v382 = vld [vmem:[#allocation5 + $0x3d8] sm:$0xff]
        %v383 = vld [vmem:[#allocation5 + $0x3e0] sm:$0xff]
        %v384 = vld [vmem:[#allocation5 + $0x3e8] sm:$0xff]
        %v385 = vld [vmem:[#allocation5 + $0x3f0] sm:$0xff]
        %v386 = vld [vmem:[#allocation5 + $0x3f8] sm:$0xff]
        %v387 = vld [vmem:[#allocation5 + $0x400] sm:$0xff]
        %v388 = vld [vmem:[#allocation5 + $0x408] sm:$0xff]
        %v389 = vld [vmem:[#allocation5 + $0x410] sm:$0xff]
        %v390 = vld [vmem:[#allocation5 + $0x418] sm:$0xff]
        %v391 = vld [vmem:[#allocation5 + $0x420] sm:$0xff]
        %v392 = vld [vmem:[#allocation5 + $0x428] sm:$0xff]
        %v393 = vld [vmem:[#allocation5 + $0x430] sm:$0xff]
        %v394 = vld [vmem:[#allocation5 + $0x438] sm:$0xff]
        %v395 = vld [vmem:[#allocation5 + $0x440] sm:$0xff]
        %v396 = vld [vmem:[#allocation5 + $0x448] sm:$0xff]
        %v397 = vld [vmem:[#allocation5 + $0x450] sm:$0xff]
        %v398 = vld [vmem:[#allocation5 + $0x458] sm:$0xff]
        %v399 = vld [vmem:[#allocation5 + $0x460] sm:$0xff]
        %v400 = vld [vmem:[#allocation5 + $0x468] sm:$0xff]
        %v401 = vld [vmem:[#allocation5 + $0x470] sm:$0xff]
        %v402 = vld [vmem:[#allocation5 + $0x478] sm:$0xff]
        %v403 = vld [vmem:[#allocation5 + $0x480] sm:$0xff]
        %v404 = vld [vmem:[#allocation5 + $0x488] sm:$0xff]
        %v405 = vld [vmem:[#allocation5 + $0x490] sm:$0xff]
        %v406 = vld [vmem:[#allocation5 + $0x498] sm:$0xff]
        %v407 = vld [vmem:[#allocation5 + $0x4a0] sm:$0xff]
        %v408 = vld [vmem:[#allocation5 + $0x4a8] sm:$0xff]
        %v409 = vld [vmem:[#allocation5 + $0x4b0] sm:$0xff]
        %v410 = vld [vmem:[#allocation5 + $0x4b8] sm:$0xff]
        %v411 = vld [vmem:[#allocation5 + $0x4c0] sm:$0xff]
        %v412 = vld [vmem:[#allocation5 + $0x4c8] sm:$0xff]
        %v413 = vld [vmem:[#allocation5 + $0x4d0] sm:$0xff]
        %v414 = vld [vmem:[#allocation5 + $0x4d8] sm:$0xff]
        %v415 = vld [vmem:[#allocation5 + $0x4e0] sm:$0xff]
        %v416 = vld [vmem:[#allocation5 + $0x4e8] sm:$0xff]
        %v417 = vld [vmem:[#allocation5 + $0x4f0] sm:$0xff]
        %v418 = vld [vmem:[#allocation5 + $0x4f8] sm:$0xff]
        %v419 = vld [vmem:[#allocation5 + $0x500] sm:$0xff]
        %v420 = vld [vmem:[#allocation5 + $0x508] sm:$0xff]
        %v421 = vld [vmem:[#allocation5 + $0x510] sm:$0xff]
        %v422 = vld [vmem:[#allocation5 + $0x518] sm:$0xff]
        %v423 = vld [vmem:[#allocation5 + $0x520] sm:$0xff]
        %v424 = vld [vmem:[#allocation5 + $0x528] sm:$0xff]
        %v425 = vld [vmem:[#allocation5 + $0x530] sm:$0xff]
        %v426 = vld [vmem:[#allocation5 + $0x538] sm:$0xff]
        %v427 = vld [vmem:[#allocation5 + $0x540] sm:$0xff]
        %v428 = vld [vmem:[#allocation5 + $0x548] sm:$0xff]
        %v429 = vld [vmem:[#allocation5 + $0x550] sm:$0xff]
        %v430 = vld [vmem:[#allocation5 + $0x558] sm:$0xff]
        %v431 = vld [vmem:[#allocation5 + $0x560] sm:$0xff]
        %v432 = vld [vmem:[#allocation5 + $0x568] sm:$0xff]
        %v433 = vld [vmem:[#allocation5 + $0x570] sm:$0xff]
        %v434 = vld [vmem:[#allocation5 + $0x578] sm:$0xff]
        %v435 = vld [vmem:[#allocation5 + $0x580] sm:$0xff]
        %v436 = vld [vmem:[#allocation5 + $0x588] sm:$0xff]
        %v437 = vld [vmem:[#allocation5 + $0x590] sm:$0xff]
        %v438 = vld [vmem:[#allocation5 + $0x598] sm:$0xff]
        %v439 = vld [vmem:[#allocation5 + $0x5a0] sm:$0xff]
        %v440 = vld [vmem:[#allocation5 + $0x5a8] sm:$0xff]
        %v441 = vld [vmem:[#allocation5 + $0x5b0] sm:$0xff]
        %v442 = vld [vmem:[#allocation5 + $0x5b8] sm:$0xff]
        %v443 = vld [vmem:[#allocation5 + $0x5c0] sm:$0xff]
        %v444 = vld [vmem:[#allocation5 + $0x5c8] sm:$0xff]
        %v445 = vld [vmem:[#allocation5 + $0x5d0] sm:$0xff]
        %v446 = vld [vmem:[#allocation5 + $0x5d8] sm:$0xff]
        %v447 = vld [vmem:[#allocation5 + $0x5e0] sm:$0xff]
        %v448 = vld [vmem:[#allocation5 + $0x5e8] sm:$0xff]
        %v449 = vld [vmem:[#allocation5 + $0x5f0] sm:$0xff]
        %v450 = vld [vmem:[#allocation5 + $0x5f8] sm:$0xff]
        %v451 = vld [vmem:[#allocation5 + $0x600] sm:$0xff]
        %v452 = vld [vmem:[#allocation5 + $0x608] sm:$0xff]
        %v453 = vld [vmem:[#allocation5 + $0x610] sm:$0xff]
        %v454 = vld [vmem:[#allocation5 + $0x618] sm:$0xff]
        %v455 = vld [vmem:[#allocation5 + $0x620] sm:$0xff]
        %v456 = vld [vmem:[#allocation5 + $0x628] sm:$0xff]
        %v457 = vld [vmem:[#allocation5 + $0x630] sm:$0xff]
        %v458 = vld [vmem:[#allocation5 + $0x638] sm:$0xff]
        %v459 = vld [vmem:[#allocation5 + $0x640] sm:$0xff]
        %v460 = vld [vmem:[#allocation5 + $0x648] sm:$0xff]
        %v461 = vld [vmem:[#allocation5 + $0x650] sm:$0xff]
        %v462 = vld [vmem:[#allocation5 + $0x658] sm:$0xff]
        %v463 = vld [vmem:[#allocation5 + $0x660] sm:$0xff]
        %v464 = vld [vmem:[#allocation5 + $0x668] sm:$0xff]
        %v465 = vld [vmem:[#allocation5 + $0x670] sm:$0xff]
        %v466 = vld [vmem:[#allocation5 + $0x678] sm:$0xff]
        %v467 = vld [vmem:[#allocation5 + $0x680] sm:$0xff]
        %v468 = vld [vmem:[#allocation5 + $0x688] sm:$0xff]
        %v469 = vld [vmem:[#allocation5 + $0x690] sm:$0xff]
        %v470 = vld [vmem:[#allocation5 + $0x698] sm:$0xff]
        %v471 = vld [vmem:[#allocation5 + $0x6a0] sm:$0xff]
        %v472 = vld [vmem:[#allocation5 + $0x6a8] sm:$0xff]
        %v473 = vld [vmem:[#allocation5 + $0x6b0] sm:$0xff]
        %v474 = vld [vmem:[#allocation5 + $0x6b8] sm:$0xff]
        %v475 = vld [vmem:[#allocation5 + $0x6c0] sm:$0xff]
        %v476 = vld [vmem:[#allocation5 + $0x6c8] sm:$0xff]
        %v477 = vld [vmem:[#allocation5 + $0x6d0] sm:$0xff]
        %v478 = vld [vmem:[#allocation5 + $0x6d8] sm:$0xff]
        %v479 = vld [vmem:[#allocation5 + $0x6e0] sm:$0xff]
        %v480 = vld [vmem:[#allocation5 + $0x6e8] sm:$0xff]
        %v481 = vld [vmem:[#allocation5 + $0x6f0] sm:$0xff]
        %v482 = vld [vmem:[#allocation5 + $0x6f8] sm:$0xff]
        %v483 = vld [vmem:[#allocation5 + $0x700] sm:$0xff]
        %v484 = vld [vmem:[#allocation5 + $0x708] sm:$0xff]
        %v485 = vld [vmem:[#allocation5 + $0x710] sm:$0xff]
        %v486 = vld [vmem:[#allocation5 + $0x718] sm:$0xff]
        %v487 = vld [vmem:[#allocation5 + $0x720] sm:$0xff]
        %v488 = vld [vmem:[#allocation5 + $0x728] sm:$0xff]
        %v489 = vld [vmem:[#allocation5 + $0x730] sm:$0xff]
        %v490 = vld [vmem:[#allocation5 + $0x738] sm:$0xff]
        %v491 = vld [vmem:[#allocation5 + $0x740] sm:$0xff]
        %v492 = vld [vmem:[#allocation5 + $0x748] sm:$0xff]
        %v493 = vld [vmem:[#allocation5 + $0x750] sm:$0xff]
        %v494 = vld [vmem:[#allocation5 + $0x758] sm:$0xff]
        %v495 = vld [vmem:[#allocation5 + $0x760] sm:$0xff]
        %v496 = vld [vmem:[#allocation5 + $0x768] sm:$0xff]
        %v497 = vld [vmem:[#allocation5 + $0x770] sm:$0xff]
        %v498 = vld [vmem:[#allocation5 + $0x778] sm:$0xff]
        %v499 = vld [vmem:[#allocation5 + $0x780] sm:$0xff]
        %v500 = vld [vmem:[#allocation5 + $0x788] sm:$0xff]
        %v501 = vld [vmem:[#allocation5 + $0x790] sm:$0xff]
        %v502 = vld [vmem:[#allocation5 + $0x798] sm:$0xff]
        %v503 = vld [vmem:[#allocation5 + $0x7a0] sm:$0xff]
        %v504 = vld [vmem:[#allocation5 + $0x7a8] sm:$0xff]
        %v505 = vld [vmem:[#allocation5 + $0x7b0] sm:$0xff]
        %v506 = vld [vmem:[#allocation5 + $0x7b8] sm:$0xff]
        %v507 = vld [vmem:[#allocation5 + $0x7c0] sm:$0xff]
        %v508 = vld [vmem:[#allocation5 + $0x7c8] sm:$0xff]
        %v509 = vld [vmem:[#allocation5 + $0x7d0] sm:$0xff]
        %v510 = vld [vmem:[#allocation5 + $0x7d8] sm:$0xff]
        %v511 = vld [vmem:[#allocation5 + $0x7e0] sm:$0xff]
        %v512 = vld [vmem:[#allocation5 + $0x7e8] sm:$0xff]
        %v513 = vld [vmem:[#allocation5 + $0x7f0] sm:$0xff]
        %v514 = vld [vmem:[#allocation5 + $0x7f8] sm:$0xff]
        %v515 = vld [vmem:[#allocation5 + $0x800] sm:$0xff]
        %v516 = vld [vmem:[#allocation5 + $0x808] sm:$0xff]
        %v517 = vld [vmem:[#allocation5 + $0x810] sm:$0xff]
        %v518 = vld [vmem:[#allocation5 + $0x818] sm:$0xff]
        %v519 = vld [vmem:[#allocation5 + $0x820] sm:$0xff]
        %v520 = vld [vmem:[#allocation5 + $0x828] sm:$0xff]
        %v521 = vld [vmem:[#allocation5 + $0x830] sm:$0xff]
        %v522 = vld [vmem:[#allocation5 + $0x838] sm:$0xff]
        %v523 = vld [vmem:[#allocation5 + $0x840] sm:$0xff]
        %v524 = vld [vmem:[#allocation5 + $0x848] sm:$0xff]
        %v525 = vld [vmem:[#allocation5 + $0x850] sm:$0xff]
        %v526 = vld [vmem:[#allocation5 + $0x858] sm:$0xff]
        %v527 = vld [vmem:[#allocation5 + $0x860] sm:$0xff]
        %v528 = vld [vmem:[#allocation5 + $0x868] sm:$0xff]
        %v529 = vld [vmem:[#allocation5 + $0x870] sm:$0xff]
        %v530 = vld [vmem:[#allocation5 + $0x878] sm:$0xff]
        %v531 = vld [vmem:[#allocation5 + $0x880] sm:$0xff]
        %v532 = vld [vmem:[#allocation5 + $0x888] sm:$0xff]
        %v533 = vld [vmem:[#allocation5 + $0x890] sm:$0xff]
        %v534 = vld [vmem:[#allocation5 + $0x898] sm:$0xff]
        %v535 = vld [vmem:[#allocation5 + $0x8a0] sm:$0xff]
        %v536 = vld [vmem:[#allocation5 + $0x8a8] sm:$0xff]
        %v537 = vld [vmem:[#allocation5 + $0x8b0] sm:$0xff]
        %v538 = vld [vmem:[#allocation5 + $0x8b8] sm:$0xff]
        %v539 = vld [vmem:[#allocation5 + $0x8c0] sm:$0xff]
        %v540 = vld [vmem:[#allocation5 + $0x8c8] sm:$0xff]
        %v541 = vld [vmem:[#allocation5 + $0x8d0] sm:$0xff]
        %v542 = vld [vmem:[#allocation5 + $0x8d8] sm:$0xff]
        %v543 = vld [vmem:[#allocation5 + $0x8e0] sm:$0xff]
        %v544 = vld [vmem:[#allocation5 + $0x8e8] sm:$0xff]
        %v545 = vld [vmem:[#allocation5 + $0x8f0] sm:$0xff]
        %v546 = vld [vmem:[#allocation5 + $0x8f8] sm:$0xff]
        %v547 = vld [vmem:[#allocation5 + $0x900] sm:$0xff]
        %v548 = vld [vmem:[#allocation5 + $0x908] sm:$0xff]
        %v549 = vld [vmem:[#allocation5 + $0x910] sm:$0xff]
        %v550 = vld [vmem:[#allocation5 + $0x918] sm:$0xff]
        %v551 = vld [vmem:[#allocation5 + $0x920] sm:$0xff]
        %v552 = vld [vmem:[#allocation5 + $0x928] sm:$0xff]
        %v553 = vld [vmem:[#allocation5 + $0x930] sm:$0xff]
        %v554 = vld [vmem:[#allocation5 + $0x938] sm:$0xff]
        %v555 = vld [vmem:[#allocation5 + $0x940] sm:$0xff]
        %v556 = vld [vmem:[#allocation5 + $0x948] sm:$0xff]
        %v557 = vld [vmem:[#allocation5 + $0x950] sm:$0xff]
        %v558 = vld [vmem:[#allocation5 + $0x958] sm:$0xff]
        %v559 = vld [vmem:[#allocation5 + $0x960] sm:$0xff]
        %v560 = vld [vmem:[#allocation5 + $0x968] sm:$0xff]
        %v561 = vld [vmem:[#allocation5 + $0x970] sm:$0xff]
        %v562 = vld [vmem:[#allocation5 + $0x978] sm:$0xff]
        %v563 = vld [vmem:[#allocation5 + $0x980] sm:$0xff]
        %v564 = vld [vmem:[#allocation5 + $0x988] sm:$0xff]
        %v565 = vld [vmem:[#allocation5 + $0x990] sm:$0xff]
        %v566 = vld [vmem:[#allocation5 + $0x998] sm:$0xff]
        %v567 = vld [vmem:[#allocation5 + $0x9a0] sm:$0xff]
        %v568 = vld [vmem:[#allocation5 + $0x9a8] sm:$0xff]
        %v569 = vld [vmem:[#allocation5 + $0x9b0] sm:$0xff]
        %v570 = vld [vmem:[#allocation5 + $0x9b8] sm:$0xff]
        %v571 = vld [vmem:[#allocation5 + $0x9c0] sm:$0xff]
        %v572 = vld [vmem:[#allocation5 + $0x9c8] sm:$0xff]
        %v573 = vld [vmem:[#allocation5 + $0x9d0] sm:$0xff]
        %v574 = vld [vmem:[#allocation5 + $0x9d8] sm:$0xff]
        %v575 = vld [vmem:[#allocation5 + $0x9e0] sm:$0xff]
        %v576 = vld [vmem:[#allocation5 + $0x9e8] sm:$0xff]
        %v577 = vld [vmem:[#allocation5 + $0x9f0] sm:$0xff]
        %v578 = vld [vmem:[#allocation5 + $0x9f8] sm:$0xff]
        %v579 = vld [vmem:[#allocation5 + $0xa00] sm:$0xff]
        %v580 = vld [vmem:[#allocation5 + $0xa08] sm:$0xff]
        %v581 = vld [vmem:[#allocation5 + $0xa10] sm:$0xff]
        %v582 = vld [vmem:[#allocation5 + $0xa18] sm:$0xff]
        %v583 = vld [vmem:[#allocation5 + $0xa20] sm:$0xff]
        %v584 = vld [vmem:[#allocation5 + $0xa28] sm:$0xff]
        %v585 = vld [vmem:[#allocation5 + $0xa30] sm:$0xff]
        %v586 = vld [vmem:[#allocation5 + $0xa38] sm:$0xff]
        %v587 = vld [vmem:[#allocation5 + $0xa40] sm:$0xff]
        %v588 = vld [vmem:[#allocation5 + $0xa48] sm:$0xff]
        %v589 = vld [vmem:[#allocation5 + $0xa50] sm:$0xff]
        %v590 = vld [vmem:[#allocation5 + $0xa58] sm:$0xff]
        %v591 = vld [vmem:[#allocation5 + $0xa60] sm:$0xff]
        %v592 = vld [vmem:[#allocation5 + $0xa68] sm:$0xff]
        %v593 = vld [vmem:[#allocation5 + $0xa70] sm:$0xff]
        %v594 = vld [vmem:[#allocation5 + $0xa78] sm:$0xff]
        %v595 = vld [vmem:[#allocation5 + $0xa80] sm:$0xff]
        %v596 = vld [vmem:[#allocation5 + $0xa88] sm:$0xff]
        %v597 = vld [vmem:[#allocation5 + $0xa90] sm:$0xff]
        %v598 = vld [vmem:[#allocation5 + $0xa98] sm:$0xff]
        %v599 = vld [vmem:[#allocation5 + $0xaa0] sm:$0xff]
        %v600 = vld [vmem:[#allocation5 + $0xaa8] sm:$0xff]
        %v601 = vld [vmem:[#allocation5 + $0xab0] sm:$0xff]
        %v602 = vld [vmem:[#allocation5 + $0xab8] sm:$0xff]
        %v603 = vld [vmem:[#allocation5 + $0xac0] sm:$0xff]
        %v604 = vld [vmem:[#allocation5 + $0xac8] sm:$0xff]
        %v605 = vld [vmem:[#allocation5 + $0xad0] sm:$0xff]
        %v606 = vld [vmem:[#allocation5 + $0xad8] sm:$0xff]
        %v607 = vld [vmem:[#allocation5 + $0xae0] sm:$0xff]
        %v608 = vld [vmem:[#allocation5 + $0xae8] sm:$0xff]
        %v609 = vld [vmem:[#allocation5 + $0xaf0] sm:$0xff]
        %v610 = vld [vmem:[#allocation5 + $0xaf8] sm:$0xff]
        %v611 = vld [vmem:[#allocation5 + $0xb00] sm:$0xff]
        %v612 = vld [vmem:[#allocation5 + $0xb08] sm:$0xff]
        %v613 = vld [vmem:[#allocation5 + $0xb10] sm:$0xff]
        %v614 = vld [vmem:[#allocation5 + $0xb18] sm:$0xff]
        %v615 = vld [vmem:[#allocation5 + $0xb20] sm:$0xff]
        %v616 = vld [vmem:[#allocation5 + $0xb28] sm:$0xff]
        %v617 = vld [vmem:[#allocation5 + $0xb30] sm:$0xff]
        %v618 = vld [vmem:[#allocation5 + $0xb38] sm:$0xff]
        %v619 = vld [vmem:[#allocation5 + $0xb40] sm:$0xff]
        %v620 = vld [vmem:[#allocation5 + $0xb48] sm:$0xff]
        %v621 = vld [vmem:[#allocation5 + $0xb50] sm:$0xff]
        %v622 = vld [vmem:[#allocation5 + $0xb58] sm:$0xff]
        %v623 = vld [vmem:[#allocation5 + $0xb60] sm:$0xff]
        %v624 = vld [vmem:[#allocation5 + $0xb68] sm:$0xff]
        %v625 = vld [vmem:[#allocation5 + $0xb70] sm:$0xff]
        %v626 = vld [vmem:[#allocation5 + $0xb78] sm:$0xff]
        %v627 = vld [vmem:[#allocation5 + $0xb80] sm:$0xff]
        %v628 = vld [vmem:[#allocation5 + $0xb88] sm:$0xff]
        %v629 = vld [vmem:[#allocation5 + $0xb90] sm:$0xff]
        %v630 = vld [vmem:[#allocation5 + $0xb98] sm:$0xff]
        %v631 = vld [vmem:[#allocation5 + $0xba0] sm:$0xff]
        %v632 = vld [vmem:[#allocation5 + $0xba8] sm:$0xff]
        %v633 = vld [vmem:[#allocation5 + $0xbb0] sm:$0xff]
        %v634 = vld [vmem:[#allocation5 + $0xbb8] sm:$0xff]
        %v635 = vld [vmem:[#allocation5 + $0xbc0] sm:$0xff]
        %v636 = vld [vmem:[#allocation5 + $0xbc8] sm:$0xff]
        %v637 = vld [vmem:[#allocation5 + $0xbd0] sm:$0xff]
        %v638 = vld [vmem:[#allocation5 + $0xbd8] sm:$0xff]
        %v639 = vld [vmem:[#allocation5 + $0xbe0] sm:$0xff]
        %v640 = vld [vmem:[#allocation5 + $0xbe8] sm:$0xff]
        %v641 = vld [vmem:[#allocation5 + $0xbf0] sm:$0xff]
        %v642 = vld [vmem:[#allocation5 + $0xbf8] sm:$0xff]
        %v643 = vld [vmem:[#allocation5 + $0xc00] sm:$0xff]
        %v644 = vld [vmem:[#allocation5 + $0xc08] sm:$0xff]
        %v645 = vld [vmem:[#allocation5 + $0xc10] sm:$0xff]
        %v646 = vld [vmem:[#allocation5 + $0xc18] sm:$0xff]
        %v647 = vld [vmem:[#allocation5 + $0xc20] sm:$0xff]
        %v648 = vld [vmem:[#allocation5 + $0xc28] sm:$0xff]
        %v649 = vld [vmem:[#allocation5 + $0xc30] sm:$0xff]
        %v650 = vld [vmem:[#allocation5 + $0xc38] sm:$0xff]
        %v651 = vld [vmem:[#allocation5 + $0xc40] sm:$0xff]
        %v652 = vld [vmem:[#allocation5 + $0xc48] sm:$0xff]
        %v653 = vld [vmem:[#allocation5 + $0xc50] sm:$0xff]
        %v654 = vld [vmem:[#allocation5 + $0xc58] sm:$0xff]
        %v655 = vld [vmem:[#allocation5 + $0xc60] sm:$0xff]
        %v656 = vld [vmem:[#allocation5 + $0xc68] sm:$0xff]
        %v657 = vld [vmem:[#allocation5 + $0xc70] sm:$0xff]
        %v658 = vld [vmem:[#allocation5 + $0xc78] sm:$0xff]
        %v659 = vld [vmem:[#allocation5 + $0xc80] sm:$0xff]
        %v660 = vld [vmem:[#allocation5 + $0xc88] sm:$0xff]
        %v661 = vld [vmem:[#allocation5 + $0xc90] sm:$0xff]
        %v662 = vld [vmem:[#allocation5 + $0xc98] sm:$0xff]
        %v663 = vld [vmem:[#allocation5 + $0xca0] sm:$0xff]
        %v664 = vld [vmem:[#allocation5 + $0xca8] sm:$0xff]
        %v665 = vld [vmem:[#allocation5 + $0xcb0] sm:$0xff]
        %v666 = vld [vmem:[#allocation5 + $0xcb8] sm:$0xff]
        %v667 = vld [vmem:[#allocation5 + $0xcc0] sm:$0xff]
        %v668 = vld [vmem:[#allocation5 + $0xcc8] sm:$0xff]
        %v669 = vld [vmem:[#allocation5 + $0xcd0] sm:$0xff]
        %v670 = vld [vmem:[#allocation5 + $0xcd8] sm:$0xff]
        %v671 = vld [vmem:[#allocation5 + $0xce0] sm:$0xff]
        %v672 = vld [vmem:[#allocation5 + $0xce8] sm:$0xff]
        %v673 = vld [vmem:[#allocation5 + $0xcf0] sm:$0xff]
        %v674 = vld [vmem:[#allocation5 + $0xcf8] sm:$0xff]
        %v675 = vld [vmem:[#allocation5 + $0xd00] sm:$0xff]
        %v676 = vld [vmem:[#allocation5 + $0xd08] sm:$0xff]
        %v677 = vld [vmem:[#allocation5 + $0xd10] sm:$0xff]
        %v678 = vld [vmem:[#allocation5 + $0xd18] sm:$0xff]
        %v679 = vld [vmem:[#allocation5 + $0xd20] sm:$0xff]
        %v680 = vld [vmem:[#allocation5 + $0xd28] sm:$0xff]
        %v681 = vld [vmem:[#allocation5 + $0xd30] sm:$0xff]
        %v682 = vld [vmem:[#allocation5 + $0xd38] sm:$0xff]
        %v683 = vld [vmem:[#allocation5 + $0xd40] sm:$0xff]
        %v684 = vld [vmem:[#allocation5 + $0xd48] sm:$0xff]
        %v685 = vld [vmem:[#allocation5 + $0xd50] sm:$0xff]
        %v686 = vld [vmem:[#allocation5 + $0xd58] sm:$0xff]
        %v687 = vld [vmem:[#allocation5 + $0xd60] sm:$0xff]
        %v688 = vld [vmem:[#allocation5 + $0xd68] sm:$0xff]
        %v689 = vld [vmem:[#allocation5 + $0xd70] sm:$0xff]
        %v690 = vld [vmem:[#allocation5 + $0xd78] sm:$0xff]
        %v691 = vld [vmem:[#allocation5 + $0xd80] sm:$0xff]
        %v692 = vld [vmem:[#allocation5 + $0xd88] sm:$0xff]
        %v693 = vld [vmem:[#allocation5 + $0xd90] sm:$0xff]
        %v694 = vld [vmem:[#allocation5 + $0xd98] sm:$0xff]
        %v695 = vld [vmem:[#allocation5 + $0xda0] sm:$0xff]
        %v696 = vld [vmem:[#allocation5 + $0xda8] sm:$0xff]
        %v697 = vld [vmem:[#allocation5 + $0xdb0] sm:$0xff]
        %v698 = vld [vmem:[#allocation5 + $0xdb8] sm:$0xff]
        %v699 = vld [vmem:[#allocation5 + $0xdc0] sm:$0xff]
        %v700 = vld [vmem:[#allocation5 + $0xdc8] sm:$0xff]
        %v701 = vld [vmem:[#allocation5 + $0xdd0] sm:$0xff]
        %v702 = vld [vmem:[#allocation5 + $0xdd8] sm:$0xff]
        %v703 = vld [vmem:[#allocation5 + $0xde0] sm:$0xff]
        %v704 = vld [vmem:[#allocation5 + $0xde8] sm:$0xff]
        %v705 = vld [vmem:[#allocation5 + $0xdf0] sm:$0xff]
        %v706 = vld [vmem:[#allocation5 + $0xdf8] sm:$0xff]
        %v707 = vld [vmem:[#allocation5 + $0xe00] sm:$0xff]
        %v708 = vld [vmem:[#allocation5 + $0xe08] sm:$0xff]
        %v709 = vld [vmem:[#allocation5 + $0xe10] sm:$0xff]
        %v710 = vld [vmem:[#allocation5 + $0xe18] sm:$0xff]
        %v711 = vld [vmem:[#allocation5 + $0xe20] sm:$0xff]
        %v712 = vld [vmem:[#allocation5 + $0xe28] sm:$0xff]
        %v713 = vld [vmem:[#allocation5 + $0xe30] sm:$0xff]
        %v714 = vld [vmem:[#allocation5 + $0xe38] sm:$0xff]
        %v715 = vld [vmem:[#allocation5 + $0xe40] sm:$0xff]
        %v716 = vld [vmem:[#allocation5 + $0xe48] sm:$0xff]
        %v717 = vld [vmem:[#allocation5 + $0xe50] sm:$0xff]
        %v718 = vld [vmem:[#allocation5 + $0xe58] sm:$0xff]
        %v719 = vld [vmem:[#allocation5 + $0xe60] sm:$0xff]
        %v720 = vld [vmem:[#allocation5 + $0xe68] sm:$0xff]
        %v721 = vld [vmem:[#allocation5 + $0xe70] sm:$0xff]
        %v722 = vld [vmem:[#allocation5 + $0xe78] sm:$0xff]
        %v723 = vld [vmem:[#allocation5 + $0xe80] sm:$0xff]
        %v724 = vld [vmem:[#allocation5 + $0xe88] sm:$0xff]
        %v725 = vld [vmem:[#allocation5 + $0xe90] sm:$0xff]
        %v726 = vld [vmem:[#allocation5 + $0xe98] sm:$0xff]
        %v727 = vld [vmem:[#allocation5 + $0xea0] sm:$0xff]
        %v728 = vld [vmem:[#allocation5 + $0xea8] sm:$0xff]
        %v729 = vld [vmem:[#allocation5 + $0xeb0] sm:$0xff]
        %v730 = vld [vmem:[#allocation5 + $0xeb8] sm:$0xff]
        %v731 = vld [vmem:[#allocation5 + $0xec0] sm:$0xff]
        %v732 = vld [vmem:[#allocation5 + $0xec8] sm:$0xff]
        %v733 = vld [vmem:[#allocation5 + $0xed0] sm:$0xff]
        %v734 = vld [vmem:[#allocation5 + $0xed8] sm:$0xff]
        %v735 = vld [vmem:[#allocation5 + $0xee0] sm:$0xff]
        %v736 = vld [vmem:[#allocation5 + $0xee8] sm:$0xff]
        %v737 = vld [vmem:[#allocation5 + $0xef0] sm:$0xff]
        %v738 = vld [vmem:[#allocation5 + $0xef8] sm:$0xff]
        %v739 = vld [vmem:[#allocation5 + $0xf00] sm:$0xff]
        %v740 = vld [vmem:[#allocation5 + $0xf08] sm:$0xff]
        %v741 = vld [vmem:[#allocation5 + $0xf10] sm:$0xff]
        %v742 = vld [vmem:[#allocation5 + $0xf18] sm:$0xff]
        %v743 = vld [vmem:[#allocation5 + $0xf20] sm:$0xff]
        %v744 = vld [vmem:[#allocation5 + $0xf28] sm:$0xff]
        %v745 = vld [vmem:[#allocation5 + $0xf30] sm:$0xff]
        %v746 = vld [vmem:[#allocation5 + $0xf38] sm:$0xff]
        %v747 = vld [vmem:[#allocation5 + $0xf40] sm:$0xff]
        %v748 = vld [vmem:[#allocation5 + $0xf48] sm:$0xff]
        %v749 = vld [vmem:[#allocation5 + $0xf50] sm:$0xff]
        %v750 = vld [vmem:[#allocation5 + $0xf58] sm:$0xff]
        %v751 = vld [vmem:[#allocation5 + $0xf60] sm:$0xff]
        %v752 = vld [vmem:[#allocation5 + $0xf68] sm:$0xff]
        %v753 = vld [vmem:[#allocation5 + $0xf70] sm:$0xff]
        %v754 = vld [vmem:[#allocation5 + $0xf78] sm:$0xff]
        %v755 = vld [vmem:[#allocation5 + $0xf80] sm:$0xff]
        %v756 = vld [vmem:[#allocation5 + $0xf88] sm:$0xff]
        %v757 = vld [vmem:[#allocation5 + $0xf90] sm:$0xff]
        %v758 = vld [vmem:[#allocation5 + $0xf98] sm:$0xff]
        %v759 = vld [vmem:[#allocation5 + $0xfa0] sm:$0xff]
        %v760 = vld [vmem:[#allocation5 + $0xfa8] sm:$0xff]
        %v761 = vld [vmem:[#allocation5 + $0xfb0] sm:$0xff]
        %v762 = vld [vmem:[#allocation5 + $0xfb8] sm:$0xff]
        %v763 = vld [vmem:[#allocation5 + $0xfc0] sm:$0xff]
        %v764 = vld [vmem:[#allocation5 + $0xfc8] sm:$0xff]
        %v765 = vld [vmem:[#allocation5 + $0xfd0] sm:$0xff]
        %v766 = vld [vmem:[#allocation5 + $0xfd8] sm:$0xff]
        %v767 = vld [vmem:[#allocation5 + $0xfe0] sm:$0xff]
        %v768 = vld [vmem:[#allocation5 + $0xfe8] sm:$0xff]
        %v769 = vld [vmem:[#allocation5 + $0xff0] sm:$0xff]
        %v770 = vld [vmem:[#allocation5 + $0xff8] sm:$0xff]
        %v771 = vld [vmem:[#allocation5 + $0x1000] sm:$0xff]
        %v772 = vld [vmem:[#allocation5 + $0x1008] sm:$0xff]
        %v773 = vld [vmem:[#allocation5 + $0x1010] sm:$0xff]
        %v774 = vld [vmem:[#allocation5 + $0x1018] sm:$0xff]
        %v775 = vld [vmem:[#allocation5 + $0x1020] sm:$0xff]
        %v776 = vld [vmem:[#allocation5 + $0x1028] sm:$0xff]
        %v777 = vld [vmem:[#allocation5 + $0x1030] sm:$0xff]
        %v778 = vld [vmem:[#allocation5 + $0x1038] sm:$0xff]
        %v779 = vld [vmem:[#allocation5 + $0x1040] sm:$0xff]
        %v780 = vld [vmem:[#allocation5 + $0x1048] sm:$0xff]
        %v781 = vld [vmem:[#allocation5 + $0x1050] sm:$0xff]
        %v782 = vld [vmem:[#allocation5 + $0x1058] sm:$0xff]
        %v783 = vld [vmem:[#allocation5 + $0x1060] sm:$0xff]
        %v784 = vld [vmem:[#allocation5 + $0x1068] sm:$0xff]
        %v785 = vld [vmem:[#allocation5 + $0x1070] sm:$0xff]
        %v786 = vld [vmem:[#allocation5 + $0x1078] sm:$0xff]
        %v787 = vld [vmem:[#allocation5 + $0x1080] sm:$0xff]
        %v788 = vld [vmem:[#allocation5 + $0x1088] sm:$0xff]
        %v789 = vld [vmem:[#allocation5 + $0x1090] sm:$0xff]
        %v790 = vld [vmem:[#allocation5 + $0x1098] sm:$0xff]
        %v791 = vld [vmem:[#allocation5 + $0x10a0] sm:$0xff]
        %v792 = vld [vmem:[#allocation5 + $0x10a8] sm:$0xff]
        %v793 = vld [vmem:[#allocation5 + $0x10b0] sm:$0xff]
        %v794 = vld [vmem:[#allocation5 + $0x10b8] sm:$0xff]
        %v795 = vld [vmem:[#allocation5 + $0x10c0] sm:$0xff]
        %v796 = vld [vmem:[#allocation5 + $0x10c8] sm:$0xff]
        %v797 = vld [vmem:[#allocation5 + $0x10d0] sm:$0xff]
        %v798 = vld [vmem:[#allocation5 + $0x10d8] sm:$0xff]
        %v799 = vld [vmem:[#allocation5 + $0x10e0] sm:$0xff]
        %v800 = vld [vmem:[#allocation5 + $0x10e8] sm:$0xff]
        %v801 = vld [vmem:[#allocation5 + $0x10f0] sm:$0xff]
        %v802 = vld [vmem:[#allocation5 + $0x10f8] sm:$0xff]
        %v803 = vld [vmem:[#allocation5 + $0x1100] sm:$0xff]
        %v804 = vld [vmem:[#allocation5 + $0x1108] sm:$0xff]
        %v805 = vld [vmem:[#allocation5 + $0x1110] sm:$0xff]
        %v806 = vld [vmem:[#allocation5 + $0x1118] sm:$0xff]
        %v807 = vld [vmem:[#allocation5 + $0x1120] sm:$0xff]
        %v808 = vld [vmem:[#allocation5 + $0x1128] sm:$0xff]
        %v809 = vld [vmem:[#allocation5 + $0x1130] sm:$0xff]
        %v810 = vld [vmem:[#allocation5 + $0x1138] sm:$0xff]
        %v811 = vld [vmem:[#allocation5 + $0x1140] sm:$0xff]
        %v812 = vld [vmem:[#allocation5 + $0x1148] sm:$0xff]
        %v813 = vld [vmem:[#allocation5 + $0x1150] sm:$0xff]
        %v814 = vld [vmem:[#allocation5 + $0x1158] sm:$0xff]
        %v815 = vld [vmem:[#allocation5 + $0x1160] sm:$0xff]
        %v816 = vld [vmem:[#allocation5 + $0x1168] sm:$0xff]
        %v817 = vld [vmem:[#allocation5 + $0x1170] sm:$0xff]
        %v818 = vld [vmem:[#allocation5 + $0x1178] sm:$0xff]
        %v819 = vld [vmem:[#allocation5 + $0x1180] sm:$0xff]
        %v820 = vld [vmem:[#allocation5 + $0x1188] sm:$0xff]
        %v821 = vld [vmem:[#allocation5 + $0x1190] sm:$0xff]
        %v822 = vld [vmem:[#allocation5 + $0x1198] sm:$0xff]
        %v823 = vld [vmem:[#allocation5 + $0x11a0] sm:$0xff]
        %v824 = vld [vmem:[#allocation5 + $0x11a8] sm:$0xff]
        %v825 = vld [vmem:[#allocation5 + $0x11b0] sm:$0xff]
        %v826 = vld [vmem:[#allocation5 + $0x11b8] sm:$0xff]
        %v827 = vld [vmem:[#allocation5 + $0x11c0] sm:$0xff]
        %v828 = vld [vmem:[#allocation5 + $0x11c8] sm:$0xff]
        %v829 = vld [vmem:[#allocation5 + $0x11d0] sm:$0xff]
        %v830 = vld [vmem:[#allocation5 + $0x11d8] sm:$0xff]
        %v831 = vld [vmem:[#allocation5 + $0x11e0] sm:$0xff]
        %v832 = vld [vmem:[#allocation5 + $0x11e8] sm:$0xff]
        %v833 = vld [vmem:[#allocation5 + $0x11f0] sm:$0xff]
        %v834 = vld [vmem:[#allocation5 + $0x11f8] sm:$0xff]
        %v835 = vld [vmem:[#allocation5 + $0x1200] sm:$0xff]
        %v836 = vld [vmem:[#allocation5 + $0x1208] sm:$0xff]
        %v837 = vld [vmem:[#allocation5 + $0x1210] sm:$0xff]
        %v838 = vld [vmem:[#allocation5 + $0x1218] sm:$0xff]
        %v839 = vld [vmem:[#allocation5 + $0x1220] sm:$0xff]
        %v840 = vld [vmem:[#allocation5 + $0x1228] sm:$0xff]
        %v841 = vld [vmem:[#allocation5 + $0x1230] sm:$0xff]
        %v842 = vld [vmem:[#allocation5 + $0x1238] sm:$0xff]
        %v843 = vld [vmem:[#allocation5 + $0x1240] sm:$0xff]
        %v844 = vld [vmem:[#allocation5 + $0x1248] sm:$0xff]
        %v845 = vld [vmem:[#allocation5 + $0x1250] sm:$0xff]
        %v846 = vld [vmem:[#allocation5 + $0x1258] sm:$0xff]
        %v847 = vld [vmem:[#allocation5 + $0x1260] sm:$0xff]
        %v848 = vld [vmem:[#allocation5 + $0x1268] sm:$0xff]
        %v849 = vld [vmem:[#allocation5 + $0x1270] sm:$0xff]
        %v850 = vld [vmem:[#allocation5 + $0x1278] sm:$0xff]
        %v851 = vld [vmem:[#allocation5 + $0x1280] sm:$0xff]
        %v852 = vld [vmem:[#allocation5 + $0x1288] sm:$0xff]
        %v853 = vld [vmem:[#allocation5 + $0x1290] sm:$0xff]
        %v854 = vld [vmem:[#allocation5 + $0x1298] sm:$0xff]
        %v855 = vld [vmem:[#allocation5 + $0x12a0] sm:$0xff]
        %v856 = vld [vmem:[#allocation5 + $0x12a8] sm:$0xff]
        %v857 = vld [vmem:[#allocation5 + $0x12b0] sm:$0xff]
        %v858 = vld [vmem:[#allocation5 + $0x12b8] sm:$0xff]
        %v859 = vld [vmem:[#allocation5 + $0x12c0] sm:$0xff]
        %v860 = vld [vmem:[#allocation5 + $0x12c8] sm:$0xff]
        %v861 = vld [vmem:[#allocation5 + $0x12d0] sm:$0xff]
        %v862 = vld [vmem:[#allocation5 + $0x12d8] sm:$0xff]
        %v863 = vld [vmem:[#allocation5 + $0x12e0] sm:$0xff]
        %v864 = vld [vmem:[#allocation5 + $0x12e8] sm:$0xff]
        %v865 = vld [vmem:[#allocation5 + $0x12f0] sm:$0xff]
        %v866 = vld [vmem:[#allocation5 + $0x12f8] sm:$0xff]
        %v867 = vld [vmem:[#allocation5 + $0x1300] sm:$0xff]
        %v868 = vld [vmem:[#allocation5 + $0x1308] sm:$0xff]
        %v869 = vld [vmem:[#allocation5 + $0x1310] sm:$0xff]
        %v870 = vld [vmem:[#allocation5 + $0x1318] sm:$0xff]
        %v871 = vld [vmem:[#allocation5 + $0x1320] sm:$0xff]
        %v872 = vld [vmem:[#allocation5 + $0x1328] sm:$0xff]
        %v873 = vld [vmem:[#allocation5 + $0x1330] sm:$0xff]
        %v874 = vld [vmem:[#allocation5 + $0x1338] sm:$0xff]
        %v875 = vld [vmem:[#allocation5 + $0x1340] sm:$0xff]
        %v876 = vld [vmem:[#allocation5 + $0x1348] sm:$0xff]
        %v877 = vld [vmem:[#allocation5 + $0x1350] sm:$0xff]
        %v878 = vld [vmem:[#allocation5 + $0x1358] sm:$0xff]
        %v879 = vld [vmem:[#allocation5 + $0x1360] sm:$0xff]
        %v880 = vld [vmem:[#allocation5 + $0x1368] sm:$0xff]
        %v881 = vld [vmem:[#allocation5 + $0x1370] sm:$0xff]
        %v882 = vld [vmem:[#allocation5 + $0x1378] sm:$0xff]
        %v883 = vld [vmem:[#allocation5 + $0x1380] sm:$0xff]
        %v884 = vld [vmem:[#allocation5 + $0x1388] sm:$0xff]
        %v885 = vld [vmem:[#allocation5 + $0x1390] sm:$0xff]
        %v886 = vld [vmem:[#allocation5 + $0x1398] sm:$0xff]
        %v887 = vld [vmem:[#allocation5 + $0x13a0] sm:$0xff]
        %v888 = vld [vmem:[#allocation5 + $0x13a8] sm:$0xff]
        %v889 = vld [vmem:[#allocation5 + $0x13b0] sm:$0xff]
        %v890 = vld [vmem:[#allocation5 + $0x13b8] sm:$0xff]
        %v891 = vld [vmem:[#allocation5 + $0x13c0] sm:$0xff]
        %v892 = vld [vmem:[#allocation5 + $0x13c8] sm:$0xff]
        %v893 = vld [vmem:[#allocation5 + $0x13d0] sm:$0xff]
        %v894 = vld [vmem:[#allocation5 + $0x13d8] sm:$0xff]
        %v895 = vld [vmem:[#allocation5 + $0x13e0] sm:$0xff]
        %v896 = vld [vmem:[#allocation5 + $0x13e8] sm:$0xff]
        %v897 = vld [vmem:[#allocation5 + $0x13f0] sm:$0xff]
        %v898 = vld [vmem:[#allocation5 + $0x13f8] sm:$0xff]
        %v899 = vld [vmem:[#allocation7] sm:$0xff]
        %v900 = vld [vmem:[#allocation7 + $0x8] sm:$0xff]
        %v903 = vlaneseq
        %v904 = vshrl.u32 %v903, 7
        %v905 = vsub.s32 0, %v904
        %v906 = vrot.slane %v899, %v905
        %v907 = vlaneseq
        %v908 = vshrl.u32 %v907, 7
        %v909 = vsub.s32 1, %v908
        %v910 = vrot.slane %v899, %v909
        %v911 = vlaneseq
        %v912 = vshrl.u32 %v911, 7
        %v913 = vsub.s32 2, %v912
        %v914 = vrot.slane %v899, %v913
        %v915 = vlaneseq
        %v916 = vshrl.u32 %v915, 7
        %v917 = vsub.s32 3, %v916
        %v918 = vrot.slane %v899, %v917
        %v919 = vlaneseq
        %v920 = vshrl.u32 %v919, 7
        %v921 = vsub.s32 4, %v920
        %v922 = vrot.slane %v899, %v921
        %v923 = vlaneseq
        %v924 = vshrl.u32 %v923, 7
        %v925 = vsub.s32 5, %v924
        %v926 = vrot.slane %v899, %v925
        %v927 = vlaneseq
        %v928 = vshrl.u32 %v927, 7
        %v929 = vsub.s32 6, %v928
        %v930 = vrot.slane %v899, %v929
        %v931 = vlaneseq
        %v932 = vshrl.u32 %v931, 7
        %v933 = vsub.s32 7, %v932
        %v934 = vrot.slane %v899, %v933
        %v935 = vlaneseq
        %v936 = vshrl.u32 %v935, 7
        %v937 = vsub.s32 0, %v936
        %v938 = vrot.slane %v900, %v937
        %v939 = vlaneseq
        %v940 = vshrl.u32 %v939, 7
        %v941 = vsub.s32 1, %v940
        %v942 = vrot.slane %v900, %v941
        %v943 = vlaneseq
        %v944 = vshrl.u32 %v943, 7
        %v945 = vsub.s32 2, %v944
        %v946 = vrot.slane %v900, %v945
        %v947 = vlaneseq
        %v948 = vshrl.u32 %v947, 7
        %v949 = vsub.s32 3, %v948
        %v950 = vrot.slane %v900, %v949
        %v951 = vlaneseq
        %v952 = vshrl.u32 %v951, 7
        %v953 = vsub.s32 4, %v952
        %v954 = vrot.slane %v900, %v953
        %v955 = vlaneseq
        %v956 = vshrl.u32 %v955, 7
        %v957 = vsub.s32 5, %v956
        %v958 = vrot.slane %v900, %v957
        %v959 = vlaneseq
        %v960 = vshrl.u32 %v959, 7
        %v961 = vsub.s32 6, %v960
        %v962 = vrot.slane %v900, %v961
        %v963 = vlaneseq
        %v964 = vshrl.u32 %v963, 7
        %v965 = vsub.s32 7, %v964
        %v966 = vrot.slane %v900, %v965
        %vm983 = vcmask 523264
        %v985 = vsel %vm983, %v258, 0
        %987 = vmatprep.subr.mxu0 %v260
        %988 = vmatpush1.msra.mxu0 %v259
        %989 = vmatprep.subr.mxu0 %v276
        %990 = vmatpush1.msra.mxu0 %v275
        %991 = vmatprep.subr.mxu0 %v292
        %992 = vmatpush1.msra.mxu0 %v291
        %993 = vmatprep.subr.mxu0 %v308
        %994 = vmatpush1.msra.mxu0 %v307
        %995 = vmatprep.subr.mxu0 %v324
        %996 = vmatpush1.msra.mxu0 %v323
        %997 = vmatprep.subr.mxu0 %v340
        %998 = vmatpush1.msra.mxu0 %v339
        %999 = vmatprep.subr.mxu0 %v356
        %1000 = vmatpush1.msra.mxu0 %v355
        %1001 = vmatprep.subr.mxu0 %v372
        %1002 = vmatpush1.msra.mxu0 %v371
        %1003 = vmatprep.subr.mxu0 %v388
        %1004 = vmatpush1.msra.mxu0 %v387
        %1005 = vmatprep.subr.mxu0 %v404
        %1006 = vmatpush1.msra.mxu0 %v403
        %1007 = vmatprep.subr.mxu0 %v420
        %1008 = vmatpush1.msra.mxu0 %v419
        %1009 = vmatprep.subr.mxu0 %v436
        %1010 = vmatpush1.msra.mxu0 %v435
        %1011 = vmatprep.subr.mxu0 %v452
        %1012 = vmatpush1.msra.mxu0 %v451
        %1013 = vmatprep.subr.mxu0 %v468
        %1014 = vmatpush1.msra.mxu0 %v467
        %1015 = vmatprep.subr.mxu0 %v484
        %1016 = vmatpush1.msra.mxu0 %v483
        %1017 = vmatprep.subr.mxu0 %v500
        %1018 = vmatpush1.msra.mxu0 %v499
        %1019 = vmatprep.subr.mxu0 %v516
        %1020 = vmatpush1.msra.mxu0 %v515
        %1021 = vmatprep.subr.mxu0 %v532
        %1022 = vmatpush1.msra.mxu0 %v531
        %1023 = vmatprep.subr.mxu0 %v548
        %1024 = vmatpush1.msra.mxu0 %v547
        %1025 = vmatprep.subr.mxu0 %v564
        %1026 = vmatpush1.msra.mxu0 %v563
        %1027 = vmatprep.subr.mxu0 %v580
        %1028 = vmatpush1.msra.mxu0 %v579
        %1029 = vmatprep.subr.mxu0 %v596
        %1030 = vmatpush1.msra.mxu0 %v595
        %1031 = vmatprep.subr.mxu0 %v612
        %1032 = vmatpush1.msra.mxu0 %v611
        %1033 = vmatprep.subr.mxu0 %v628
        %1034 = vmatpush1.msra.mxu0 %v627
        %1035 = vmatprep.subr.mxu0 %v644
        %1036 = vmatpush1.msra.mxu0 %v643
        %1037 = vmatprep.subr.mxu0 %v660
        %1038 = vmatpush1.msra.mxu0 %v659
        %1039 = vmatprep.subr.mxu0 %v676
        %1040 = vmatpush1.msra.mxu0 %v675
        %1041 = vmatprep.subr.mxu0 %v692
        %1042 = vmatpush1.msra.mxu0 %v691
        %1043 = vmatprep.subr.mxu0 %v708
        %1044 = vmatpush1.msra.mxu0 %v707
        %1045 = vmatprep.subr.mxu0 %v724
        %1046 = vmatpush1.msra.mxu0 %v723
        %1047 = vmatprep.subr.mxu0 %v740
        %1048 = vmatpush1.msra.mxu0 %v739
        %1049 = vmatprep.subr.mxu0 %v756
        %1050 = vmatpush1.msra.mxu0 %v755
        %1051 = vmatprep.mubr.f32.mxu0 %v257
        %1052 = vmatmul.mubr.f32.gmra.mrb[0].mxu0 %v256
        %v1053 = vpop.f32.mrb[0].mxu0
        %v1054 = vadd.f32 %v906, %v1053
        %v1055 = vpop.f32.mrb[0].mxu0
        %v1056 = vadd.f32 %v910, %v1055
        %1057 = vdwg.mxu0
        %1058 = vmatprep.subr.mxu0 %v772
        %1059 = vmatpush1.msra.mxu0 %v771
        %1060 = vmatprep.subr.mxu0 %v788
        %1061 = vmatpush1.msra.mxu0 %v787
        %1062 = vmatprep.subr.mxu0 %v804
        %1063 = vmatpush1.msra.mxu0 %v803
        %1064 = vmatprep.subr.mxu0 %v820
        %1065 = vmatpush1.msra.mxu0 %v819
        %1066 = vmatprep.subr.mxu0 %v836
        %1067 = vmatpush1.msra.mxu0 %v835
        %1068 = vmatprep.subr.mxu0 %v852
        %1069 = vmatpush1.msra.mxu0 %v851
        %1070 = vmatprep.subr.mxu0 %v868
        %1071 = vmatpush1.msra.mxu0 %v867
        %1072 = vmatprep.subr.mxu0 %v884
        %1073 = vmatpush1.msra.mxu0 %v883
        %1074 = vmatprep.subr.mxu0 0.0
        %1075 = vmatpush1.msra.mxu0 0.0
        %1076 = vmatprep.subr.mxu0 0.0
        %1077 = vmatpush1.msra.mxu0 0.0
        %1078 = vmatprep.subr.mxu0 0.0
        %1079 = vmatpush1.msra.mxu0 0.0
        %1080 = vmatprep.subr.mxu0 0.0
        %1081 = vmatpush1.msra.mxu0 0.0
        %1082 = vmatprep.subr.mxu0 0.0
        %1083 = vmatpush1.msra.mxu0 0.0
        %1084 = vmatprep.subr.mxu0 0.0
        %1085 = vmatpush1.msra.mxu0 0.0
        %1086 = vmatprep.subr.mxu0 0.0
        %1087 = vmatpush1.msra.mxu0 0.0
        %1088 = vmatprep.subr.mxu0 0.0
        %1089 = vmatpush1.msra.mxu0 0.0
        %1090 = vmatprep.subr.mxu0 0.0
        %1091 = vmatpush1.msra.mxu0 0.0
        %1092 = vmatprep.subr.mxu0 0.0
        %1093 = vmatpush1.msra.mxu0 0.0
        %1094 = vmatprep.subr.mxu0 0.0
        %1095 = vmatpush1.msra.mxu0 0.0
        %1096 = vmatprep.subr.mxu0 0.0
        %1097 = vmatpush1.msra.mxu0 0.0
        %1098 = vmatprep.subr.mxu0 0.0
        %1099 = vmatpush1.msra.mxu0 0.0
        %1100 = vmatprep.subr.mxu0 0.0
        %1101 = vmatpush1.msra.mxu0 0.0
        %1102 = vmatprep.subr.mxu0 0.0
        %1103 = vmatpush1.msra.mxu0 0.0
        %1104 = vmatprep.subr.mxu0 0.0
        %1105 = vmatpush1.msra.mxu0 0.0
        %1106 = vmatprep.subr.mxu0 0.0
        %1107 = vmatpush1.msra.mxu0 0.0
        %1108 = vmatprep.subr.mxu0 0.0
        %1109 = vmatpush1.msra.mxu0 0.0
        %1110 = vmatprep.subr.mxu0 0.0
        %1111 = vmatpush1.msra.mxu0 0.0
        %1112 = vmatprep.subr.mxu0 0.0
        %1113 = vmatpush1.msra.mxu0 0.0
        %1114 = vmatprep.subr.mxu0 0.0
        %1115 = vmatpush1.msra.mxu0 0.0
        %1116 = vmatprep.subr.mxu0 0.0
        %1117 = vmatpush1.msra.mxu0 0.0
        %1118 = vmatprep.subr.mxu0 0.0
        %1119 = vmatpush1.msra.mxu0 0.0
        %1120 = vmatprep.subr.mxu0 0.0
        %1121 = vmatpush1.msra.mxu0 0.0
        %1122 = vmatprep.mubr.f32.mxu0 0.0
        %1123 = vmatmul.mubr.f32.gmra.mrb[0].mxu0 %v985
        %v1124 = vpop.f32.mrb[0].mxu0
        %v1125 = vadd.f32 %v1054, %v1124
        %v1126 = vpop.f32.mrb[0].mxu0
        %v1127 = vadd.f32 %v1056, %v1126
        %1128 = vdwg.mxu0
        %1129 = vmatprep.subr.mxu0 %v262
        %1130 = vmatpush1.msra.mxu0 %v261
        %1131 = vmatprep.subr.mxu0 %v278
        %1132 = vmatpush1.msra.mxu0 %v277
        %1133 = vmatprep.subr.mxu0 %v294
        %1134 = vmatpush1.msra.mxu0 %v293
        %1135 = vmatprep.subr.mxu0 %v310
        %1136 = vmatpush1.msra.mxu0 %v309
        %1137 = vmatprep.subr.mxu0 %v326
        %1138 = vmatpush1.msra.mxu0 %v325
        %1139 = vmatprep.subr.mxu0 %v342
        %1140 = vmatpush1.msra.mxu0 %v341
        %1141 = vmatprep.subr.mxu0 %v358
        %1142 = vmatpush1.msra.mxu0 %v357
        %1143 = vmatprep.subr.mxu0 %v374
        %1144 = vmatpush1.msra.mxu0 %v373
        %1145 = vmatprep.subr.mxu0 %v390
        %1146 = vmatpush1.msra.mxu0 %v389
        %1147 = vmatprep.subr.mxu0 %v406
        %1148 = vmatpush1.msra.mxu0 %v405
        %1149 = vmatprep.subr.mxu0 %v422
        %1150 = vmatpush1.msra.mxu0 %v421
        %1151 = vmatprep.subr.mxu0 %v438
        %1152 = vmatpush1.msra.mxu0 %v437
        %1153 = vmatprep.subr.mxu0 %v454
        %1154 = vmatpush1.msra.mxu0 %v453
        %1155 = vmatprep.subr.mxu0 %v470
        %1156 = vmatpush1.msra.mxu0 %v469
        %1157 = vmatprep.subr.mxu0 %v486
        %1158 = vmatpush1.msra.mxu0 %v485
        %1159 = vmatprep.subr.mxu0 %v502
        %1160 = vmatpush1.msra.mxu0 %v501
        %1161 = vmatprep.subr.mxu0 %v518
        %1162 = vmatpush1.msra.mxu0 %v517
        %1163 = vmatprep.subr.mxu0 %v534
        %1164 = vmatpush1.msra.mxu0 %v533
        %1165 = vmatprep.subr.mxu0 %v550
        %1166 = vmatpush1.msra.mxu0 %v549
        %1167 = vmatprep.subr.mxu0 %v566
        %1168 = vmatpush1.msra.mxu0 %v565
        %1169 = vmatprep.subr.mxu0 %v582
        %1170 = vmatpush1.msra.mxu0 %v581
        %1171 = vmatprep.subr.mxu0 %v598
        %1172 = vmatpush1.msra.mxu0 %v597
        %1173 = vmatprep.subr.mxu0 %v614
        %1174 = vmatpush1.msra.mxu0 %v613
        %1175 = vmatprep.subr.mxu0 %v630
        %1176 = vmatpush1.msra.mxu0 %v629
        %1177 = vmatprep.subr.mxu0 %v646
        %1178 = vmatpush1.msra.mxu0 %v645
        %1179 = vmatprep.subr.mxu0 %v662
        %1180 = vmatpush1.msra.mxu0 %v661
        %1181 = vmatprep.subr.mxu0 %v678
        %1182 = vmatpush1.msra.mxu0 %v677
        %1183 = vmatprep.subr.mxu0 %v694
        %1184 = vmatpush1.msra.mxu0 %v693
        %1185 = vmatprep.subr.mxu0 %v710
        %1186 = vmatpush1.msra.mxu0 %v709
        %1187 = vmatprep.subr.mxu0 %v726
        %1188 = vmatpush1.msra.mxu0 %v725
        %1189 = vmatprep.subr.mxu0 %v742
        %1190 = vmatpush1.msra.mxu0 %v741
        %1191 = vmatprep.subr.mxu0 %v758
        %1192 = vmatpush1.msra.mxu0 %v757
        %1193 = vmatprep.mubr.f32.mxu0 %v257
        %1194 = vmatmul.mubr.f32.gmra.mrb[0].mxu0 %v256
        %v1195 = vpop.f32.mrb[0].mxu0
        %v1196 = vadd.f32 %v914, %v1195
        %v1197 = vpop.f32.mrb[0].mxu0
        %v1198 = vadd.f32 %v918, %v1197
        %1199 = vdwg.mxu0
        %1200 = vmatprep.subr.mxu0 %v774
        %1201 = vmatpush1.msra.mxu0 %v773
        %1202 = vmatprep.subr.mxu0 %v790
        %1203 = vmatpush1.msra.mxu0 %v789
        %1204 = vmatprep.subr.mxu0 %v806
        %1205 = vmatpush1.msra.mxu0 %v805
        %1206 = vmatprep.subr.mxu0 %v822
        %1207 = vmatpush1.msra.mxu0 %v821
        %1208 = vmatprep.subr.mxu0 %v838
        %1209 = vmatpush1.msra.mxu0 %v837
        %1210 = vmatprep.subr.mxu0 %v854
        %1211 = vmatpush1.msra.mxu0 %v853
        %1212 = vmatprep.subr.mxu0 %v870
        %1213 = vmatpush1.msra.mxu0 %v869
        %1214 = vmatprep.subr.mxu0 %v886
        %1215 = vmatpush1.msra.mxu0 %v885
        %1216 = vmatprep.subr.mxu0 0.0
        %1217 = vmatpush1.msra.mxu0 0.0
        %1218 = vmatprep.subr.mxu0 0.0
        %1219 = vmatpush1.msra.mxu0 0.0
        %1220 = vmatprep.subr.mxu0 0.0
        %1221 = vmatpush1.msra.mxu0 0.0
        %1222 = vmatprep.subr.mxu0 0.0
        %1223 = vmatpush1.msra.mxu0 0.0
        %1224 = vmatprep.subr.mxu0 0.0
        %1225 = vmatpush1.msra.mxu0 0.0
        %1226 = vmatprep.subr.mxu0 0.0
        %1227 = vmatpush1.msra.mxu0 0.0
        %1228 = vmatprep.subr.mxu0 0.0
        %1229 = vmatpush1.msra.mxu0 0.0
        %1230 = vmatprep.subr.mxu0 0.0
        %1231 = vmatpush1.msra.mxu0 0.0
        %1232 = vmatprep.subr.mxu0 0.0
        %1233 = vmatpush1.msra.mxu0 0.0
        %1234 = vmatprep.subr.mxu0 0.0
        %1235 = vmatpush1.msra.mxu0 0.0
        %1236 = vmatprep.subr.mxu0 0.0
        %1237 = vmatpush1.msra.mxu0 0.0
        %1238 = vmatprep.subr.mxu0 0.0
        %1239 = vmatpush1.msra.mxu0 0.0
        %1240 = vmatprep.subr.mxu0 0.0
        %1241 = vmatpush1.msra.mxu0 0.0
        %1242 = vmatprep.subr.mxu0 0.0
        %1243 = vmatpush1.msra.mxu0 0.0
        %1244 = vmatprep.subr.mxu0 0.0
        %1245 = vmatpush1.msra.mxu0 0.0
        %1246 = vmatprep.subr.mxu0 0.0
        %1247 = vmatpush1.msra.mxu0 0.0
        %1248 = vmatprep.subr.mxu0 0.0
        %1249 = vmatpush1.msra.mxu0 0.0
        %1250 = vmatprep.subr.mxu0 0.0
        %1251 = vmatpush1.msra.mxu0 0.0
        %1252 = vmatprep.subr.mxu0 0.0
        %1253 = vmatpush1.msra.mxu0 0.0
        %1254 = vmatprep.subr.mxu0 0.0
        %1255 = vmatpush1.msra.mxu0 0.0
        %1256 = vmatprep.subr.mxu0 0.0
        %1257 = vmatpush1.msra.mxu0 0.0
        %1258 = vmatprep.subr.mxu0 0.0
        %1259 = vmatpush1.msra.mxu0 0.0
        %1260 = vmatprep.subr.mxu0 0.0
        %1261 = vmatpush1.msra.mxu0 0.0
        %1262 = vmatprep.subr.mxu0 0.0
        %1263 = vmatpush1.msra.mxu0 0.0
        %1264 = vmatprep.mubr.f32.mxu0 0.0
        %1265 = vmatmul.mubr.f32.gmra.mrb[0].mxu0 %v985
        %v1266 = vpop.f32.mrb[0].mxu0
        %v1267 = vadd.f32 %v1196, %v1266
        %v1268 = vpop.f32.mrb[0].mxu0
        %v1269 = vadd.f32 %v1198, %v1268
        %1270 = vdwg.mxu0
        %1271 = vmatprep.subr.mxu0 %v264
        %1272 = vmatpush1.msra.mxu0 %v263
        %1273 = vmatprep.subr.mxu0 %v280
        %1274 = vmatpush1.msra.mxu0 %v279
        %1275 = vmatprep.subr.mxu0 %v296
        %1276 = vmatpush1.msra.mxu0 %v295
        %1277 = vmatprep.subr.mxu0 %v312
        %1278 = vmatpush1.msra.mxu0 %v311
        %1279 = vmatprep.subr.mxu0 %v328
        %1280 = vmatpush1.msra.mxu0 %v327
        %1281 = vmatprep.subr.mxu0 %v344
        %1282 = vmatpush1.msra.mxu0 %v343
        %1283 = vmatprep.subr.mxu0 %v360
        %1284 = vmatpush1.msra.mxu0 %v359
        %1285 = vmatprep.subr.mxu0 %v376
        %1286 = vmatpush1.msra.mxu0 %v375
        %1287 = vmatprep.subr.mxu0 %v392
        %1288 = vmatpush1.msra.mxu0 %v391
        %1289 = vmatprep.subr.mxu0 %v408
        %1290 = vmatpush1.msra.mxu0 %v407
        %1291 = vmatprep.subr.mxu0 %v424
        %1292 = vmatpush1.msra.mxu0 %v423
        %1293 = vmatprep.subr.mxu0 %v440
        %1294 = vmatpush1.msra.mxu0 %v439
        %1295 = vmatprep.subr.mxu0 %v456
        %1296 = vmatpush1.msra.mxu0 %v455
        %1297 = vmatprep.subr.mxu0 %v472
        %1298 = vmatpush1.msra.mxu0 %v471
        %1299 = vmatprep.subr.mxu0 %v488
        %1300 = vmatpush1.msra.mxu0 %v487
        %1301 = vmatprep.subr.mxu0 %v504
        %1302 = vmatpush1.msra.mxu0 %v503
        %1303 = vmatprep.subr.mxu0 %v520
        %1304 = vmatpush1.msra.mxu0 %v519
        %1305 = vmatprep.subr.mxu0 %v536
        %1306 = vmatpush1.msra.mxu0 %v535
        %1307 = vmatprep.subr.mxu0 %v552
        %1308 = vmatpush1.msra.mxu0 %v551
        %1309 = vmatprep.subr.mxu0 %v568
        %1310 = vmatpush1.msra.mxu0 %v567
        %1311 = vmatprep.subr.mxu0 %v584
        %1312 = vmatpush1.msra.mxu0 %v583
        %1313 = vmatprep.subr.mxu0 %v600
        %1314 = vmatpush1.msra.mxu0 %v599
        %1315 = vmatprep.subr.mxu0 %v616
        %1316 = vmatpush1.msra.mxu0 %v615
        %1317 = vmatprep.subr.mxu0 %v632
        %1318 = vmatpush1.msra.mxu0 %v631
        %1319 = vmatprep.subr.mxu0 %v648
        %1320 = vmatpush1.msra.mxu0 %v647
        %1321 = vmatprep.subr.mxu0 %v664
        %1322 = vmatpush1.msra.mxu0 %v663
        %1323 = vmatprep.subr.mxu0 %v680
        %1324 = vmatpush1.msra.mxu0 %v679
        %1325 = vmatprep.subr.mxu0 %v696
        %1326 = vmatpush1.msra.mxu0 %v695
        %1327 = vmatprep.subr.mxu0 %v712
        %1328 = vmatpush1.msra.mxu0 %v711
        %1329 = vmatprep.subr.mxu0 %v728
        %1330 = vmatpush1.msra.mxu0 %v727
        %1331 = vmatprep.subr.mxu0 %v744
        %1332 = vmatpush1.msra.mxu0 %v743
        %1333 = vmatprep.subr.mxu0 %v760
        %1334 = vmatpush1.msra.mxu0 %v759
        %1335 = vmatprep.mubr.f32.mxu0 %v257
        %1336 = vmatmul.mubr.f32.gmra.mrb[0].mxu0 %v256
        %v1337 = vpop.f32.mrb[0].mxu0
        %v1338 = vadd.f32 %v922, %v1337
        %v1339 = vpop.f32.mrb[0].mxu0
        %v1340 = vadd.f32 %v926, %v1339
        %1341 = vdwg.mxu0
        %1342 = vmatprep.subr.mxu0 %v776
        %1343 = vmatpush1.msra.mxu0 %v775
        %1344 = vmatprep.subr.mxu0 %v792
        %1345 = vmatpush1.msra.mxu0 %v791
        %1346 = vmatprep.subr.mxu0 %v808
        %1347 = vmatpush1.msra.mxu0 %v807
        %1348 = vmatprep.subr.mxu0 %v824
        %1349 = vmatpush1.msra.mxu0 %v823
        %1350 = vmatprep.subr.mxu0 %v840
        %1351 = vmatpush1.msra.mxu0 %v839
        %1352 = vmatprep.subr.mxu0 %v856
        %1353 = vmatpush1.msra.mxu0 %v855
        %1354 = vmatprep.subr.mxu0 %v872
        %1355 = vmatpush1.msra.mxu0 %v871
        %1356 = vmatprep.subr.mxu0 %v888
        %1357 = vmatpush1.msra.mxu0 %v887
        %1358 = vmatprep.subr.mxu0 0.0
        %1359 = vmatpush1.msra.mxu0 0.0
        %1360 = vmatprep.subr.mxu0 0.0
        %1361 = vmatpush1.msra.mxu0 0.0
        %1362 = vmatprep.subr.mxu0 0.0
        %1363 = vmatpush1.msra.mxu0 0.0
        %1364 = vmatprep.subr.mxu0 0.0
        %1365 = vmatpush1.msra.mxu0 0.0
        %1366 = vmatprep.subr.mxu0 0.0
        %1367 = vmatpush1.msra.mxu0 0.0
        %1368 = vmatprep.subr.mxu0 0.0
        %1369 = vmatpush1.msra.mxu0 0.0
        %1370 = vmatprep.subr.mxu0 0.0
        %1371 = vmatpush1.msra.mxu0 0.0
        %1372 = vmatprep.subr.mxu0 0.0
        %1373 = vmatpush1.msra.mxu0 0.0
        %1374 = vmatprep.subr.mxu0 0.0
        %1375 = vmatpush1.msra.mxu0 0.0
        %1376 = vmatprep.subr.mxu0 0.0
        %1377 = vmatpush1.msra.mxu0 0.0
        %1378 = vmatprep.subr.mxu0 0.0
        %1379 = vmatpush1.msra.mxu0 0.0
        %1380 = vmatprep.subr.mxu0 0.0
        %1381 = vmatpush1.msra.mxu0 0.0
        %1382 = vmatprep.subr.mxu0 0.0
        %1383 = vmatpush1.msra.mxu0 0.0
        %1384 = vmatprep.subr.mxu0 0.0
        %1385 = vmatpush1.msra.mxu0 0.0
        %1386 = vmatprep.subr.mxu0 0.0
        %1387 = vmatpush1.msra.mxu0 0.0
        %1388 = vmatprep.subr.mxu0 0.0
        %1389 = vmatpush1.msra.mxu0 0.0
        %1390 = vmatprep.subr.mxu0 0.0
        %1391 = vmatpush1.msra.mxu0 0.0
        %1392 = vmatprep.subr.mxu0 0.0
        %1393 = vmatpush1.msra.mxu0 0.0
        %1394 = vmatprep.subr.mxu0 0.0
        %1395 = vmatpush1.msra.mxu0 0.0
        %1396 = vmatprep.subr.mxu0 0.0
        %1397 = vmatpush1.msra.mxu0 0.0
        %1398 = vmatprep.subr.mxu0 0.0
        %1399 = vmatpush1.msra.mxu0 0.0
        %1400 = vmatprep.subr.mxu0 0.0
        %1401 = vmatpush1.msra.mxu0 0.0
        %1402 = vmatprep.subr.mxu0 0.0
        %1403 = vmatpush1.msra.mxu0 0.0
        %1404 = vmatprep.subr.mxu0 0.0
        %1405 = vmatpush1.msra.mxu0 0.0
        %1406 = vmatprep.mubr.f32.mxu0 0.0
        %1407 = vmatmul.mubr.f32.gmra.mrb[0].mxu0 %v985
        %v1408 = vpop.f32.mrb[0].mxu0
        %v1409 = vadd.f32 %v1338, %v1408
        %v1410 = vpop.f32.mrb[0].mxu0
        %v1411 = vadd.f32 %v1340, %v1410
        %1412 = vdwg.mxu0
        %1413 = vmatprep.subr.mxu0 %v266
        %1414 = vmatpush1.msra.mxu0 %v265
        %1415 = vmatprep.subr.mxu0 %v282
        %1416 = vmatpush1.msra.mxu0 %v281
        %1417 = vmatprep.subr.mxu0 %v298
        %1418 = vmatpush1.msra.mxu0 %v297
        %1419 = vmatprep.subr.mxu0 %v314
        %1420 = vmatpush1.msra.mxu0 %v313
        %1421 = vmatprep.subr.mxu0 %v330
        %1422 = vmatpush1.msra.mxu0 %v329
        %1423 = vmatprep.subr.mxu0 %v346
        %1424 = vmatpush1.msra.mxu0 %v345
        %1425 = vmatprep.subr.mxu0 %v362
        %1426 = vmatpush1.msra.mxu0 %v361
        %1427 = vmatprep.subr.mxu0 %v378
        %1428 = vmatpush1.msra.mxu0 %v377
        %1429 = vmatprep.subr.mxu0 %v394
        %1430 = vmatpush1.msra.mxu0 %v393
        %1431 = vmatprep.subr.mxu0 %v410
        %1432 = vmatpush1.msra.mxu0 %v409
        %1433 = vmatprep.subr.mxu0 %v426
        %1434 = vmatpush1.msra.mxu0 %v425
        %1435 = vmatprep.subr.mxu0 %v442
        %1436 = vmatpush1.msra.mxu0 %v441
        %1437 = vmatprep.subr.mxu0 %v458
        %1438 = vmatpush1.msra.mxu0 %v457
        %1439 = vmatprep.subr.mxu0 %v474
        %1440 = vmatpush1.msra.mxu0 %v473
        %1441 = vmatprep.subr.mxu0 %v490
        %1442 = vmatpush1.msra.mxu0 %v489
        %1443 = vmatprep.subr.mxu0 %v506
        %1444 = vmatpush1.msra.mxu0 %v505
        %1445 = vmatprep.subr.mxu0 %v522
        %1446 = vmatpush1.msra.mxu0 %v521
        %1447 = vmatprep.subr.mxu0 %v538
        %1448 = vmatpush1.msra.mxu0 %v537
        %1449 = vmatprep.subr.mxu0 %v554
        %1450 = vmatpush1.msra.mxu0 %v553
        %1451 = vmatprep.subr.mxu0 %v570
        %1452 = vmatpush1.msra.mxu0 %v569
        %1453 = vmatprep.subr.mxu0 %v586
        %1454 = vmatpush1.msra.mxu0 %v585
        %1455 = vmatprep.subr.mxu0 %v602
        %1456 = vmatpush1.msra.mxu0 %v601
        %1457 = vmatprep.subr.mxu0 %v618
        %1458 = vmatpush1.msra.mxu0 %v617
        %1459 = vmatprep.subr.mxu0 %v634
        %1460 = vmatpush1.msra.mxu0 %v633
        %1461 = vmatprep.subr.mxu0 %v650
        %1462 = vmatpush1.msra.mxu0 %v649
        %1463 = vmatprep.subr.mxu0 %v666
        %1464 = vmatpush1.msra.mxu0 %v665
        %1465 = vmatprep.subr.mxu0 %v682
        %1466 = vmatpush1.msra.mxu0 %v681
        %1467 = vmatprep.subr.mxu0 %v698
        %1468 = vmatpush1.msra.mxu0 %v697
        %1469 = vmatprep.subr.mxu0 %v714
        %1470 = vmatpush1.msra.mxu0 %v713
        %1471 = vmatprep.subr.mxu0 %v730
        %1472 = vmatpush1.msra.mxu0 %v729
        %1473 = vmatprep.subr.mxu0 %v746
        %1474 = vmatpush1.msra.mxu0 %v745
        %1475 = vmatprep.subr.mxu0 %v762
        %1476 = vmatpush1.msra.mxu0 %v761
        %1477 = vmatprep.mubr.f32.mxu0 %v257
        %1478 = vmatmul.mubr.f32.gmra.mrb[0].mxu0 %v256
        %v1479 = vpop.f32.mrb[0].mxu0
        %v1480 = vadd.f32 %v930, %v1479
        %v1481 = vpop.f32.mrb[0].mxu0
        %v1482 = vadd.f32 %v934, %v1481
        %1483 = vdwg.mxu0
        %1484 = vmatprep.subr.mxu0 %v778
        %1485 = vmatpush1.msra.mxu0 %v777
        %1486 = vmatprep.subr.mxu0 %v794
        %1487 = vmatpush1.msra.mxu0 %v793
        %1488 = vmatprep.subr.mxu0 %v810
        %1489 = vmatpush1.msra.mxu0 %v809
        %1490 = vmatprep.subr.mxu0 %v826
        %1491 = vmatpush1.msra.mxu0 %v825
        %1492 = vmatprep.subr.mxu0 %v842
        %1493 = vmatpush1.msra.mxu0 %v841
        %1494 = vmatprep.subr.mxu0 %v858
        %1495 = vmatpush1.msra.mxu0 %v857
        %1496 = vmatprep.subr.mxu0 %v874
        %1497 = vmatpush1.msra.mxu0 %v873
        %1498 = vmatprep.subr.mxu0 %v890
        %1499 = vmatpush1.msra.mxu0 %v889
        %1500 = vmatprep.subr.mxu0 0.0
        %1501 = vmatpush1.msra.mxu0 0.0
        %1502 = vmatprep.subr.mxu0 0.0
        %1503 = vmatpush1.msra.mxu0 0.0
        %1504 = vmatprep.subr.mxu0 0.0
        %1505 = vmatpush1.msra.mxu0 0.0
        %1506 = vmatprep.subr.mxu0 0.0
        %1507 = vmatpush1.msra.mxu0 0.0
        %1508 = vmatprep.subr.mxu0 0.0
        %1509 = vmatpush1.msra.mxu0 0.0
        %1510 = vmatprep.subr.mxu0 0.0
        %1511 = vmatpush1.msra.mxu0 0.0
        %1512 = vmatprep.subr.mxu0 0.0
        %1513 = vmatpush1.msra.mxu0 0.0
        %1514 = vmatprep.subr.mxu0 0.0
        %1515 = vmatpush1.msra.mxu0 0.0
        %1516 = vmatprep.subr.mxu0 0.0
        %1517 = vmatpush1.msra.mxu0 0.0
        %1518 = vmatprep.subr.mxu0 0.0
        %1519 = vmatpush1.msra.mxu0 0.0
        %1520 = vmatprep.subr.mxu0 0.0
        %1521 = vmatpush1.msra.mxu0 0.0
        %1522 = vmatprep.subr.mxu0 0.0
        %1523 = vmatpush1.msra.mxu0 0.0
        %1524 = vmatprep.subr.mxu0 0.0
        %1525 = vmatpush1.msra.mxu0 0.0
        %1526 = vmatprep.subr.mxu0 0.0
        %1527 = vmatpush1.msra.mxu0 0.0
        %1528 = vmatprep.subr.mxu0 0.0
        %1529 = vmatpush1.msra.mxu0 0.0
        %1530 = vmatprep.subr.mxu0 0.0
        %1531 = vmatpush1.msra.mxu0 0.0
        %1532 = vmatprep.subr.mxu0 0.0
        %1533 = vmatpush1.msra.mxu0 0.0
        %1534 = vmatprep.subr.mxu0 0.0
        %1535 = vmatpush1.msra.mxu0 0.0
        %1536 = vmatprep.subr.mxu0 0.0
        %1537 = vmatpush1.msra.mxu0 0.0
        %1538 = vmatprep.subr.mxu0 0.0
        %1539 = vmatpush1.msra.mxu0 0.0
        %1540 = vmatprep.subr.mxu0 0.0
        %1541 = vmatpush1.msra.mxu0 0.0
        %1542 = vmatprep.subr.mxu0 0.0
        %1543 = vmatpush1.msra.mxu0 0.0
        %1544 = vmatprep.subr.mxu0 0.0
        %1545 = vmatpush1.msra.mxu0 0.0
        %1546 = vmatprep.subr.mxu0 0.0
        %1547 = vmatpush1.msra.mxu0 0.0
        %1548 = vmatprep.mubr.f32.mxu0 0.0
        %1549 = vmatmul.mubr.f32.gmra.mrb[0].mxu0 %v985
        %v1550 = vpop.f32.mrb[0].mxu0
        %v1551 = vadd.f32 %v1480, %v1550
        %v1552 = vpop.f32.mrb[0].mxu0
        %v1553 = vadd.f32 %v1482, %v1552
        %1554 = vdwg.mxu0
        %1555 = vmatprep.subr.mxu0 %v268
        %1556 = vmatpush1.msra.mxu0 %v267
        %1557 = vmatprep.subr.mxu0 %v284
        %1558 = vmatpush1.msra.mxu0 %v283
        %1559 = vmatprep.subr.mxu0 %v300
        %1560 = vmatpush1.msra.mxu0 %v299
        %1561 = vmatprep.subr.mxu0 %v316
        %1562 = vmatpush1.msra.mxu0 %v315
        %1563 = vmatprep.subr.mxu0 %v332
        %1564 = vmatpush1.msra.mxu0 %v331
        %1565 = vmatprep.subr.mxu0 %v348
        %1566 = vmatpush1.msra.mxu0 %v347
        %1567 = vmatprep.subr.mxu0 %v364
        %1568 = vmatpush1.msra.mxu0 %v363
        %1569 = vmatprep.subr.mxu0 %v380
        %1570 = vmatpush1.msra.mxu0 %v379
        %1571 = vmatprep.subr.mxu0 %v396
        %1572 = vmatpush1.msra.mxu0 %v395
        %1573 = vmatprep.subr.mxu0 %v412
        %1574 = vmatpush1.msra.mxu0 %v411
        %1575 = vmatprep.subr.mxu0 %v428
        %1576 = vmatpush1.msra.mxu0 %v427
        %1577 = vmatprep.subr.mxu0 %v444
        %1578 = vmatpush1.msra.mxu0 %v443
        %1579 = vmatprep.subr.mxu0 %v460
        %1580 = vmatpush1.msra.mxu0 %v459
        %1581 = vmatprep.subr.mxu0 %v476
        %1582 = vmatpush1.msra.mxu0 %v475
        %1583 = vmatprep.subr.mxu0 %v492
        %1584 = vmatpush1.msra.mxu0 %v491
        %1585 = vmatprep.subr.mxu0 %v508
        %1586 = vmatpush1.msra.mxu0 %v507
        %1587 = vmatprep.subr.mxu0 %v524
        %1588 = vmatpush1.msra.mxu0 %v523
        %1589 = vmatprep.subr.mxu0 %v540
        %1590 = vmatpush1.msra.mxu0 %v539
        %1591 = vmatprep.subr.mxu0 %v556
        %1592 = vmatpush1.msra.mxu0 %v555
        %1593 = vmatprep.subr.mxu0 %v572
        %1594 = vmatpush1.msra.mxu0 %v571
        %1595 = vmatprep.subr.mxu0 %v588
        %1596 = vmatpush1.msra.mxu0 %v587
        %1597 = vmatprep.subr.mxu0 %v604
        %1598 = vmatpush1.msra.mxu0 %v603
        %1599 = vmatprep.subr.mxu0 %v620
        %1600 = vmatpush1.msra.mxu0 %v619
        %1601 = vmatprep.subr.mxu0 %v636
        %1602 = vmatpush1.msra.mxu0 %v635
        %1603 = vmatprep.subr.mxu0 %v652
        %1604 = vmatpush1.msra.mxu0 %v651
        %1605 = vmatprep.subr.mxu0 %v668
        %1606 = vmatpush1.msra.mxu0 %v667
        %1607 = vmatprep.subr.mxu0 %v684
        %1608 = vmatpush1.msra.mxu0 %v683
        %1609 = vmatprep.subr.mxu0 %v700
        %1610 = vmatpush1.msra.mxu0 %v699
        %1611 = vmatprep.subr.mxu0 %v716
        %1612 = vmatpush1.msra.mxu0 %v715
        %1613 = vmatprep.subr.mxu0 %v732
        %1614 = vmatpush1.msra.mxu0 %v731
        %1615 = vmatprep.subr.mxu0 %v748
        %1616 = vmatpush1.msra.mxu0 %v747
        %1617 = vmatprep.subr.mxu0 %v764
        %1618 = vmatpush1.msra.mxu0 %v763
        %1619 = vmatprep.mubr.f32.mxu0 %v257
        %1620 = vmatmul.mubr.f32.gmra.mrb[0].mxu0 %v256
        %v1621 = vpop.f32.mrb[0].mxu0
        %v1622 = vadd.f32 %v938, %v1621
        %v1623 = vpop.f32.mrb[0].mxu0
        %v1624 = vadd.f32 %v942, %v1623
        %1625 = vdwg.mxu0
        %1626 = vmatprep.subr.mxu0 %v780
        %1627 = vmatpush1.msra.mxu0 %v779
        %1628 = vmatprep.subr.mxu0 %v796
        %1629 = vmatpush1.msra.mxu0 %v795
        %1630 = vmatprep.subr.mxu0 %v812
        %1631 = vmatpush1.msra.mxu0 %v811
        %1632 = vmatprep.subr.mxu0 %v828
        %1633 = vmatpush1.msra.mxu0 %v827
        %1634 = vmatprep.subr.mxu0 %v844
        %1635 = vmatpush1.msra.mxu0 %v843
        %1636 = vmatprep.subr.mxu0 %v860
        %1637 = vmatpush1.msra.mxu0 %v859
        %1638 = vmatprep.subr.mxu0 %v876
        %1639 = vmatpush1.msra.mxu0 %v875
        %1640 = vmatprep.subr.mxu0 %v892
        %1641 = vmatpush1.msra.mxu0 %v891
        %1642 = vmatprep.subr.mxu0 0.0
        %1643 = vmatpush1.msra.mxu0 0.0
        %1644 = vmatprep.subr.mxu0 0.0
        %1645 = vmatpush1.msra.mxu0 0.0
        %1646 = vmatprep.subr.mxu0 0.0
        %1647 = vmatpush1.msra.mxu0 0.0
        %1648 = vmatprep.subr.mxu0 0.0
        %1649 = vmatpush1.msra.mxu0 0.0
        %1650 = vmatprep.subr.mxu0 0.0
        %1651 = vmatpush1.msra.mxu0 0.0
        %1652 = vmatprep.subr.mxu0 0.0
        %1653 = vmatpush1.msra.mxu0 0.0
        %1654 = vmatprep.subr.mxu0 0.0
        %1655 = vmatpush1.msra.mxu0 0.0
        %1656 = vmatprep.subr.mxu0 0.0
        %1657 = vmatpush1.msra.mxu0 0.0
        %1658 = vmatprep.subr.mxu0 0.0
        %1659 = vmatpush1.msra.mxu0 0.0
        %1660 = vmatprep.subr.mxu0 0.0
        %1661 = vmatpush1.msra.mxu0 0.0
        %1662 = vmatprep.subr.mxu0 0.0
        %1663 = vmatpush1.msra.mxu0 0.0
        %1664 = vmatprep.subr.mxu0 0.0
        %1665 = vmatpush1.msra.mxu0 0.0
        %1666 = vmatprep.subr.mxu0 0.0
        %1667 = vmatpush1.msra.mxu0 0.0
        %1668 = vmatprep.subr.mxu0 0.0
        %1669 = vmatpush1.msra.mxu0 0.0
        %1670 = vmatprep.subr.mxu0 0.0
        %1671 = vmatpush1.msra.mxu0 0.0
        %1672 = vmatprep.subr.mxu0 0.0
        %1673 = vmatpush1.msra.mxu0 0.0
        %1674 = vmatprep.subr.mxu0 0.0
        %1675 = vmatpush1.msra.mxu0 0.0
        %1676 = vmatprep.subr.mxu0 0.0
        %1677 = vmatpush1.msra.mxu0 0.0
        %1678 = vmatprep.subr.mxu0 0.0
        %1679 = vmatpush1.msra.mxu0 0.0
        %1680 = vmatprep.subr.mxu0 0.0
        %1681 = vmatpush1.msra.mxu0 0.0
        %1682 = vmatprep.subr.mxu0 0.0
        %1683 = vmatpush1.msra.mxu0 0.0
        %1684 = vmatprep.subr.mxu0 0.0
        %1685 = vmatpush1.msra.mxu0 0.0
        %1686 = vmatprep.subr.mxu0 0.0
        %1687 = vmatpush1.msra.mxu0 0.0
        %1688 = vmatprep.subr.mxu0 0.0
        %1689 = vmatpush1.msra.mxu0 0.0
        %1690 = vmatprep.mubr.f32.mxu0 0.0
        %1691 = vmatmul.mubr.f32.gmra.mrb[0].mxu0 %v985
        %v1692 = vpop.f32.mrb[0].mxu0
        %v1693 = vadd.f32 %v1622, %v1692
        %v1694 = vpop.f32.mrb[0].mxu0
        %v1695 = vadd.f32 %v1624, %v1694
        %1696 = vdwg.mxu0
        %1697 = vmatprep.subr.mxu0 %v270
        %1698 = vmatpush1.msra.mxu0 %v269
        %1699 = vmatprep.subr.mxu0 %v286
        %1700 = vmatpush1.msra.mxu0 %v285
        %1701 = vmatprep.subr.mxu0 %v302
        %1702 = vmatpush1.msra.mxu0 %v301
        %1703 = vmatprep.subr.mxu0 %v318
        %1704 = vmatpush1.msra.mxu0 %v317
        %1705 = vmatprep.subr.mxu0 %v334
        %1706 = vmatpush1.msra.mxu0 %v333
        %1707 = vmatprep.subr.mxu0 %v350
        %1708 = vmatpush1.msra.mxu0 %v349
        %1709 = vmatprep.subr.mxu0 %v366
        %1710 = vmatpush1.msra.mxu0 %v365
        %1711 = vmatprep.subr.mxu0 %v382
        %1712 = vmatpush1.msra.mxu0 %v381
        %1713 = vmatprep.subr.mxu0 %v398
        %1714 = vmatpush1.msra.mxu0 %v397
        %1715 = vmatprep.subr.mxu0 %v414
        %1716 = vmatpush1.msra.mxu0 %v413
        %1717 = vmatprep.subr.mxu0 %v430
        %1718 = vmatpush1.msra.mxu0 %v429
        %1719 = vmatprep.subr.mxu0 %v446
        %1720 = vmatpush1.msra.mxu0 %v445
        %1721 = vmatprep.subr.mxu0 %v462
        %1722 = vmatpush1.msra.mxu0 %v461
        %1723 = vmatprep.subr.mxu0 %v478
        %1724 = vmatpush1.msra.mxu0 %v477
        %1725 = vmatprep.subr.mxu0 %v494
        %1726 = vmatpush1.msra.mxu0 %v493
        %1727 = vmatprep.subr.mxu0 %v510
        %1728 = vmatpush1.msra.mxu0 %v509
        %1729 = vmatprep.subr.mxu0 %v526
        %1730 = vmatpush1.msra.mxu0 %v525
        %1731 = vmatprep.subr.mxu0 %v542
        %1732 = vmatpush1.msra.mxu0 %v541
        %1733 = vmatprep.subr.mxu0 %v558
        %1734 = vmatpush1.msra.mxu0 %v557
        %1735 = vmatprep.subr.mxu0 %v574
        %1736 = vmatpush1.msra.mxu0 %v573
        %1737 = vmatprep.subr.mxu0 %v590
        %1738 = vmatpush1.msra.mxu0 %v589
        %1739 = vmatprep.subr.mxu0 %v606
        %1740 = vmatpush1.msra.mxu0 %v605
        %1741 = vmatprep.subr.mxu0 %v622
        %1742 = vmatpush1.msra.mxu0 %v621
        %1743 = vmatprep.subr.mxu0 %v638
        %1744 = vmatpush1.msra.mxu0 %v637
        %1745 = vmatprep.subr.mxu0 %v654
        %1746 = vmatpush1.msra.mxu0 %v653
        %1747 = vmatprep.subr.mxu0 %v670
        %1748 = vmatpush1.msra.mxu0 %v669
        %1749 = vmatprep.subr.mxu0 %v686
        %1750 = vmatpush1.msra.mxu0 %v685
        %1751 = vmatprep.subr.mxu0 %v702
        %1752 = vmatpush1.msra.mxu0 %v701
        %1753 = vmatprep.subr.mxu0 %v718
        %1754 = vmatpush1.msra.mxu0 %v717
        %1755 = vmatprep.subr.mxu0 %v734
        %1756 = vmatpush1.msra.mxu0 %v733
        %1757 = vmatprep.subr.mxu0 %v750
        %1758 = vmatpush1.msra.mxu0 %v749
        %1759 = vmatprep.subr.mxu0 %v766
        %1760 = vmatpush1.msra.mxu0 %v765
        %1761 = vmatprep.mubr.f32.mxu0 %v257
        %1762 = vmatmul.mubr.f32.gmra.mrb[0].mxu0 %v256
        %v1763 = vpop.f32.mrb[0].mxu0
        %v1764 = vadd.f32 %v946, %v1763
        %v1765 = vpop.f32.mrb[0].mxu0
        %v1766 = vadd.f32 %v950, %v1765
        %1767 = vdwg.mxu0
        %1768 = vmatprep.subr.mxu0 %v782
        %1769 = vmatpush1.msra.mxu0 %v781
        %1770 = vmatprep.subr.mxu0 %v798
        %1771 = vmatpush1.msra.mxu0 %v797
        %1772 = vmatprep.subr.mxu0 %v814
        %1773 = vmatpush1.msra.mxu0 %v813
        %1774 = vmatprep.subr.mxu0 %v830
        %1775 = vmatpush1.msra.mxu0 %v829
        %1776 = vmatprep.subr.mxu0 %v846
        %1777 = vmatpush1.msra.mxu0 %v845
        %1778 = vmatprep.subr.mxu0 %v862
        %1779 = vmatpush1.msra.mxu0 %v861
        %1780 = vmatprep.subr.mxu0 %v878
        %1781 = vmatpush1.msra.mxu0 %v877
        %1782 = vmatprep.subr.mxu0 %v894
        %1783 = vmatpush1.msra.mxu0 %v893
        %1784 = vmatprep.subr.mxu0 0.0
        %1785 = vmatpush1.msra.mxu0 0.0
        %1786 = vmatprep.subr.mxu0 0.0
        %1787 = vmatpush1.msra.mxu0 0.0
        %1788 = vmatprep.subr.mxu0 0.0
        %1789 = vmatpush1.msra.mxu0 0.0
        %1790 = vmatprep.subr.mxu0 0.0
        %1791 = vmatpush1.msra.mxu0 0.0
        %1792 = vmatprep.subr.mxu0 0.0
        %1793 = vmatpush1.msra.mxu0 0.0
        %1794 = vmatprep.subr.mxu0 0.0
        %1795 = vmatpush1.msra.mxu0 0.0
        %1796 = vmatprep.subr.mxu0 0.0
        %1797 = vmatpush1.msra.mxu0 0.0
        %1798 = vmatprep.subr.mxu0 0.0
        %1799 = vmatpush1.msra.mxu0 0.0
        %1800 = vmatprep.subr.mxu0 0.0
        %1801 = vmatpush1.msra.mxu0 0.0
        %1802 = vmatprep.subr.mxu0 0.0
        %1803 = vmatpush1.msra.mxu0 0.0
        %1804 = vmatprep.subr.mxu0 0.0
        %1805 = vmatpush1.msra.mxu0 0.0
        %1806 = vmatprep.subr.mxu0 0.0
        %1807 = vmatpush1.msra.mxu0 0.0
        %1808 = vmatprep.subr.mxu0 0.0
        %1809 = vmatpush1.msra.mxu0 0.0
        %1810 = vmatprep.subr.mxu0 0.0
        %1811 = vmatpush1.msra.mxu0 0.0
        %1812 = vmatprep.subr.mxu0 0.0
        %1813 = vmatpush1.msra.mxu0 0.0
        %1814 = vmatprep.subr.mxu0 0.0
        %1815 = vmatpush1.msra.mxu0 0.0
        %1816 = vmatprep.subr.mxu0 0.0
        %1817 = vmatpush1.msra.mxu0 0.0
        %1818 = vmatprep.subr.mxu0 0.0
        %1819 = vmatpush1.msra.mxu0 0.0
        %1820 = vmatprep.subr.mxu0 0.0
        %1821 = vmatpush1.msra.mxu0 0.0
        %1822 = vmatprep.subr.mxu0 0.0
        %1823 = vmatpush1.msra.mxu0 0.0
        %1824 = vmatprep.subr.mxu0 0.0
        %1825 = vmatpush1.msra.mxu0 0.0
        %1826 = vmatprep.subr.mxu0 0.0
        %1827 = vmatpush1.msra.mxu0 0.0
        %1828 = vmatprep.subr.mxu0 0.0
        %1829 = vmatpush1.msra.mxu0 0.0
        %1830 = vmatprep.subr.mxu0 0.0
        %1831 = vmatpush1.msra.mxu0 0.0
        %1832 = vmatprep.mubr.f32.mxu0 0.0
        %1833 = vmatmul.mubr.f32.gmra.mrb[0].mxu0 %v985
        %v1834 = vpop.f32.mrb[0].mxu0
        %v1835 = vadd.f32 %v1764, %v1834
        %v1836 = vpop.f32.mrb[0].mxu0
        %v1837 = vadd.f32 %v1766, %v1836
        %1838 = vdwg.mxu0
        %1839 = vmatprep.subr.mxu0 %v272
        %1840 = vmatpush1.msra.mxu0 %v271
        %1841 = vmatprep.subr.mxu0 %v288
        %1842 = vmatpush1.msra.mxu0 %v287
        %1843 = vmatprep.subr.mxu0 %v304
        %1844 = vmatpush1.msra.mxu0 %v303
        %1845 = vmatprep.subr.mxu0 %v320
        %1846 = vmatpush1.msra.mxu0 %v319
        %1847 = vmatprep.subr.mxu0 %v336
        %1848 = vmatpush1.msra.mxu0 %v335
        %1849 = vmatprep.subr.mxu0 %v352
        %1850 = vmatpush1.msra.mxu0 %v351
        %1851 = vmatprep.subr.mxu0 %v368
        %1852 = vmatpush1.msra.mxu0 %v367
        %1853 = vmatprep.subr.mxu0 %v384
        %1854 = vmatpush1.msra.mxu0 %v383
        %1855 = vmatprep.subr.mxu0 %v400
        %1856 = vmatpush1.msra.mxu0 %v399
        %1857 = vmatprep.subr.mxu0 %v416
        %1858 = vmatpush1.msra.mxu0 %v415
        %1859 = vmatprep.subr.mxu0 %v432
        %1860 = vmatpush1.msra.mxu0 %v431
        %1861 = vmatprep.subr.mxu0 %v448
        %1862 = vmatpush1.msra.mxu0 %v447
        %1863 = vmatprep.subr.mxu0 %v464
        %1864 = vmatpush1.msra.mxu0 %v463
        %1865 = vmatprep.subr.mxu0 %v480
        %1866 = vmatpush1.msra.mxu0 %v479
        %1867 = vmatprep.subr.mxu0 %v496
        %1868 = vmatpush1.msra.mxu0 %v495
        %1869 = vmatprep.subr.mxu0 %v512
        %1870 = vmatpush1.msra.mxu0 %v511
        %1871 = vmatprep.subr.mxu0 %v528
        %1872 = vmatpush1.msra.mxu0 %v527
        %1873 = vmatprep.subr.mxu0 %v544
        %1874 = vmatpush1.msra.mxu0 %v543
        %1875 = vmatprep.subr.mxu0 %v560
        %1876 = vmatpush1.msra.mxu0 %v559
        %1877 = vmatprep.subr.mxu0 %v576
        %1878 = vmatpush1.msra.mxu0 %v575
        %1879 = vmatprep.subr.mxu0 %v592
        %1880 = vmatpush1.msra.mxu0 %v591
        %1881 = vmatprep.subr.mxu0 %v608
        %1882 = vmatpush1.msra.mxu0 %v607
        %1883 = vmatprep.subr.mxu0 %v624
        %1884 = vmatpush1.msra.mxu0 %v623
        %1885 = vmatprep.subr.mxu0 %v640
        %1886 = vmatpush1.msra.mxu0 %v639
        %1887 = vmatprep.subr.mxu0 %v656
        %1888 = vmatpush1.msra.mxu0 %v655
        %1889 = vmatprep.subr.mxu0 %v672
        %1890 = vmatpush1.msra.mxu0 %v671
        %1891 = vmatprep.subr.mxu0 %v688
        %1892 = vmatpush1.msra.mxu0 %v687
        %1893 = vmatprep.subr.mxu0 %v704
        %1894 = vmatpush1.msra.mxu0 %v703
        %1895 = vmatprep.subr.mxu0 %v720
        %1896 = vmatpush1.msra.mxu0 %v719
        %1897 = vmatprep.subr.mxu0 %v736
        %1898 = vmatpush1.msra.mxu0 %v735
        %1899 = vmatprep.subr.mxu0 %v752
        %1900 = vmatpush1.msra.mxu0 %v751
        %1901 = vmatprep.subr.mxu0 %v768
        %1902 = vmatpush1.msra.mxu0 %v767
        %1903 = vmatprep.mubr.f32.mxu0 %v257
        %1904 = vmatmul.mubr.f32.gmra.mrb[0].mxu0 %v256
        %v1905 = vpop.f32.mrb[0].mxu0
        %v1906 = vadd.f32 %v954, %v1905
        %v1907 = vpop.f32.mrb[0].mxu0
        %v1908 = vadd.f32 %v958, %v1907
        %1909 = vdwg.mxu0
        %1910 = vmatprep.subr.mxu0 %v784
        %1911 = vmatpush1.msra.mxu0 %v783
        %1912 = vmatprep.subr.mxu0 %v800
        %1913 = vmatpush1.msra.mxu0 %v799
        %1914 = vmatprep.subr.mxu0 %v816
        %1915 = vmatpush1.msra.mxu0 %v815
        %1916 = vmatprep.subr.mxu0 %v832
        %1917 = vmatpush1.msra.mxu0 %v831
        %1918 = vmatprep.subr.mxu0 %v848
        %1919 = vmatpush1.msra.mxu0 %v847
        %1920 = vmatprep.subr.mxu0 %v864
        %1921 = vmatpush1.msra.mxu0 %v863
        %1922 = vmatprep.subr.mxu0 %v880
        %1923 = vmatpush1.msra.mxu0 %v879
        %1924 = vmatprep.subr.mxu0 %v896
        %1925 = vmatpush1.msra.mxu0 %v895
        %1926 = vmatprep.subr.mxu0 0.0
        %1927 = vmatpush1.msra.mxu0 0.0
        %1928 = vmatprep.subr.mxu0 0.0
        %1929 = vmatpush1.msra.mxu0 0.0
        %1930 = vmatprep.subr.mxu0 0.0
        %1931 = vmatpush1.msra.mxu0 0.0
        %1932 = vmatprep.subr.mxu0 0.0
        %1933 = vmatpush1.msra.mxu0 0.0
        %1934 = vmatprep.subr.mxu0 0.0
        %1935 = vmatpush1.msra.mxu0 0.0
        %1936 = vmatprep.subr.mxu0 0.0
        %1937 = vmatpush1.msra.mxu0 0.0
        %1938 = vmatprep.subr.mxu0 0.0
        %1939 = vmatpush1.msra.mxu0 0.0
        %1940 = vmatprep.subr.mxu0 0.0
        %1941 = vmatpush1.msra.mxu0 0.0
        %1942 = vmatprep.subr.mxu0 0.0
        %1943 = vmatpush1.msra.mxu0 0.0
        %1944 = vmatprep.subr.mxu0 0.0
        %1945 = vmatpush1.msra.mxu0 0.0
        %1946 = vmatprep.subr.mxu0 0.0
        %1947 = vmatpush1.msra.mxu0 0.0
        %1948 = vmatprep.subr.mxu0 0.0
        %1949 = vmatpush1.msra.mxu0 0.0
        %1950 = vmatprep.subr.mxu0 0.0
        %1951 = vmatpush1.msra.mxu0 0.0
        %1952 = vmatprep.subr.mxu0 0.0
        %1953 = vmatpush1.msra.mxu0 0.0
        %1954 = vmatprep.subr.mxu0 0.0
        %1955 = vmatpush1.msra.mxu0 0.0
        %1956 = vmatprep.subr.mxu0 0.0
        %1957 = vmatpush1.msra.mxu0 0.0
        %1958 = vmatprep.subr.mxu0 0.0
        %1959 = vmatpush1.msra.mxu0 0.0
        %1960 = vmatprep.subr.mxu0 0.0
        %1961 = vmatpush1.msra.mxu0 0.0
        %1962 = vmatprep.subr.mxu0 0.0
        %1963 = vmatpush1.msra.mxu0 0.0
        %1964 = vmatprep.subr.mxu0 0.0
        %1965 = vmatpush1.msra.mxu0 0.0
        %1966 = vmatprep.subr.mxu0 0.0
        %1967 = vmatpush1.msra.mxu0 0.0
        %1968 = vmatprep.subr.mxu0 0.0
        %1969 = vmatpush1.msra.mxu0 0.0
        %1970 = vmatprep.subr.mxu0 0.0
        %1971 = vmatpush1.msra.mxu0 0.0
        %1972 = vmatprep.subr.mxu0 0.0
        %1973 = vmatpush1.msra.mxu0 0.0
        %1974 = vmatprep.mubr.f32.mxu0 0.0
        %1975 = vmatmul.mubr.f32.gmra.mrb[0].mxu0 %v985
        %v1976 = vpop.f32.mrb[0].mxu0
        %v1977 = vadd.f32 %v1906, %v1976
        %v1978 = vpop.f32.mrb[0].mxu0
        %v1979 = vadd.f32 %v1908, %v1978
        %1980 = vdwg.mxu0
        %1981 = vmatprep.subr.mxu0 %v274
        %1982 = vmatpush1.msra.mxu0 %v273
        %1983 = vmatprep.subr.mxu0 %v290
        %1984 = vmatpush1.msra.mxu0 %v289
        %1985 = vmatprep.subr.mxu0 %v306
        %1986 = vmatpush1.msra.mxu0 %v305
        %1987 = vmatprep.subr.mxu0 %v322
        %1988 = vmatpush1.msra.mxu0 %v321
        %1989 = vmatprep.subr.mxu0 %v338
        %1990 = vmatpush1.msra.mxu0 %v337
        %1991 = vmatprep.subr.mxu0 %v354
        %1992 = vmatpush1.msra.mxu0 %v353
        %1993 = vmatprep.subr.mxu0 %v370
        %1994 = vmatpush1.msra.mxu0 %v369
        %1995 = vmatprep.subr.mxu0 %v386
        %1996 = vmatpush1.msra.mxu0 %v385
        %1997 = vmatprep.subr.mxu0 %v402
        %1998 = vmatpush1.msra.mxu0 %v401
        %1999 = vmatprep.subr.mxu0 %v418
        %2000 = vmatpush1.msra.mxu0 %v417
        %2001 = vmatprep.subr.mxu0 %v434
        %2002 = vmatpush1.msra.mxu0 %v433
        %2003 = vmatprep.subr.mxu0 %v450
        %2004 = vmatpush1.msra.mxu0 %v449
        %2005 = vmatprep.subr.mxu0 %v466
        %2006 = vmatpush1.msra.mxu0 %v465
        %2007 = vmatprep.subr.mxu0 %v482
        %2008 = vmatpush1.msra.mxu0 %v481
        %2009 = vmatprep.subr.mxu0 %v498
        %2010 = vmatpush1.msra.mxu0 %v497
        %2011 = vmatprep.subr.mxu0 %v514
        %2012 = vmatpush1.msra.mxu0 %v513
        %2013 = vmatprep.subr.mxu0 %v530
        %2014 = vmatpush1.msra.mxu0 %v529
        %2015 = vmatprep.subr.mxu0 %v546
        %2016 = vmatpush1.msra.mxu0 %v545
        %2017 = vmatprep.subr.mxu0 %v562
        %2018 = vmatpush1.msra.mxu0 %v561
        %2019 = vmatprep.subr.mxu0 %v578
        %2020 = vmatpush1.msra.mxu0 %v577
        %2021 = vmatprep.subr.mxu0 %v594
        %2022 = vmatpush1.msra.mxu0 %v593
        %2023 = vmatprep.subr.mxu0 %v610
        %2024 = vmatpush1.msra.mxu0 %v609
        %2025 = vmatprep.subr.mxu0 %v626
        %2026 = vmatpush1.msra.mxu0 %v625
        %2027 = vmatprep.subr.mxu0 %v642
        %2028 = vmatpush1.msra.mxu0 %v641
        %2029 = vmatprep.subr.mxu0 %v658
        %2030 = vmatpush1.msra.mxu0 %v657
        %2031 = vmatprep.subr.mxu0 %v674
        %2032 = vmatpush1.msra.mxu0 %v673
        %2033 = vmatprep.subr.mxu0 %v690
        %2034 = vmatpush1.msra.mxu0 %v689
        %2035 = vmatprep.subr.mxu0 %v706
        %2036 = vmatpush1.msra.mxu0 %v705
        %2037 = vmatprep.subr.mxu0 %v722
        %2038 = vmatpush1.msra.mxu0 %v721
        %2039 = vmatprep.subr.mxu0 %v738
        %2040 = vmatpush1.msra.mxu0 %v737
        %2041 = vmatprep.subr.mxu0 %v754
        %2042 = vmatpush1.msra.mxu0 %v753
        %2043 = vmatprep.subr.mxu0 %v770
        %2044 = vmatpush1.msra.mxu0 %v769
        %2045 = vmatprep.mubr.f32.mxu0 %v257
        %2046 = vmatmul.mubr.f32.gmra.mrb[0].mxu0 %v256
        %v2047 = vpop.f32.mrb[0].mxu0
        %v2048 = vadd.f32 %v962, %v2047
        %v2049 = vpop.f32.mrb[0].mxu0
        %v2050 = vadd.f32 %v966, %v2049
        %2051 = vdwg.mxu0
        %2052 = vmatprep.subr.mxu0 %v786
        %2053 = vmatpush1.msra.mxu0 %v785
        %2054 = vmatprep.subr.mxu0 %v802
        %2055 = vmatpush1.msra.mxu0 %v801
        %2056 = vmatprep.subr.mxu0 %v818
        %2057 = vmatpush1.msra.mxu0 %v817
        %2058 = vmatprep.subr.mxu0 %v834
        %2059 = vmatpush1.msra.mxu0 %v833
        %2060 = vmatprep.subr.mxu0 %v850
        %2061 = vmatpush1.msra.mxu0 %v849
        %2062 = vmatprep.subr.mxu0 %v866
        %2063 = vmatpush1.msra.mxu0 %v865
        %2064 = vmatprep.subr.mxu0 %v882
        %2065 = vmatpush1.msra.mxu0 %v881
        %2066 = vmatprep.subr.mxu0 %v898
        %2067 = vmatpush1.msra.mxu0 %v897
        %2068 = vmatprep.subr.mxu0 0.0
        %2069 = vmatpush1.msra.mxu0 0.0
        %2070 = vmatprep.subr.mxu0 0.0
        %2071 = vmatpush1.msra.mxu0 0.0
        %2072 = vmatprep.subr.mxu0 0.0
        %2073 = vmatpush1.msra.mxu0 0.0
        %2074 = vmatprep.subr.mxu0 0.0
        %2075 = vmatpush1.msra.mxu0 0.0
        %2076 = vmatprep.subr.mxu0 0.0
        %2077 = vmatpush1.msra.mxu0 0.0
        %2078 = vmatprep.subr.mxu0 0.0
        %2079 = vmatpush1.msra.mxu0 0.0
        %2080 = vmatprep.subr.mxu0 0.0
        %2081 = vmatpush1.msra.mxu0 0.0
        %2082 = vmatprep.subr.mxu0 0.0
        %2083 = vmatpush1.msra.mxu0 0.0
        %2084 = vmatprep.subr.mxu0 0.0
        %2085 = vmatpush1.msra.mxu0 0.0
        %2086 = vmatprep.subr.mxu0 0.0
        %2087 = vmatpush1.msra.mxu0 0.0
        %2088 = vmatprep.subr.mxu0 0.0
        %2089 = vmatpush1.msra.mxu0 0.0
        %2090 = vmatprep.subr.mxu0 0.0
        %2091 = vmatpush1.msra.mxu0 0.0
        %2092 = vmatprep.subr.mxu0 0.0
        %2093 = vmatpush1.msra.mxu0 0.0
        %2094 = vmatprep.subr.mxu0 0.0
        %2095 = vmatpush1.msra.mxu0 0.0
        %2096 = vmatprep.subr.mxu0 0.0
        %2097 = vmatpush1.msra.mxu0 0.0
        %2098 = vmatprep.subr.mxu0 0.0
        %2099 = vmatpush1.msra.mxu0 0.0
        %2100 = vmatprep.subr.mxu0 0.0
        %2101 = vmatpush1.msra.mxu0 0.0
        %2102 = vmatprep.subr.mxu0 0.0
        %2103 = vmatpush1.msra.mxu0 0.0
        %2104 = vmatprep.subr.mxu0 0.0
        %2105 = vmatpush1.msra.mxu0 0.0
        %2106 = vmatprep.subr.mxu0 0.0
        %2107 = vmatpush1.msra.mxu0 0.0
        %2108 = vmatprep.subr.mxu0 0.0
        %2109 = vmatpush1.msra.mxu0 0.0
        %2110 = vmatprep.subr.mxu0 0.0
        %2111 = vmatpush1.msra.mxu0 0.0
        %2112 = vmatprep.subr.mxu0 0.0
        %2113 = vmatpush1.msra.mxu0 0.0
        %2114 = vmatprep.subr.mxu0 0.0
        %2115 = vmatpush1.msra.mxu0 0.0
        %2116 = vmatprep.mubr.f32.mxu0 0.0
        %2117 = vmatmul.mubr.f32.gmra.mrb[0].mxu0 %v985
        %v2118 = vpop.f32.mrb[0].mxu0
        %v2119 = vadd.f32 %v2048, %v2118
        %v2120 = vpop.f32.mrb[0].mxu0
        %v2121 = vadd.f32 %v2050, %v2120
        %2122 = vdwg.mxu0
        %v2123 = vmax.f32 %v1125, 0.0
        %v2124 = vmax.f32 %v1127, 0.0
        %v2125 = vmax.f32 %v1267, 0.0
        %v2126 = vmax.f32 %v1269, 0.0
        %v2127 = vmax.f32 %v1409, 0.0
        %v2128 = vmax.f32 %v1411, 0.0
        %v2129 = vmax.f32 %v1551, 0.0
        %v2130 = vmax.f32 %v1553, 0.0
        %v2131 = vmax.f32 %v1693, 0.0
        %v2132 = vmax.f32 %v1695, 0.0
        %v2133 = vmax.f32 %v1835, 0.0
        %v2134 = vmax.f32 %v1837, 0.0
        %v2135 = vmax.f32 %v1977, 0.0
        %v2136 = vmax.f32 %v1979, 0.0
        %v2137 = vmax.f32 %v2119, 0.0
        %v2138 = vmax.f32 %v2121, 0.0
        %v2139 = vmax.f32 %v2123, %v2131
        %v2140 = vmax.f32 %v2124, %v2132
        %v2141 = vmax.f32 %v2125, %v2133
        %v2142 = vmax.f32 %v2126, %v2134
        %v2143 = vmax.f32 %v2127, %v2135
        %v2144 = vmax.f32 %v2128, %v2136
        %v2145 = vmax.f32 %v2129, %v2137
        %v2146 = vmax.f32 %v2130, %v2138
        %v2147 = vmax.f32 %v2139, %v2143
        %v2148 = vmax.f32 %v2140, %v2144
        %v2149 = vmax.f32 %v2141, %v2145
        %v2150 = vmax.f32 %v2142, %v2146
        %v2151 = vmax.f32 %v2147, %v2149
        %v2152 = vmax.f32 %v2148, %v2150
        %v2153 = vmax.f32 %v2151, %v2152
        %2155 = vrot.lane.b32.xlu0 %v2153, 64
        %v2156 = vpop.permute.xlu0 %2155
        %v2158 = vmax.f32 %v2153, %v2156
        %v2159 = vld [vmem:[#allocation8] sm:$0xff]
        %v2160 = vld [vmem:[#allocation8 + $0x8] sm:$0xff]
        %v2161 = vld [vmem:[#allocation8 + $0x10] sm:$0xff]
        %v2162 = vld [vmem:[#allocation8 + $0x18] sm:$0xff]
        %v2163 = vld [vmem:[#allocation8 + $0x20] sm:$0xff]
        %v2164 = vld [vmem:[#allocation8 + $0x28] sm:$0xff]
        %v2165 = vld [vmem:[#allocation8 + $0x30] sm:$0xff]
        %v2166 = vld [vmem:[#allocation8 + $0x38] sm:$0xff]
        %v2167 = vld [vmem:[#allocation8 + $0x40] sm:$0xff]
        %v2168 = vld [vmem:[#allocation8 + $0x48] sm:$0xff]
        %v2169 = vld [vmem:[#allocation8 + $0x50] sm:$0xff]
        %v2170 = vld [vmem:[#allocation8 + $0x58] sm:$0xff]
        %v2171 = vld [vmem:[#allocation8 + $0x60] sm:$0xff]
        %v2172 = vld [vmem:[#allocation8 + $0x68] sm:$0xff]
        %v2173 = vld [vmem:[#allocation8 + $0x70] sm:$0xff]
        %v2174 = vld [vmem:[#allocation8 + $0x78] sm:$0xff]
        %v2175 = vld [vmem:[#allocation8 + $0x80] sm:$0xff]
        %v2176 = vld [vmem:[#allocation8 + $0x88] sm:$0xff]
        %v2177 = vld [vmem:[#allocation8 + $0x90] sm:$0xff]
        %v2178 = vld [vmem:[#allocation8 + $0x98] sm:$0xff]
        %v2179 = vld [vmem:[#allocation8 + $0xa0] sm:$0xff]
        %v2180 = vld [vmem:[#allocation8 + $0xa8] sm:$0xff]
        %v2181 = vld [vmem:[#allocation8 + $0xb0] sm:$0xff]
        %v2182 = vld [vmem:[#allocation8 + $0xb8] sm:$0xff]
        %v2183 = vld [vmem:[#allocation8 + $0xc0] sm:$0xff]
        %v2184 = vld [vmem:[#allocation8 + $0xc8] sm:$0xff]
        %v2185 = vld [vmem:[#allocation8 + $0xd0] sm:$0xff]
        %v2186 = vld [vmem:[#allocation8 + $0xd8] sm:$0xff]
        %v2187 = vld [vmem:[#allocation8 + $0xe0] sm:$0xff]
        %v2188 = vld [vmem:[#allocation8 + $0xe8] sm:$0xff]
        %v2189 = vld [vmem:[#allocation8 + $0xf0] sm:$0xff]
        %v2190 = vld [vmem:[#allocation8 + $0xf8] sm:$0xff]
        %v2191 = vld [vmem:[#allocation8 + $0x100] sm:$0xff]
        %v2192 = vld [vmem:[#allocation8 + $0x108] sm:$0xff]
        %v2193 = vld [vmem:[#allocation8 + $0x110] sm:$0xff]
        %v2194 = vld [vmem:[#allocation8 + $0x118] sm:$0xff]
        %v2195 = vld [vmem:[#allocation8 + $0x120] sm:$0xff]
        %v2196 = vld [vmem:[#allocation8 + $0x128] sm:$0xff]
        %v2197 = vld [vmem:[#allocation8 + $0x130] sm:$0xff]
        %v2198 = vld [vmem:[#allocation8 + $0x138] sm:$0xff]
        %v2199 = vld [vmem:[#allocation8 + $0x140] sm:$0xff]
        %v2200 = vld [vmem:[#allocation8 + $0x148] sm:$0xff]
        %v2201 = vld [vmem:[#allocation8 + $0x150] sm:$0xff]
        %v2202 = vld [vmem:[#allocation8 + $0x158] sm:$0xff]
        %v2203 = vld [vmem:[#allocation8 + $0x160] sm:$0xff]
        %v2204 = vld [vmem:[#allocation8 + $0x168] sm:$0xff]
        %v2205 = vld [vmem:[#allocation8 + $0x170] sm:$0xff]
        %v2206 = vld [vmem:[#allocation8 + $0x178] sm:$0xff]
        %v2207 = vld [vmem:[#allocation8 + $0x180] sm:$0xff]
        %v2208 = vld [vmem:[#allocation8 + $0x188] sm:$0xff]
        %v2209 = vld [vmem:[#allocation8 + $0x190] sm:$0xff]
        %v2210 = vld [vmem:[#allocation8 + $0x198] sm:$0xff]
        %v2211 = vld [vmem:[#allocation8 + $0x1a0] sm:$0xff]
        %v2212 = vld [vmem:[#allocation8 + $0x1a8] sm:$0xff]
        %v2213 = vld [vmem:[#allocation8 + $0x1b0] sm:$0xff]
        %v2214 = vld [vmem:[#allocation8 + $0x1b8] sm:$0xff]
        %v2215 = vld [vmem:[#allocation8 + $0x1c0] sm:$0xff]
        %v2216 = vld [vmem:[#allocation8 + $0x1c8] sm:$0xff]
        %v2217 = vld [vmem:[#allocation8 + $0x1d0] sm:$0xff]
        %v2218 = vld [vmem:[#allocation8 + $0x1d8] sm:$0xff]
        %v2219 = vld [vmem:[#allocation8 + $0x1e0] sm:$0xff]
        %v2220 = vld [vmem:[#allocation8 + $0x1e8] sm:$0xff]
        %v2221 = vld [vmem:[#allocation8 + $0x1f0] sm:$0xff]
        %v2222 = vld [vmem:[#allocation8 + $0x1f8] sm:$0xff]
        %v2223 = vld [vmem:[#allocation8 + $0x200] sm:$0xff]
        %v2224 = vld [vmem:[#allocation8 + $0x208] sm:$0xff]
        %v2225 = vld [vmem:[#allocation8 + $0x210] sm:$0xff]
        %v2226 = vld [vmem:[#allocation8 + $0x218] sm:$0xff]
        %v2227 = vld [vmem:[#allocation8 + $0x220] sm:$0xff]
        %v2228 = vld [vmem:[#allocation8 + $0x228] sm:$0xff]
        %v2229 = vld [vmem:[#allocation8 + $0x230] sm:$0xff]
        %v2230 = vld [vmem:[#allocation8 + $0x238] sm:$0xff]
        %v2231 = vld [vmem:[#allocation8 + $0x240] sm:$0xff]
        %v2232 = vld [vmem:[#allocation8 + $0x248] sm:$0xff]
        %v2233 = vld [vmem:[#allocation8 + $0x250] sm:$0xff]
        %v2234 = vld [vmem:[#allocation8 + $0x258] sm:$0xff]
        %v2235 = vld [vmem:[#allocation8 + $0x260] sm:$0xff]
        %v2236 = vld [vmem:[#allocation8 + $0x268] sm:$0xff]
        %v2237 = vld [vmem:[#allocation8 + $0x270] sm:$0xff]
        %v2238 = vld [vmem:[#allocation8 + $0x278] sm:$0xff]
        %v2239 = vld [vmem:[#allocation8 + $0x280] sm:$0xff]
        %v2240 = vld [vmem:[#allocation8 + $0x288] sm:$0xff]
        %v2241 = vld [vmem:[#allocation8 + $0x290] sm:$0xff]
        %v2242 = vld [vmem:[#allocation8 + $0x298] sm:$0xff]
        %v2243 = vld [vmem:[#allocation8 + $0x2a0] sm:$0xff]
        %v2244 = vld [vmem:[#allocation8 + $0x2a8] sm:$0xff]
        %v2245 = vld [vmem:[#allocation8 + $0x2b0] sm:$0xff]
        %v2246 = vld [vmem:[#allocation8 + $0x2b8] sm:$0xff]
        %v2247 = vld [vmem:[#allocation8 + $0x2c0] sm:$0xff]
        %v2248 = vld [vmem:[#allocation8 + $0x2c8] sm:$0xff]
        %v2249 = vld [vmem:[#allocation8 + $0x2d0] sm:$0xff]
        %v2250 = vld [vmem:[#allocation8 + $0x2d8] sm:$0xff]
        %v2251 = vld [vmem:[#allocation8 + $0x2e0] sm:$0xff]
        %v2252 = vld [vmem:[#allocation8 + $0x2e8] sm:$0xff]
        %v2253 = vld [vmem:[#allocation8 + $0x2f0] sm:$0xff]
        %v2254 = vld [vmem:[#allocation8 + $0x2f8] sm:$0xff]
        %v2255 = vld [vmem:[#allocation8 + $0x300] sm:$0xff]
        %v2256 = vld [vmem:[#allocation8 + $0x308] sm:$0xff]
        %v2257 = vld [vmem:[#allocation8 + $0x310] sm:$0xff]
        %v2258 = vld [vmem:[#allocation8 + $0x318] sm:$0xff]
        %v2259 = vld [vmem:[#allocation8 + $0x320] sm:$0xff]
        %v2260 = vld [vmem:[#allocation8 + $0x328] sm:$0xff]
        %v2261 = vld [vmem:[#allocation8 + $0x330] sm:$0xff]
        %v2262 = vld [vmem:[#allocation8 + $0x338] sm:$0xff]
        %v2263 = vld [vmem:[#allocation8 + $0x340] sm:$0xff]
        %v2264 = vld [vmem:[#allocation8 + $0x348] sm:$0xff]
        %v2265 = vld [vmem:[#allocation8 + $0x350] sm:$0xff]
        %v2266 = vld [vmem:[#allocation8 + $0x358] sm:$0xff]
        %v2267 = vld [vmem:[#allocation8 + $0x360] sm:$0xff]
        %v2268 = vld [vmem:[#allocation8 + $0x368] sm:$0xff]
        %v2269 = vld [vmem:[#allocation8 + $0x370] sm:$0xff]
        %v2270 = vld [vmem:[#allocation8 + $0x378] sm:$0xff]
        %v2271 = vld [vmem:[#allocation8 + $0x380] sm:$0xff]
        %v2272 = vld [vmem:[#allocation8 + $0x388] sm:$0xff]
        %v2273 = vld [vmem:[#allocation8 + $0x390] sm:$0xff]
        %v2274 = vld [vmem:[#allocation8 + $0x398] sm:$0xff]
        %v2275 = vld [vmem:[#allocation8 + $0x3a0] sm:$0xff]
        %v2276 = vld [vmem:[#allocation8 + $0x3a8] sm:$0xff]
        %v2277 = vld [vmem:[#allocation8 + $0x3b0] sm:$0xff]
        %v2278 = vld [vmem:[#allocation8 + $0x3b8] sm:$0xff]
        %v2279 = vld [vmem:[#allocation8 + $0x3c0] sm:$0xff]
        %v2280 = vld [vmem:[#allocation8 + $0x3c8] sm:$0xff]
        %v2281 = vld [vmem:[#allocation8 + $0x3d0] sm:$0xff]
        %v2282 = vld [vmem:[#allocation8 + $0x3d8] sm:$0xff]
        %v2283 = vld [vmem:[#allocation8 + $0x3e0] sm:$0xff]
        %v2284 = vld [vmem:[#allocation8 + $0x3e8] sm:$0xff]
        %v2285 = vld [vmem:[#allocation8 + $0x3f0] sm:$0xff]
        %v2286 = vld [vmem:[#allocation8 + $0x3f8] sm:$0xff]
        %v2288 = vsel %vm983, %v2158, 0
        %2290 = vmatprep.subr.mxu0 %v2160
        %2291 = vmatpush1.msra.mxu0 %v2159
        %2292 = vmatprep.subr.mxu0 %v2176
        %2293 = vmatpush1.msra.mxu0 %v2175
        %2294 = vmatprep.subr.mxu0 %v2192
        %2295 = vmatpush1.msra.mxu0 %v2191
        %2296 = vmatprep.subr.mxu0 %v2208
        %2297 = vmatpush1.msra.mxu0 %v2207
        %2298 = vmatprep.subr.mxu0 %v2224
        %2299 = vmatpush1.msra.mxu0 %v2223
        %2300 = vmatprep.subr.mxu0 %v2240
        %2301 = vmatpush1.msra.mxu0 %v2239
        %2302 = vmatprep.subr.mxu0 %v2256
        %2303 = vmatpush1.msra.mxu0 %v2255
        %2304 = vmatprep.subr.mxu0 %v2272
        %2305 = vmatpush1.msra.mxu0 %v2271
        %2306 = vmatprep.subr.mxu0 0.0
        %2307 = vmatpush1.msra.mxu0 0.0
        %2308 = vmatprep.subr.mxu0 0.0
        %2309 = vmatpush1.msra.mxu0 0.0
        %2310 = vmatprep.subr.mxu0 0.0
        %2311 = vmatpush1.msra.mxu0 0.0
        %2312 = vmatprep.subr.mxu0 0.0
        %2313 = vmatpush1.msra.mxu0 0.0
        %2314 = vmatprep.subr.mxu0 0.0
        %2315 = vmatpush1.msra.mxu0 0.0
        %2316 = vmatprep.subr.mxu0 0.0
        %2317 = vmatpush1.msra.mxu0 0.0
        %2318 = vmatprep.subr.mxu0 0.0
        %2319 = vmatpush1.msra.mxu0 0.0
        %2320 = vmatprep.subr.mxu0 0.0
        %2321 = vmatpush1.msra.mxu0 0.0
        %2322 = vmatprep.subr.mxu0 0.0
        %2323 = vmatpush1.msra.mxu0 0.0
        %2324 = vmatprep.subr.mxu0 0.0
        %2325 = vmatpush1.msra.mxu0 0.0
        %2326 = vmatprep.subr.mxu0 0.0
        %2327 = vmatpush1.msra.mxu0 0.0
        %2328 = vmatprep.subr.mxu0 0.0
        %2329 = vmatpush1.msra.mxu0 0.0
        %2330 = vmatprep.subr.mxu0 0.0
        %2331 = vmatpush1.msra.mxu0 0.0
        %2332 = vmatprep.subr.mxu0 0.0
        %2333 = vmatpush1.msra.mxu0 0.0
        %2334 = vmatprep.subr.mxu0 0.0
        %2335 = vmatpush1.msra.mxu0 0.0
        %2336 = vmatprep.subr.mxu0 0.0
        %2337 = vmatpush1.msra.mxu0 0.0
        %2338 = vmatprep.subr.mxu0 0.0
        %2339 = vmatpush1.msra.mxu0 0.0
        %2340 = vmatprep.subr.mxu0 0.0
        %2341 = vmatpush1.msra.mxu0 0.0
        %2342 = vmatprep.subr.mxu0 0.0
        %2343 = vmatpush1.msra.mxu0 0.0
        %2344 = vmatprep.subr.mxu0 0.0
        %2345 = vmatpush1.msra.mxu0 0.0
        %2346 = vmatprep.subr.mxu0 0.0
        %2347 = vmatpush1.msra.mxu0 0.0
        %2348 = vmatprep.subr.mxu0 0.0
        %2349 = vmatpush1.msra.mxu0 0.0
        %2350 = vmatprep.subr.mxu0 0.0
        %2351 = vmatpush1.msra.mxu0 0.0
        %2352 = vmatprep.subr.mxu0 0.0
        %2353 = vmatpush1.msra.mxu0 0.0
        %2354 = vmatprep.mubr.f32.mxu0 0.0
        %2355 = vmatmul.mubr.f32.gmra.mrb[0].mxu0 %v2288
        %v2356 = vpop.f32.mrb[0].mxu0
        %v2357 = vadd.f32 0.0, %v2356
        %v2358 = vpop.f32.mrb[0].mxu0
        %v2359 = vadd.f32 0.0, %v2358
        %2360 = vdwg.mxu0
        %2361 = vmatprep.subr.mxu0 %v2162
        %2362 = vmatpush1.msra.mxu0 %v2161
        %2363 = vmatprep.subr.mxu0 %v2178
        %2364 = vmatpush1.msra.mxu0 %v2177
        %2365 = vmatprep.subr.mxu0 %v2194
        %2366 = vmatpush1.msra.mxu0 %v2193
        %2367 = vmatprep.subr.mxu0 %v2210
        %2368 = vmatpush1.msra.mxu0 %v2209
        %2369 = vmatprep.subr.mxu0 %v2226
        %2370 = vmatpush1.msra.mxu0 %v2225
        %2371 = vmatprep.subr.mxu0 %v2242
        %2372 = vmatpush1.msra.mxu0 %v2241
        %2373 = vmatprep.subr.mxu0 %v2258
        %2374 = vmatpush1.msra.mxu0 %v2257
        %2375 = vmatprep.subr.mxu0 %v2274
        %2376 = vmatpush1.msra.mxu0 %v2273
        %2377 = vmatprep.subr.mxu0 0.0
        %2378 = vmatpush1.msra.mxu0 0.0
        %2379 = vmatprep.subr.mxu0 0.0
        %2380 = vmatpush1.msra.mxu0 0.0
        %2381 = vmatprep.subr.mxu0 0.0
        %2382 = vmatpush1.msra.mxu0 0.0
        %2383 = vmatprep.subr.mxu0 0.0
        %2384 = vmatpush1.msra.mxu0 0.0
        %2385 = vmatprep.subr.mxu0 0.0
        %2386 = vmatpush1.msra.mxu0 0.0
        %2387 = vmatprep.subr.mxu0 0.0
        %2388 = vmatpush1.msra.mxu0 0.0
        %2389 = vmatprep.subr.mxu0 0.0
        %2390 = vmatpush1.msra.mxu0 0.0
        %2391 = vmatprep.subr.mxu0 0.0
        %2392 = vmatpush1.msra.mxu0 0.0
        %2393 = vmatprep.subr.mxu0 0.0
        %2394 = vmatpush1.msra.mxu0 0.0
        %2395 = vmatprep.subr.mxu0 0.0
        %2396 = vmatpush1.msra.mxu0 0.0
        %2397 = vmatprep.subr.mxu0 0.0
        %2398 = vmatpush1.msra.mxu0 0.0
        %2399 = vmatprep.subr.mxu0 0.0
        %2400 = vmatpush1.msra.mxu0 0.0
        %2401 = vmatprep.subr.mxu0 0.0
        %2402 = vmatpush1.msra.mxu0 0.0
        %2403 = vmatprep.subr.mxu0 0.0
        %2404 = vmatpush1.msra.mxu0 0.0
        %2405 = vmatprep.subr.mxu0 0.0
        %2406 = vmatpush1.msra.mxu0 0.0
        %2407 = vmatprep.subr.mxu0 0.0
        %2408 = vmatpush1.msra.mxu0 0.0
        %2409 = vmatprep.subr.mxu0 0.0
        %2410 = vmatpush1.msra.mxu0 0.0
        %2411 = vmatprep.subr.mxu0 0.0
        %2412 = vmatpush1.msra.mxu0 0.0
        %2413 = vmatprep.subr.mxu0 0.0
        %2414 = vmatpush1.msra.mxu0 0.0
        %2415 = vmatprep.subr.mxu0 0.0
        %2416 = vmatpush1.msra.mxu0 0.0
        %2417 = vmatprep.subr.mxu0 0.0
        %2418 = vmatpush1.msra.mxu0 0.0
        %2419 = vmatprep.subr.mxu0 0.0
        %2420 = vmatpush1.msra.mxu0 0.0
        %2421 = vmatprep.subr.mxu0 0.0
        %2422 = vmatpush1.msra.mxu0 0.0
        %2423 = vmatprep.subr.mxu0 0.0
        %2424 = vmatpush1.msra.mxu0 0.0
        %2425 = vmatprep.mubr.f32.mxu0 0.0
        %2426 = vmatmul.mubr.f32.gmra.mrb[0].mxu0 %v2288
        %v2427 = vpop.f32.mrb[0].mxu0
        %v2428 = vadd.f32 0.0, %v2427
        %v2429 = vpop.f32.mrb[0].mxu0
        %v2430 = vadd.f32 0.0, %v2429
        %2431 = vdwg.mxu0
        %2432 = vmatprep.subr.mxu0 %v2164
        %2433 = vmatpush1.msra.mxu0 %v2163
        %2434 = vmatprep.subr.mxu0 %v2180
        %2435 = vmatpush1.msra.mxu0 %v2179
        %2436 = vmatprep.subr.mxu0 %v2196
        %2437 = vmatpush1.msra.mxu0 %v2195
        %2438 = vmatprep.subr.mxu0 %v2212
        %2439 = vmatpush1.msra.mxu0 %v2211
        %2440 = vmatprep.subr.mxu0 %v2228
        %2441 = vmatpush1.msra.mxu0 %v2227
        %2442 = vmatprep.subr.mxu0 %v2244
        %2443 = vmatpush1.msra.mxu0 %v2243
        %2444 = vmatprep.subr.mxu0 %v2260
        %2445 = vmatpush1.msra.mxu0 %v2259
        %2446 = vmatprep.subr.mxu0 %v2276
        %2447 = vmatpush1.msra.mxu0 %v2275
        %2448 = vmatprep.subr.mxu0 0.0
        %2449 = vmatpush1.msra.mxu0 0.0
        %2450 = vmatprep.subr.mxu0 0.0
        %2451 = vmatpush1.msra.mxu0 0.0
        %2452 = vmatprep.subr.mxu0 0.0
        %2453 = vmatpush1.msra.mxu0 0.0
        %2454 = vmatprep.subr.mxu0 0.0
        %2455 = vmatpush1.msra.mxu0 0.0
        %2456 = vmatprep.subr.mxu0 0.0
        %2457 = vmatpush1.msra.mxu0 0.0
        %2458 = vmatprep.subr.mxu0 0.0
        %2459 = vmatpush1.msra.mxu0 0.0
        %2460 = vmatprep.subr.mxu0 0.0
        %2461 = vmatpush1.msra.mxu0 0.0
        %2462 = vmatprep.subr.mxu0 0.0
        %2463 = vmatpush1.msra.mxu0 0.0
        %2464 = vmatprep.subr.mxu0 0.0
        %2465 = vmatpush1.msra.mxu0 0.0
        %2466 = vmatprep.subr.mxu0 0.0
        %2467 = vmatpush1.msra.mxu0 0.0
        %2468 = vmatprep.subr.mxu0 0.0
        %2469 = vmatpush1.msra.mxu0 0.0
        %2470 = vmatprep.subr.mxu0 0.0
        %2471 = vmatpush1.msra.mxu0 0.0
        %2472 = vmatprep.subr.mxu0 0.0
        %2473 = vmatpush1.msra.mxu0 0.0
        %2474 = vmatprep.subr.mxu0 0.0
        %2475 = vmatpush1.msra.mxu0 0.0
        %2476 = vmatprep.subr.mxu0 0.0
        %2477 = vmatpush1.msra.mxu0 0.0
        %2478 = vmatprep.subr.mxu0 0.0
        %2479 = vmatpush1.msra.mxu0 0.0
        %2480 = vmatprep.subr.mxu0 0.0
        %2481 = vmatpush1.msra.mxu0 0.0
        %2482 = vmatprep.subr.mxu0 0.0
        %2483 = vmatpush1.msra.mxu0 0.0
        %2484 = vmatprep.subr.mxu0 0.0
        %2485 = vmatpush1.msra.mxu0 0.0
        %2486 = vmatprep.subr.mxu0 0.0
        %2487 = vmatpush1.msra.mxu0 0.0
        %2488 = vmatprep.subr.mxu0 0.0
        %2489 = vmatpush1.msra.mxu0 0.0
        %2490 = vmatprep.subr.mxu0 0.0
        %2491 = vmatpush1.msra.mxu0 0.0
        %2492 = vmatprep.subr.mxu0 0.0
        %2493 = vmatpush1.msra.mxu0 0.0
        %2494 = vmatprep.subr.mxu0 0.0
        %2495 = vmatpush1.msra.mxu0 0.0
        %2496 = vmatprep.mubr.f32.mxu0 0.0
        %2497 = vmatmul.mubr.f32.gmra.mrb[0].mxu0 %v2288
        %v2498 = vpop.f32.mrb[0].mxu0
        %v2499 = vadd.f32 0.0, %v2498
        %v2500 = vpop.f32.mrb[0].mxu0
        %v2501 = vadd.f32 0.0, %v2500
        %2502 = vdwg.mxu0
        %2503 = vmatprep.subr.mxu0 %v2166
        %2504 = vmatpush1.msra.mxu0 %v2165
        %2505 = vmatprep.subr.mxu0 %v2182
        %2506 = vmatpush1.msra.mxu0 %v2181
        %2507 = vmatprep.subr.mxu0 %v2198
        %2508 = vmatpush1.msra.mxu0 %v2197
        %2509 = vmatprep.subr.mxu0 %v2214
        %2510 = vmatpush1.msra.mxu0 %v2213
        %2511 = vmatprep.subr.mxu0 %v2230
        %2512 = vmatpush1.msra.mxu0 %v2229
        %2513 = vmatprep.subr.mxu0 %v2246
        %2514 = vmatpush1.msra.mxu0 %v2245
        %2515 = vmatprep.subr.mxu0 %v2262
        %2516 = vmatpush1.msra.mxu0 %v2261
        %2517 = vmatprep.subr.mxu0 %v2278
        %2518 = vmatpush1.msra.mxu0 %v2277
        %2519 = vmatprep.subr.mxu0 0.0
        %2520 = vmatpush1.msra.mxu0 0.0
        %2521 = vmatprep.subr.mxu0 0.0
        %2522 = vmatpush1.msra.mxu0 0.0
        %2523 = vmatprep.subr.mxu0 0.0
        %2524 = vmatpush1.msra.mxu0 0.0
        %2525 = vmatprep.subr.mxu0 0.0
        %2526 = vmatpush1.msra.mxu0 0.0
        %2527 = vmatprep.subr.mxu0 0.0
        %2528 = vmatpush1.msra.mxu0 0.0
        %2529 = vmatprep.subr.mxu0 0.0
        %2530 = vmatpush1.msra.mxu0 0.0
        %2531 = vmatprep.subr.mxu0 0.0
        %2532 = vmatpush1.msra.mxu0 0.0
        %2533 = vmatprep.subr.mxu0 0.0
        %2534 = vmatpush1.msra.mxu0 0.0
        %2535 = vmatprep.subr.mxu0 0.0
        %2536 = vmatpush1.msra.mxu0 0.0
        %2537 = vmatprep.subr.mxu0 0.0
        %2538 = vmatpush1.msra.mxu0 0.0
        %2539 = vmatprep.subr.mxu0 0.0
        %2540 = vmatpush1.msra.mxu0 0.0
        %2541 = vmatprep.subr.mxu0 0.0
        %2542 = vmatpush1.msra.mxu0 0.0
        %2543 = vmatprep.subr.mxu0 0.0
        %2544 = vmatpush1.msra.mxu0 0.0
        %2545 = vmatprep.subr.mxu0 0.0
        %2546 = vmatpush1.msra.mxu0 0.0
        %2547 = vmatprep.subr.mxu0 0.0
        %2548 = vmatpush1.msra.mxu0 0.0
        %2549 = vmatprep.subr.mxu0 0.0
        %2550 = vmatpush1.msra.mxu0 0.0
        %2551 = vmatprep.subr.mxu0 0.0
        %2552 = vmatpush1.msra.mxu0 0.0
        %2553 = vmatprep.subr.mxu0 0.0
        %2554 = vmatpush1.msra.mxu0 0.0
        %2555 = vmatprep.subr.mxu0 0.0
        %2556 = vmatpush1.msra.mxu0 0.0
        %2557 = vmatprep.subr.mxu0 0.0
        %2558 = vmatpush1.msra.mxu0 0.0
        %2559 = vmatprep.subr.mxu0 0.0
        %2560 = vmatpush1.msra.mxu0 0.0
        %2561 = vmatprep.subr.mxu0 0.0
        %2562 = vmatpush1.msra.mxu0 0.0
        %2563 = vmatprep.subr.mxu0 0.0
        %2564 = vmatpush1.msra.mxu0 0.0
        %2565 = vmatprep.subr.mxu0 0.0
        %2566 = vmatpush1.msra.mxu0 0.0
        %2567 = vmatprep.mubr.f32.mxu0 0.0
        %2568 = vmatmul.mubr.f32.gmra.mrb[0].mxu0 %v2288
        %v2569 = vpop.f32.mrb[0].mxu0
        %v2570 = vadd.f32 0.0, %v2569
        %v2571 = vpop.f32.mrb[0].mxu0
        %v2572 = vadd.f32 0.0, %v2571
        %2573 = vdwg.mxu0
        %2574 = vmatprep.subr.mxu0 %v2168
        %2575 = vmatpush1.msra.mxu0 %v2167
        %2576 = vmatprep.subr.mxu0 %v2184
        %2577 = vmatpush1.msra.mxu0 %v2183
        %2578 = vmatprep.subr.mxu0 %v2200
        %2579 = vmatpush1.msra.mxu0 %v2199
        %2580 = vmatprep.subr.mxu0 %v2216
        %2581 = vmatpush1.msra.mxu0 %v2215
        %2582 = vmatprep.subr.mxu0 %v2232
        %2583 = vmatpush1.msra.mxu0 %v2231
        %2584 = vmatprep.subr.mxu0 %v2248
        %2585 = vmatpush1.msra.mxu0 %v2247
        %2586 = vmatprep.subr.mxu0 %v2264
        %2587 = vmatpush1.msra.mxu0 %v2263
        %2588 = vmatprep.subr.mxu0 %v2280
        %2589 = vmatpush1.msra.mxu0 %v2279
        %2590 = vmatprep.subr.mxu0 0.0
        %2591 = vmatpush1.msra.mxu0 0.0
        %2592 = vmatprep.subr.mxu0 0.0
        %2593 = vmatpush1.msra.mxu0 0.0
        %2594 = vmatprep.subr.mxu0 0.0
        %2595 = vmatpush1.msra.mxu0 0.0
        %2596 = vmatprep.subr.mxu0 0.0
        %2597 = vmatpush1.msra.mxu0 0.0
        %2598 = vmatprep.subr.mxu0 0.0
        %2599 = vmatpush1.msra.mxu0 0.0
        %2600 = vmatprep.subr.mxu0 0.0
        %2601 = vmatpush1.msra.mxu0 0.0
        %2602 = vmatprep.subr.mxu0 0.0
        %2603 = vmatpush1.msra.mxu0 0.0
        %2604 = vmatprep.subr.mxu0 0.0
        %2605 = vmatpush1.msra.mxu0 0.0
        %2606 = vmatprep.subr.mxu0 0.0
        %2607 = vmatpush1.msra.mxu0 0.0
        %2608 = vmatprep.subr.mxu0 0.0
        %2609 = vmatpush1.msra.mxu0 0.0
        %2610 = vmatprep.subr.mxu0 0.0
        %2611 = vmatpush1.msra.mxu0 0.0
        %2612 = vmatprep.subr.mxu0 0.0
        %2613 = vmatpush1.msra.mxu0 0.0
        %2614 = vmatprep.subr.mxu0 0.0
        %2615 = vmatpush1.msra.mxu0 0.0
        %2616 = vmatprep.subr.mxu0 0.0
        %2617 = vmatpush1.msra.mxu0 0.0
        %2618 = vmatprep.subr.mxu0 0.0
        %2619 = vmatpush1.msra.mxu0 0.0
        %2620 = vmatprep.subr.mxu0 0.0
        %2621 = vmatpush1.msra.mxu0 0.0
        %2622 = vmatprep.subr.mxu0 0.0
        %2623 = vmatpush1.msra.mxu0 0.0
        %2624 = vmatprep.subr.mxu0 0.0
        %2625 = vmatpush1.msra.mxu0 0.0
        %2626 = vmatprep.subr.mxu0 0.0
        %2627 = vmatpush1.msra.mxu0 0.0
        %2628 = vmatprep.subr.mxu0 0.0
        %2629 = vmatpush1.msra.mxu0 0.0
        %2630 = vmatprep.subr.mxu0 0.0
        %2631 = vmatpush1.msra.mxu0 0.0
        %2632 = vmatprep.subr.mxu0 0.0
        %2633 = vmatpush1.msra.mxu0 0.0
        %2634 = vmatprep.subr.mxu0 0.0
        %2635 = vmatpush1.msra.mxu0 0.0
        %2636 = vmatprep.subr.mxu0 0.0
        %2637 = vmatpush1.msra.mxu0 0.0
        %2638 = vmatprep.mubr.f32.mxu0 0.0
        %2639 = vmatmul.mubr.f32.gmra.mrb[0].mxu0 %v2288
        %v2640 = vpop.f32.mrb[0].mxu0
        %v2641 = vadd.f32 0.0, %v2640
        %v2642 = vpop.f32.mrb[0].mxu0
        %v2643 = vadd.f32 0.0, %v2642
        %2644 = vdwg.mxu0
        %2645 = vmatprep.subr.mxu0 %v2170
        %2646 = vmatpush1.msra.mxu0 %v2169
        %2647 = vmatprep.subr.mxu0 %v2186
        %2648 = vmatpush1.msra.mxu0 %v2185
        %2649 = vmatprep.subr.mxu0 %v2202
        %2650 = vmatpush1.msra.mxu0 %v2201
        %2651 = vmatprep.subr.mxu0 %v2218
        %2652 = vmatpush1.msra.mxu0 %v2217
        %2653 = vmatprep.subr.mxu0 %v2234
        %2654 = vmatpush1.msra.mxu0 %v2233
        %2655 = vmatprep.subr.mxu0 %v2250
        %2656 = vmatpush1.msra.mxu0 %v2249
        %2657 = vmatprep.subr.mxu0 %v2266
        %2658 = vmatpush1.msra.mxu0 %v2265
        %2659 = vmatprep.subr.mxu0 %v2282
        %2660 = vmatpush1.msra.mxu0 %v2281
        %2661 = vmatprep.subr.mxu0 0.0
        %2662 = vmatpush1.msra.mxu0 0.0
        %2663 = vmatprep.subr.mxu0 0.0
        %2664 = vmatpush1.msra.mxu0 0.0
        %2665 = vmatprep.subr.mxu0 0.0
        %2666 = vmatpush1.msra.mxu0 0.0
        %2667 = vmatprep.subr.mxu0 0.0
        %2668 = vmatpush1.msra.mxu0 0.0
        %2669 = vmatprep.subr.mxu0 0.0
        %2670 = vmatpush1.msra.mxu0 0.0
        %2671 = vmatprep.subr.mxu0 0.0
        %2672 = vmatpush1.msra.mxu0 0.0
        %2673 = vmatprep.subr.mxu0 0.0
        %2674 = vmatpush1.msra.mxu0 0.0
        %2675 = vmatprep.subr.mxu0 0.0
        %2676 = vmatpush1.msra.mxu0 0.0
        %2677 = vmatprep.subr.mxu0 0.0
        %2678 = vmatpush1.msra.mxu0 0.0
        %2679 = vmatprep.subr.mxu0 0.0
        %2680 = vmatpush1.msra.mxu0 0.0
        %2681 = vmatprep.subr.mxu0 0.0
        %2682 = vmatpush1.msra.mxu0 0.0
        %2683 = vmatprep.subr.mxu0 0.0
        %2684 = vmatpush1.msra.mxu0 0.0
        %2685 = vmatprep.subr.mxu0 0.0
        %2686 = vmatpush1.msra.mxu0 0.0
        %2687 = vmatprep.subr.mxu0 0.0
        %2688 = vmatpush1.msra.mxu0 0.0
        %2689 = vmatprep.subr.mxu0 0.0
        %2690 = vmatpush1.msra.mxu0 0.0
        %2691 = vmatprep.subr.mxu0 0.0
        %2692 = vmatpush1.msra.mxu0 0.0
        %2693 = vmatprep.subr.mxu0 0.0
        %2694 = vmatpush1.msra.mxu0 0.0
        %2695 = vmatprep.subr.mxu0 0.0
        %2696 = vmatpush1.msra.mxu0 0.0
        %2697 = vmatprep.subr.mxu0 0.0
        %2698 = vmatpush1.msra.mxu0 0.0
        %2699 = vmatprep.subr.mxu0 0.0
        %2700 = vmatpush1.msra.mxu0 0.0
        %2701 = vmatprep.subr.mxu0 0.0
        %2702 = vmatpush1.msra.mxu0 0.0
        %2703 = vmatprep.subr.mxu0 0.0
        %2704 = vmatpush1.msra.mxu0 0.0
        %2705 = vmatprep.subr.mxu0 0.0
        %2706 = vmatpush1.msra.mxu0 0.0
        %2707 = vmatprep.subr.mxu0 0.0
        %2708 = vmatpush1.msra.mxu0 0.0
        %2709 = vmatprep.mubr.f32.mxu0 0.0
        %2710 = vmatmul.mubr.f32.gmra.mrb[0].mxu0 %v2288
        %v2711 = vpop.f32.mrb[0].mxu0
        %v2712 = vadd.f32 0.0, %v2711
        %v2713 = vpop.f32.mrb[0].mxu0
        %v2714 = vadd.f32 0.0, %v2713
        %2715 = vdwg.mxu0
        %2716 = vmatprep.subr.mxu0 %v2172
        %2717 = vmatpush1.msra.mxu0 %v2171
        %2718 = vmatprep.subr.mxu0 %v2188
        %2719 = vmatpush1.msra.mxu0 %v2187
        %2720 = vmatprep.subr.mxu0 %v2204
        %2721 = vmatpush1.msra.mxu0 %v2203
        %2722 = vmatprep.subr.mxu0 %v2220
        %2723 = vmatpush1.msra.mxu0 %v2219
        %2724 = vmatprep.subr.mxu0 %v2236
        %2725 = vmatpush1.msra.mxu0 %v2235
        %2726 = vmatprep.subr.mxu0 %v2252
        %2727 = vmatpush1.msra.mxu0 %v2251
        %2728 = vmatprep.subr.mxu0 %v2268
        %2729 = vmatpush1.msra.mxu0 %v2267
        %2730 = vmatprep.subr.mxu0 %v2284
        %2731 = vmatpush1.msra.mxu0 %v2283
        %2732 = vmatprep.subr.mxu0 0.0
        %2733 = vmatpush1.msra.mxu0 0.0
        %2734 = vmatprep.subr.mxu0 0.0
        %2735 = vmatpush1.msra.mxu0 0.0
        %2736 = vmatprep.subr.mxu0 0.0
        %2737 = vmatpush1.msra.mxu0 0.0
        %2738 = vmatprep.subr.mxu0 0.0
        %2739 = vmatpush1.msra.mxu0 0.0
        %2740 = vmatprep.subr.mxu0 0.0
        %2741 = vmatpush1.msra.mxu0 0.0
        %2742 = vmatprep.subr.mxu0 0.0
        %2743 = vmatpush1.msra.mxu0 0.0
        %2744 = vmatprep.subr.mxu0 0.0
        %2745 = vmatpush1.msra.mxu0 0.0
        %2746 = vmatprep.subr.mxu0 0.0
        %2747 = vmatpush1.msra.mxu0 0.0
        %2748 = vmatprep.subr.mxu0 0.0
        %2749 = vmatpush1.msra.mxu0 0.0
        %2750 = vmatprep.subr.mxu0 0.0
        %2751 = vmatpush1.msra.mxu0 0.0
        %2752 = vmatprep.subr.mxu0 0.0
        %2753 = vmatpush1.msra.mxu0 0.0
        %2754 = vmatprep.subr.mxu0 0.0
        %2755 = vmatpush1.msra.mxu0 0.0
        %2756 = vmatprep.subr.mxu0 0.0
        %2757 = vmatpush1.msra.mxu0 0.0
        %2758 = vmatprep.subr.mxu0 0.0
        %2759 = vmatpush1.msra.mxu0 0.0
        %2760 = vmatprep.subr.mxu0 0.0
        %2761 = vmatpush1.msra.mxu0 0.0
        %2762 = vmatprep.subr.mxu0 0.0
        %2763 = vmatpush1.msra.mxu0 0.0
        %2764 = vmatprep.subr.mxu0 0.0
        %2765 = vmatpush1.msra.mxu0 0.0
        %2766 = vmatprep.subr.mxu0 0.0
        %2767 = vmatpush1.msra.mxu0 0.0
        %2768 = vmatprep.subr.mxu0 0.0
        %2769 = vmatpush1.msra.mxu0 0.0
        %2770 = vmatprep.subr.mxu0 0.0
        %2771 = vmatpush1.msra.mxu0 0.0
        %2772 = vmatprep.subr.mxu0 0.0
        %2773 = vmatpush1.msra.mxu0 0.0
        %2774 = vmatprep.subr.mxu0 0.0
        %2775 = vmatpush1.msra.mxu0 0.0
        %2776 = vmatprep.subr.mxu0 0.0
        %2777 = vmatpush1.msra.mxu0 0.0
        %2778 = vmatprep.subr.mxu0 0.0
        %2779 = vmatpush1.msra.mxu0 0.0
        %2780 = vmatprep.mubr.f32.mxu0 0.0
        %2781 = vmatmul.mubr.f32.gmra.mrb[0].mxu0 %v2288
        %v2782 = vpop.f32.mrb[0].mxu0
        %v2783 = vadd.f32 0.0, %v2782
        %v2784 = vpop.f32.mrb[0].mxu0
        %v2785 = vadd.f32 0.0, %v2784
        %2786 = vdwg.mxu0
        %2787 = vmatprep.subr.mxu0 %v2174
        %2788 = vmatpush1.msra.mxu0 %v2173
        %2789 = vmatprep.subr.mxu0 %v2190
        %2790 = vmatpush1.msra.mxu0 %v2189
        %2791 = vmatprep.subr.mxu0 %v2206
        %2792 = vmatpush1.msra.mxu0 %v2205
        %2793 = vmatprep.subr.mxu0 %v2222
        %2794 = vmatpush1.msra.mxu0 %v2221
        %2795 = vmatprep.subr.mxu0 %v2238
        %2796 = vmatpush1.msra.mxu0 %v2237
        %2797 = vmatprep.subr.mxu0 %v2254
        %2798 = vmatpush1.msra.mxu0 %v2253
        %2799 = vmatprep.subr.mxu0 %v2270
        %2800 = vmatpush1.msra.mxu0 %v2269
        %2801 = vmatprep.subr.mxu0 %v2286
        %2802 = vmatpush1.msra.mxu0 %v2285
        %2803 = vmatprep.subr.mxu0 0.0
        %2804 = vmatpush1.msra.mxu0 0.0
        %2805 = vmatprep.subr.mxu0 0.0
        %2806 = vmatpush1.msra.mxu0 0.0
        %2807 = vmatprep.subr.mxu0 0.0
        %2808 = vmatpush1.msra.mxu0 0.0
        %2809 = vmatprep.subr.mxu0 0.0
        %2810 = vmatpush1.msra.mxu0 0.0
        %2811 = vmatprep.subr.mxu0 0.0
        %2812 = vmatpush1.msra.mxu0 0.0
        %2813 = vmatprep.subr.mxu0 0.0
        %2814 = vmatpush1.msra.mxu0 0.0
        %2815 = vmatprep.subr.mxu0 0.0
        %2816 = vmatpush1.msra.mxu0 0.0
        %2817 = vmatprep.subr.mxu0 0.0
        %2818 = vmatpush1.msra.mxu0 0.0
        %2819 = vmatprep.subr.mxu0 0.0
        %2820 = vmatpush1.msra.mxu0 0.0
        %2821 = vmatprep.subr.mxu0 0.0
        %2822 = vmatpush1.msra.mxu0 0.0
        %2823 = vmatprep.subr.mxu0 0.0
        %2824 = vmatpush1.msra.mxu0 0.0
        %2825 = vmatprep.subr.mxu0 0.0
        %2826 = vmatpush1.msra.mxu0 0.0
        %2827 = vmatprep.subr.mxu0 0.0
        %2828 = vmatpush1.msra.mxu0 0.0
        %2829 = vmatprep.subr.mxu0 0.0
        %2830 = vmatpush1.msra.mxu0 0.0
        %2831 = vmatprep.subr.mxu0 0.0
        %2832 = vmatpush1.msra.mxu0 0.0
        %2833 = vmatprep.subr.mxu0 0.0
        %2834 = vmatpush1.msra.mxu0 0.0
        %2835 = vmatprep.subr.mxu0 0.0
        %2836 = vmatpush1.msra.mxu0 0.0
        %2837 = vmatprep.subr.mxu0 0.0
        %2838 = vmatpush1.msra.mxu0 0.0
        %2839 = vmatprep.subr.mxu0 0.0
        %2840 = vmatpush1.msra.mxu0 0.0
        %2841 = vmatprep.subr.mxu0 0.0
        %2842 = vmatpush1.msra.mxu0 0.0
        %2843 = vmatprep.subr.mxu0 0.0
        %2844 = vmatpush1.msra.mxu0 0.0
        %2845 = vmatprep.subr.mxu0 0.0
        %2846 = vmatpush1.msra.mxu0 0.0
        %2847 = vmatprep.subr.mxu0 0.0
        %2848 = vmatpush1.msra.mxu0 0.0
        %2849 = vmatprep.subr.mxu0 0.0
        %2850 = vmatpush1.msra.mxu0 0.0
        %2851 = vmatprep.mubr.f32.mxu0 0.0
        %2852 = vmatmul.mubr.f32.gmra.mrb[0].mxu0 %v2288
        %v2853 = vpop.f32.mrb[0].mxu0
        %v2854 = vadd.f32 0.0, %v2853
        %v2855 = vpop.f32.mrb[0].mxu0
        %v2856 = vadd.f32 0.0, %v2855
        %2857 = vdwg.mxu0
        %v2858 = vadd.f32 %v2123, %v2357
        %v2859 = vadd.f32 %v2124, %v2359
        %v2860 = vadd.f32 %v2125, %v2428
        %v2861 = vadd.f32 %v2126, %v2430
        %v2862 = vadd.f32 %v2127, %v2499
        %v2863 = vadd.f32 %v2128, %v2501
        %v2864 = vadd.f32 %v2129, %v2570
        %v2865 = vadd.f32 %v2130, %v2572
        %v2866 = vadd.f32 %v2131, %v2641
        %v2867 = vadd.f32 %v2132, %v2643
        %v2868 = vadd.f32 %v2133, %v2712
        %v2869 = vadd.f32 %v2134, %v2714
        %v2870 = vadd.f32 %v2135, %v2783
        %v2871 = vadd.f32 %v2136, %v2785
        %v2872 = vadd.f32 %v2137, %v2854
        %v2873 = vadd.f32 %v2138, %v2856
        %2874 = vst [vmem:[%s255] sm:$0xff] %v2858
        %2875 = vst [vmem:[%s255 + $0x8] sm:$0xff] %v2859
        %2876 = vst [vmem:[%s255 + $0x10] sm:$0xff] %v2860
        %2877 = vst [vmem:[%s255 + $0x18] sm:$0xff] %v2861
        %2878 = vst [vmem:[%s255 + $0x20] sm:$0xff] %v2862
        %2879 = vst [vmem:[%s255 + $0x28] sm:$0xff] %v2863
        %2880 = vst [vmem:[%s255 + $0x30] sm:$0xff] %v2864
        %2881 = vst [vmem:[%s255 + $0x38] sm:$0xff] %v2865
        %2882 = vst [vmem:[%s255 + $0x40] sm:$0xff] %v2866
        %2883 = vst [vmem:[%s255 + $0x48] sm:$0xff] %v2867
        %2884 = vst [vmem:[%s255 + $0x50] sm:$0xff] %v2868
        %2885 = vst [vmem:[%s255 + $0x58] sm:$0xff] %v2869
        %2886 = vst [vmem:[%s255 + $0x60] sm:$0xff] %v2870
        %2887 = vst [vmem:[%s255 + $0x68] sm:$0xff] %v2871
        %2888 = vst [vmem:[%s255 + $0x70] sm:$0xff] %v2872
        %2889 = vst [vmem:[%s255 + $0x78] sm:$0xff] %v2873
        %s2890 = sand.u32 %s120, 1
        %s2891 = scalar_lea.sflag [#allocation4], %s2890
        %s2892 = sand.u32 %s120, 1
        %s2893 = smul.addr %s2892, 128
        %s2894 = scalar_lea.vmem [#allocation10], %s2893
        // Predicated region
        $region53: #{tpu_custom_call.1} parent=35 // pred_check
          %p2895 = pneg %p130
        $region54: #{tpu_custom_call.1} parent=35 // pred_check_branch
          %2897 = sbr.rel (%p2895) target = $region56
        $region55: #{tpu_custom_call.1} parent=35 // pred_region
          %s2899 = ssub.s32 2048, 2048
          %2900 = vsyncadd %s2891, %s2899
          %s2901 = smul.addr %s23, 16
          %s2902 = smul.addr %s2901, 128
          %s2903 = scalar_lea.hbm %s4, %s2902
          %s2905 = sshll.u32 %s2894, 4
          %s2906 = int_to_ptr.vmem [resolvable:$true] %s2905
          %2908 = dma.vmem_to_hbm [thread:$0]  %s2906, 2048, %s2903, %s2891
        $region56: #{tpu_custom_call.1} parent=35 // pred_fallthru
          _
      $region36: #{tpu_custom_call.1} parent=5 // pred_fallthru
        _
      %p2909 = scmp.le.s32.totalorder 2, %s18
      // Predicated region
      $region57: #{tpu_custom_call.1} parent=5 // pred_check
        %p2910 = pneg %p2909
      $region58: #{tpu_custom_call.1} parent=5 // pred_check_branch
        %2912 = sbr.rel (%p2910) target = $region60
      $region59: #{tpu_custom_call.1} parent=5 // pred_region
        %s2913 = ssub.s32 %s18, 2
        // Predicated region
        $region61: #{tpu_custom_call.1} parent=59 // pred_check
          %p2914 = pneg %p136
        $region62: #{tpu_custom_call.1} parent=59 // pred_check_branch
          %2916 = sbr.rel (%p2914) target = $region64
        $region63: #{tpu_custom_call.1} parent=59 // pred_region
          %s2917 = sand.u32 %s121, 1
          %s2918 = scalar_lea.sflag [#allocation4], %s2917
          %s2919 = sand.u32 %s121, 1
          %s2920 = smul.addr %s2919, 128
          %s2921 = scalar_lea.vmem [#allocation10], %s2920
          %2922 = dma.done %s2918, 2048
        $region64: #{tpu_custom_call.1} parent=59 // pred_fallthru
          _
      $region60: #{tpu_custom_call.1} parent=5 // pred_fallthru
        _
    $region6: #{tpu_custom_call.1} parent=1 // loop_footer
      %s22 = sadd.s32 1, %s18
    $region7: #{tpu_custom_call.1} parent=1 // loop_footer_branch
      %17 = sbr.rel target = $region3
    $region8: #{tpu_custom_call.1} parent=1 // loop_exit
      _
    %2923 = vsyncpa [#allocation3], 1
    %s2924 = scalar_lea.sflag [#allocation3], 1
    %2925 = vsyncpa %s2924, 1
    %2926 = vsyncpa [#allocation6], 1
    %2927 = vsyncpa [#allocation9], 1
    %2928 = vsyncpa [#allocation4], 1
    %s2929 = scalar_lea.sflag [#allocation4], 1
    %2930 = vsyncpa %s2929, 1

</llo_original>
